<compile_context>
chip_gen: v6e
topology: v6e:2x2x1
jax: 0.10.0
libtpu: 0.0.40
codegen_flags: <defaults>
</compile_context>

<pallas_src>
import functools
import math

import jax
import jax.numpy as jnp
from jax.experimental import pallas as pl
from jax.experimental.pallas import tpu as pltpu


# ------------------------------ model config -------------------------------

VOCAB = 64
MAX_POS = 16
TYPE_VOCAB = 2
HIDDEN = 32
N_HEADS = 4
HEAD_DIM = HIDDEN // N_HEADS
INTERMEDIATE = 64
N_LAYERS = 2
LN_EPS = 1e-12


# ------------------------------ fused kernel -------------------------------

def _layernorm(x, gamma, beta, eps):
    mean = jnp.mean(x, axis=-1, keepdims=True)
    var = jnp.mean((x - mean) ** 2, axis=-1, keepdims=True)
    return (x - mean) * jax.lax.rsqrt(var + eps) * gamma + beta


def _gelu_erf(x):
    # Exact (erf) GELU, as in BERT.
    return 0.5 * x * (1.0 + jax.lax.erf(x * (1.0 / math.sqrt(2.0))))


def _bert_encoder_kernel(
    emb_ref, emb_ln_g_ref, emb_ln_b_ref,
    qkv_w_ref, qkv_b_ref, o_w_ref, o_b_ref, ln1_g_ref, ln1_b_ref,
    ff1_w_ref, ff1_b_ref, ff2_w_ref, ff2_b_ref, ln2_g_ref, ln2_b_ref,
    pool_w_ref, pool_b_ref,
    out_ref,
    *, bsz, seq, n_layers, n_heads, head_dim, scale, eps):
    h = n_heads * head_dim

    # Embedding LayerNorm (no residual -> no zeros tensor streamed from HBM).
    x = _layernorm(emb_ref[...].astype(jnp.float32),
                   emb_ln_g_ref[...], emb_ln_b_ref[...], eps)

    for l in range(n_layers):
        # --- Attention block -------------------------------------------------
        # Fused Q/K/V: a single (H, 3H) matmul instead of three (H, H) ones.
        qkv_w_l = qkv_w_ref[l]                       # [H, 3H]
        qkv = jnp.dot(x, qkv_w_l, preferred_element_type=jnp.float32)
        qkv = qkv + qkv_b_ref[l]                     # [B*L, 3H]

        # The reference BertModel call never passes an attention_mask, so the
        # additive bias is identically zero -> no mask path at all.
        o_w_l = o_w_ref[l]                           # [H, H]
        attn_out = jnp.zeros_like(x)                 # [B*L, H]
        for hd in range(n_heads):
            lo = hd * head_dim
            q_h = qkv[:, lo:lo + head_dim].reshape(bsz, seq, head_dim)
            k_h = qkv[:, h + lo:h + lo + head_dim].reshape(bsz, seq, head_dim)
            v_h = qkv[:, 2 * h + lo:2 * h + lo + head_dim].reshape(bsz, seq, head_dim)
            # Batched over the batch dim, contracting last dims directly
            # (no explicit .T / no XLA-level head transpose).
            s = jnp.einsum("bqd,bkd->bqk", q_h, k_h,
                           preferred_element_type=jnp.float32) * scale
            s = s - jnp.max(s, axis=-1, keepdims=True)
            p = jnp.exp(s)
            p = p / jnp.sum(p, axis=-1, keepdims=True)
            ctx_h = jnp.einsum("bqk,bkd->bqd", p, v_h,
                               preferred_element_type=jnp.float32)
            # Fold the output projection per head:
            #   concat_h(ctx_h) @ O == sum_h ctx_h @ O[h*dh:(h+1)*dh, :]
            attn_out = attn_out + jnp.dot(
                ctx_h.reshape(bsz * seq, head_dim),
                o_w_l[lo:lo + head_dim, :],
                preferred_element_type=jnp.float32)
        attn_out = attn_out + o_b_ref[l]

        # Residual + LayerNorm 1 (fused epilogue, activation stays in VMEM).
        x = _layernorm(attn_out + x, ln1_g_ref[l], ln1_b_ref[l], eps)

        # --- Feed-forward block (bias + erf-GELU fused into the matmul) ------
        hmid = jnp.dot(x, ff1_w_ref[l], preferred_element_type=jnp.float32)
        hmid = _gelu_erf(hmid + ff1_b_ref[l])
        ff_out = jnp.dot(hmid, ff2_w_ref[l], preferred_element_type=jnp.float32)
        ff_out = ff_out + ff2_b_ref[l]

        # Residual + LayerNorm 2.
        x = _layernorm(ff_out + x, ln2_g_ref[l], ln2_b_ref[l], eps)

    # Pooler fused into the same kernel: dense + tanh on the [CLS] rows.
    cls = jnp.concatenate(
        [x[b * seq: b * seq + 1, :] for b in range(bsz)], axis=0)   # [B, H]
    pooled = jnp.tanh(
        jnp.dot(cls, pool_w_ref[...], preferred_element_type=jnp.float32)
        + pool_b_ref[...])
    out_ref[...] = pooled.astype(out_ref.dtype)


# ------------------------------ parameters ---------------------------------

def init_params(key):
    def dense(key, fan_in, fan_out):
        return 0.02 * jax.random.normal(key, (fan_in, fan_out), jnp.float32)

    keys = iter(jax.random.split(key, 8 + 12 * N_LAYERS))
    p = {
        "word_emb": 0.02 * jax.random.normal(next(keys), (VOCAB, HIDDEN), jnp.float32),
        "pos_emb": 0.02 * jax.random.normal(next(keys), (MAX_POS, HIDDEN), jnp.float32),
        "type_emb": 0.02 * jax.random.normal(next(keys), (TYPE_VOCAB, HIDDEN), jnp.float32),
        "emb_ln_g": jnp.ones((HIDDEN,), jnp.float32),
        "emb_ln_b": jnp.zeros((HIDDEN,), jnp.float32),
        "pool_w": dense(next(keys), HIDDEN, HIDDEN),
        "pool_b": jnp.zeros((HIDDEN,), jnp.float32),
        "layers": [],
    }
    for _ in range(N_LAYERS):
        p["layers"].append({
            "q_w": dense(next(keys), HIDDEN, HIDDEN), "q_b": jnp.zeros((HIDDEN,), jnp.float32),
            "k_w": dense(next(keys), HIDDEN, HIDDEN), "k_b": jnp.zeros((HIDDEN,), jnp.float32),
            "v_w": dense(next(keys), HIDDEN, HIDDEN), "v_b": jnp.zeros((HIDDEN,), jnp.float32),
            "o_w": dense(next(keys), HIDDEN, HIDDEN), "o_b": jnp.zeros((HIDDEN,), jnp.float32),
            "ln1_g": jnp.ones((HIDDEN,), jnp.float32), "ln1_b": jnp.zeros((HIDDEN,), jnp.float32),
            "ff1_w": dense(next(keys), HIDDEN, INTERMEDIATE),
            "ff1_b": jnp.zeros((INTERMEDIATE,), jnp.float32),
            "ff2_w": dense(next(keys), INTERMEDIATE, HIDDEN),
            "ff2_b": jnp.zeros((HIDDEN,), jnp.float32),
            "ln2_g": jnp.ones((HIDDEN,), jnp.float32), "ln2_b": jnp.zeros((HIDDEN,), jnp.float32),
        })
    return p


def _pack_params(params):
    """Stack per-layer weights along a leading layer axis; fuse Q/K/V."""
    ls = params["layers"]
    packed = {
        "emb_ln_g": params["emb_ln_g"].reshape(1, HIDDEN),
        "emb_ln_b": params["emb_ln_b"].reshape(1, HIDDEN),
        "qkv_w": jnp.stack([jnp.concatenate([l["q_w"], l["k_w"], l["v_w"]], axis=1)
                            for l in ls]),                                # [NL, H, 3H]
        "qkv_b": jnp.stack([jnp.concatenate([l["q_b"], l["k_b"], l["v_b"]]).reshape(1, 3 * HIDDEN)
                            for l in ls]),                                # [NL, 1, 3H]
        "o_w": jnp.stack([l["o_w"] for l in ls]),                         # [NL, H, H]
        "o_b": jnp.stack([l["o_b"].reshape(1, HIDDEN) for l in ls]),
        "ln1_g": jnp.stack([l["ln1_g"].reshape(1, HIDDEN) for l in ls]),
        "ln1_b": jnp.stack([l["ln1_b"].reshape(1, HIDDEN) for l in ls]),
        "ff1_w": jnp.stack([l["ff1_w"] for l in ls]),                     # [NL, H, I]
        "ff1_b": jnp.stack([l["ff1_b"].reshape(1, INTERMEDIATE) for l in ls]),
        "ff2_w": jnp.stack([l["ff2_w"] for l in ls]),                     # [NL, I, H]
        "ff2_b": jnp.stack([l["ff2_b"].reshape(1, HIDDEN) for l in ls]),
        "ln2_g": jnp.stack([l["ln2_g"].reshape(1, HIDDEN) for l in ls]),
        "ln2_b": jnp.stack([l["ln2_b"].reshape(1, HIDDEN) for l in ls]),
        "pool_w": params["pool_w"],
        "pool_b": params["pool_b"].reshape(1, HIDDEN),
    }
    return packed


# ------------------------------ forward pass --------------------------------

def bert_encoder_forward(params, token_ids, token_type_ids):
    """Equivalent of bertEncoder.forward: returns the BERT pooled output y."""
    bsz, seq = token_ids.shape
    scale = 1.0 / math.sqrt(HEAD_DIM)

    # Embedding lookup (gather) is host-side glue; everything else is fused.
    emb = (params["word_emb"][token_ids]
           + params["pos_emb"][None, :seq, :]
           + params["type_emb"][token_type_ids])
    emb = emb.reshape(bsz * seq, HIDDEN)

    pk = _pack_params(params)
    inputs = (
        emb, pk["emb_ln_g"], pk["emb_ln_b"],
        pk["qkv_w"], pk["qkv_b"], pk["o_w"], pk["o_b"], pk["ln1_g"], pk["ln1_b"],
        pk["ff1_w"], pk["ff1_b"], pk["ff2_w"], pk["ff2_b"], pk["ln2_g"], pk["ln2_b"],
        pk["pool_w"], pk["pool_b"],
    )

    kernel = functools.partial(
        _bert_encoder_kernel,
        bsz=bsz, seq=seq, n_layers=N_LAYERS, n_heads=N_HEADS,
        head_dim=HEAD_DIM, scale=scale, eps=LN_EPS)

    pooled = pl.pallas_call(
        kernel,
        out_shape=jax.ShapeDtypeStruct((bsz, HIDDEN), jnp.float32),
        in_specs=[pl.BlockSpec(memory_space=pltpu.MemorySpace.VMEM)] * len(inputs),
        out_specs=pl.BlockSpec(memory_space=pltpu.MemorySpace.VMEM),
        compiler_params=pltpu.CompilerParams(vmem_limit_bytes=32 * 1024 * 1024),
    )(*inputs)
    return pooled


if __name__ == "__main__":
    key = jax.random.PRNGKey(0)
    pkey, tkey = jax.random.split(key)
    params = init_params(pkey)

    B, L = 2, 8
    # Synthetic "tokenized sentences": position 0 plays the role of [CLS].
    token_ids = jax.random.randint(tkey, (B, L), 1, VOCAB, dtype=jnp.int32)
    token_type_ids = jnp.zeros((B, L), jnp.int32)   # seg_tensor is all zeros

    y = bert_encoder_forward(params, token_ids, token_type_ids)
    y = jax.block_until_ready(y)
    assert y.shape == (B, HIDDEN) and y.dtype == jnp.float32
    assert bool(jnp.all(jnp.isfinite(y)))
    print("KERNEL_OK")
</pallas_src>

<mosaic_0001>
module attributes {stable_mosaic.version = 11 : i64} {
  func.func @_bert_encoder_kernel(%arg0: memref<16x32xf32, #tpu.memory_space<vmem>>, %arg1: memref<1x32xf32, #tpu.memory_space<vmem>>, %arg2: memref<1x32xf32, #tpu.memory_space<vmem>>, %arg3: memref<2x32x96xf32, #tpu.memory_space<vmem>>, %arg4: memref<2x1x96xf32, #tpu.memory_space<vmem>>, %arg5: memref<2x32x32xf32, #tpu.memory_space<vmem>>, %arg6: memref<2x1x32xf32, #tpu.memory_space<vmem>>, %arg7: memref<2x1x32xf32, #tpu.memory_space<vmem>>, %arg8: memref<2x1x32xf32, #tpu.memory_space<vmem>>, %arg9: memref<2x32x64xf32, #tpu.memory_space<vmem>>, %arg10: memref<2x1x64xf32, #tpu.memory_space<vmem>>, %arg11: memref<2x64x32xf32, #tpu.memory_space<vmem>>, %arg12: memref<2x1x32xf32, #tpu.memory_space<vmem>>, %arg13: memref<2x1x32xf32, #tpu.memory_space<vmem>>, %arg14: memref<2x1x32xf32, #tpu.memory_space<vmem>>, %arg15: memref<32x32xf32, #tpu.memory_space<vmem>>, %arg16: memref<1x32xf32, #tpu.memory_space<vmem>>, %arg17: memref<2x32xf32, #tpu.memory_space<vmem>>) attributes {dimension_semantics = [], scalar_prefetch = 0 : i64, scratch_operands = 0 : i64, tpu.core_type = #tpu.core_type<tc>} {
    %c0 = arith.constant 0 : index
    %c0_0 = arith.constant 0 : index
    %0 = vector.load %arg0[%c0, %c0_0] : memref<16x32xf32, #tpu.memory_space<vmem>>, vector<16x32xf32>
    %c0_1 = arith.constant 0 : index
    %c0_2 = arith.constant 0 : index
    %1 = vector.load %arg1[%c0_1, %c0_2] : memref<1x32xf32, #tpu.memory_space<vmem>>, vector<1x32xf32>
    %c0_3 = arith.constant 0 : index
    %c0_4 = arith.constant 0 : index
    %2 = vector.load %arg2[%c0_3, %c0_4] : memref<1x32xf32, #tpu.memory_space<vmem>>, vector<1x32xf32>
    %cst = arith.constant dense<0.000000e+00> : vector<16xf32>
    %3 = vector.multi_reduction <add>, %0, %cst [1] : vector<16x32xf32> to vector<16xf32>
    %4 = vector.shape_cast %3 : vector<16xf32> to vector<16x1xf32>
    %cst_5 = arith.constant 3.200000e+01 : f32
    %5 = vector.broadcast %cst_5 : f32 to vector<16x1xf32>
    %6 = arith.divf %4, %5 : vector<16x1xf32>
    %7 = vector.broadcast %6 : vector<16x1xf32> to vector<16x32xf32>
    %8 = arith.subf %0, %7 : vector<16x32xf32>
    %9 = arith.mulf %8, %8 : vector<16x32xf32>
    %cst_6 = arith.constant dense<0.000000e+00> : vector<16xf32>
    %10 = vector.multi_reduction <add>, %9, %cst_6 [1] : vector<16x32xf32> to vector<16xf32>
    %11 = vector.shape_cast %10 : vector<16xf32> to vector<16x1xf32>
    %cst_7 = arith.constant 3.200000e+01 : f32
    %12 = vector.broadcast %cst_7 : f32 to vector<16x1xf32>
    %13 = arith.divf %11, %12 : vector<16x1xf32>
    %14 = vector.broadcast %6 : vector<16x1xf32> to vector<16x32xf32>
    %15 = arith.subf %0, %14 : vector<16x32xf32>
    %cst_8 = arith.constant 9.99999996E-13 : f32
    %16 = vector.broadcast %cst_8 : f32 to vector<16x1xf32>
    %17 = arith.addf %13, %16 : vector<16x1xf32>
    %18 = math.rsqrt %17 : vector<16x1xf32>
    %19 = vector.broadcast %18 : vector<16x1xf32> to vector<16x32xf32>
    %20 = arith.mulf %15, %19 : vector<16x32xf32>
    %21 = vector.broadcast %1 : vector<1x32xf32> to vector<16x32xf32>
    %22 = arith.mulf %20, %21 : vector<16x32xf32>
    %23 = vector.broadcast %2 : vector<1x32xf32> to vector<16x32xf32>
    %24 = arith.addf %22, %23 : vector<16x32xf32>
    %c0_9 = arith.constant 0 : index
    %c0_10 = arith.constant 0 : index
    %c0_11 = arith.constant 0 : index
    %25 = vector.load %arg3[%c0_9, %c0_10, %c0_11] : memref<2x32x96xf32, #tpu.memory_space<vmem>>, vector<1x32x96xf32>
    %26 = vector.shape_cast %25 : vector<1x32x96xf32> to vector<32x96xf32>
    %cst_12 = arith.constant dense<0.000000e+00> : vector<16x96xf32>
    %27 = tpu.matmul %24, %26, %cst_12 {dimension_numbers = #tpu.dot_dimension_numbers<[1], [0], [0], [1], [0, 0, 1, 1], [], []>} : vector<16x32xf32>, vector<32x96xf32>, vector<16x96xf32> -> vector<16x96xf32>
    %c0_13 = arith.constant 0 : index
    %c0_14 = arith.constant 0 : index
    %c0_15 = arith.constant 0 : index
    %28 = vector.load %arg4[%c0_13, %c0_14, %c0_15] : memref<2x1x96xf32, #tpu.memory_space<vmem>>, vector<1x1x96xf32>
    %29 = vector.shape_cast %28 : vector<1x1x96xf32> to vector<1x96xf32>
    %30 = vector.broadcast %29 : vector<1x96xf32> to vector<16x96xf32>
    %31 = arith.addf %27, %30 : vector<16x96xf32>
    %c0_16 = arith.constant 0 : index
    %c0_17 = arith.constant 0 : index
    %c0_18 = arith.constant 0 : index
    %32 = vector.load %arg5[%c0_16, %c0_17, %c0_18] : memref<2x32x32xf32, #tpu.memory_space<vmem>>, vector<1x32x32xf32>
    %33 = vector.shape_cast %32 : vector<1x32x32xf32> to vector<32x32xf32>
    %cst_19 = arith.constant 0.000000e+00 : f32
    %34 = vector.broadcast %cst_19 : f32 to vector<16x32xf32>
    %35 = vector.extract_strided_slice %31 {offsets = [0, 0], sizes = [16, 8], strides = [1, 1]} : vector<16x96xf32> to vector<16x8xf32>
    %36 = vector.shape_cast %35 : vector<16x8xf32> to vector<2x8x8xf32>
    %37 = vector.extract_strided_slice %31 {offsets = [0, 32], sizes = [16, 8], strides = [1, 1]} : vector<16x96xf32> to vector<16x8xf32>
    %38 = vector.shape_cast %37 : vector<16x8xf32> to vector<2x8x8xf32>
    %39 = vector.extract_strided_slice %31 {offsets = [0, 64], sizes = [16, 8], strides = [1, 1]} : vector<16x96xf32> to vector<16x8xf32>
    %40 = vector.shape_cast %39 : vector<16x8xf32> to vector<2x8x8xf32>
    "tpu.trace_start"() <{level = 10 : i32, message = "bqd,bkd->bqk"}> : () -> ()
    %cst_20 = arith.constant dense<0.000000e+00> : vector<2x8x8xf32>
    %41 = tpu.matmul %36, %38, %cst_20 {dimension_numbers = #tpu.dot_dimension_numbers<[2], [2], [1], [1], [0, 0, 0, 1, 1, 1], [0], [0]>} : vector<2x8x8xf32>, vector<2x8x8xf32>, vector<2x8x8xf32> -> vector<2x8x8xf32>
    "tpu.trace_stop"() : () -> ()
    %cst_21 = arith.constant 0.353553385 : f32
    %42 = vector.broadcast %cst_21 : f32 to vector<2x8x8xf32>
    %43 = arith.mulf %41, %42 : vector<2x8x8xf32>
    %cst_22 = arith.constant dense<0xFF800000> : vector<2x8xf32>
    %44 = vector.multi_reduction <maximumf>, %43, %cst_22 [2] : vector<2x8x8xf32> to vector<2x8xf32>
    %45 = vector.shape_cast %44 : vector<2x8xf32> to vector<2x8x1xf32>
    %46 = vector.broadcast %45 : vector<2x8x1xf32> to vector<2x8x8xf32>
    %47 = arith.subf %43, %46 : vector<2x8x8xf32>
    %48 = math.exp %47 : vector<2x8x8xf32>
    %cst_23 = arith.constant dense<0.000000e+00> : vector<2x8xf32>
    %49 = vector.multi_reduction <add>, %48, %cst_23 [2] : vector<2x8x8xf32> to vector<2x8xf32>
    %50 = vector.shape_cast %49 : vector<2x8xf32> to vector<2x8x1xf32>
    %51 = vector.broadcast %50 : vector<2x8x1xf32> to vector<2x8x8xf32>
    %52 = arith.divf %48, %51 : vector<2x8x8xf32>
    "tpu.trace_start"() <{level = 10 : i32, message = "bqk,bkd->bqd"}> : () -> ()
    %cst_24 = arith.constant dense<0.000000e+00> : vector<2x8x8xf32>
    %53 = tpu.matmul %52, %40, %cst_24 {dimension_numbers = #tpu.dot_dimension_numbers<[2], [1], [1], [2], [0, 0, 0, 1, 1, 2], [0], [0]>} : vector<2x8x8xf32>, vector<2x8x8xf32>, vector<2x8x8xf32> -> vector<2x8x8xf32>
    "tpu.trace_stop"() : () -> ()
    %54 = vector.shape_cast %53 : vector<2x8x8xf32> to vector<16x8xf32>
    %55 = vector.extract_strided_slice %33 {offsets = [0, 0], sizes = [8, 32], strides = [1, 1]} : vector<32x32xf32> to vector<8x32xf32>
    %cst_25 = arith.constant dense<0.000000e+00> : vector<16x32xf32>
    %56 = tpu.matmul %54, %55, %cst_25 {dimension_numbers = #tpu.dot_dimension_numbers<[1], [0], [0], [1], [0, 0, 1, 1], [], []>} : vector<16x8xf32>, vector<8x32xf32>, vector<16x32xf32> -> vector<16x32xf32>
    %57 = arith.addf %34, %56 : vector<16x32xf32>
    %58 = vector.extract_strided_slice %31 {offsets = [0, 8], sizes = [16, 8], strides = [1, 1]} : vector<16x96xf32> to vector<16x8xf32>
    %59 = vector.shape_cast %58 : vector<16x8xf32> to vector<2x8x8xf32>
    %60 = vector.extract_strided_slice %31 {offsets = [0, 40], sizes = [16, 8], strides = [1, 1]} : vector<16x96xf32> to vector<16x8xf32>
    %61 = vector.shape_cast %60 : vector<16x8xf32> to vector<2x8x8xf32>
    %62 = vector.extract_strided_slice %31 {offsets = [0, 72], sizes = [16, 8], strides = [1, 1]} : vector<16x96xf32> to vector<16x8xf32>
    %63 = vector.shape_cast %62 : vector<16x8xf32> to vector<2x8x8xf32>
    "tpu.trace_start"() <{level = 10 : i32, message = "bqd,bkd->bqk"}> : () -> ()
    %cst_26 = arith.constant dense<0.000000e+00> : vector<2x8x8xf32>
    %64 = tpu.matmul %59, %61, %cst_26 {dimension_numbers = #tpu.dot_dimension_numbers<[2], [2], [1], [1], [0, 0, 0, 1, 1, 1], [0], [0]>} : vector<2x8x8xf32>, vector<2x8x8xf32>, vector<2x8x8xf32> -> vector<2x8x8xf32>
    "tpu.trace_stop"() : () -> ()
    %cst_27 = arith.constant 0.353553385 : f32
    %65 = vector.broadcast %cst_27 : f32 to vector<2x8x8xf32>
    %66 = arith.mulf %64, %65 : vector<2x8x8xf32>
    %cst_28 = arith.constant dense<0xFF800000> : vector<2x8xf32>
    %67 = vector.multi_reduction <maximumf>, %66, %cst_28 [2] : vector<2x8x8xf32> to vector<2x8xf32>
    %68 = vector.shape_cast %67 : vector<2x8xf32> to vector<2x8x1xf32>
    %69 = vector.broadcast %68 : vector<2x8x1xf32> to vector<2x8x8xf32>
    %70 = arith.subf %66, %69 : vector<2x8x8xf32>
    %71 = math.exp %70 : vector<2x8x8xf32>
    %cst_29 = arith.constant dense<0.000000e+00> : vector<2x8xf32>
    %72 = vector.multi_reduction <add>, %71, %cst_29 [2] : vector<2x8x8xf32> to vector<2x8xf32>
    %73 = vector.shape_cast %72 : vector<2x8xf32> to vector<2x8x1xf32>
    %74 = vector.broadcast %73 : vector<2x8x1xf32> to vector<2x8x8xf32>
    %75 = arith.divf %71, %74 : vector<2x8x8xf32>
    "tpu.trace_start"() <{level = 10 : i32, message = "bqk,bkd->bqd"}> : () -> ()
    %cst_30 = arith.constant dense<0.000000e+00> : vector<2x8x8xf32>
    %76 = tpu.matmul %75, %63, %cst_30 {dimension_numbers = #tpu.dot_dimension_numbers<[2], [1], [1], [2], [0, 0, 0, 1, 1, 2], [0], [0]>} : vector<2x8x8xf32>, vector<2x8x8xf32>, vector<2x8x8xf32> -> vector<2x8x8xf32>
    "tpu.trace_stop"() : () -> ()
    %77 = vector.shape_cast %76 : vector<2x8x8xf32> to vector<16x8xf32>
    %78 = vector.extract_strided_slice %33 {offsets = [8, 0], sizes = [8, 32], strides = [1, 1]} : vector<32x32xf32> to vector<8x32xf32>
    %cst_31 = arith.constant dense<0.000000e+00> : vector<16x32xf32>
    %79 = tpu.matmul %77, %78, %cst_31 {dimension_numbers = #tpu.dot_dimension_numbers<[1], [0], [0], [1], [0, 0, 1, 1], [], []>} : vector<16x8xf32>, vector<8x32xf32>, vector<16x32xf32> -> vector<16x32xf32>
    %80 = arith.addf %57, %79 : vector<16x32xf32>
    %81 = vector.extract_strided_slice %31 {offsets = [0, 16], sizes = [16, 8], strides = [1, 1]} : vector<16x96xf32> to vector<16x8xf32>
    %82 = vector.shape_cast %81 : vector<16x8xf32> to vector<2x8x8xf32>
    %83 = vector.extract_strided_slice %31 {offsets = [0, 48], sizes = [16, 8], strides = [1, 1]} : vector<16x96xf32> to vector<16x8xf32>
    %84 = vector.shape_cast %83 : vector<16x8xf32> to vector<2x8x8xf32>
    %85 = vector.extract_strided_slice %31 {offsets = [0, 80], sizes = [16, 8], strides = [1, 1]} : vector<16x96xf32> to vector<16x8xf32>
    %86 = vector.shape_cast %85 : vector<16x8xf32> to vector<2x8x8xf32>
    "tpu.trace_start"() <{level = 10 : i32, message = "bqd,bkd->bqk"}> : () -> ()
    %cst_32 = arith.constant dense<0.000000e+00> : vector<2x8x8xf32>
    %87 = tpu.matmul %82, %84, %cst_32 {dimension_numbers = #tpu.dot_dimension_numbers<[2], [2], [1], [1], [0, 0, 0, 1, 1, 1], [0], [0]>} : vector<2x8x8xf32>, vector<2x8x8xf32>, vector<2x8x8xf32> -> vector<2x8x8xf32>
    "tpu.trace_stop"() : () -> ()
    %cst_33 = arith.constant 0.353553385 : f32
    %88 = vector.broadcast %cst_33 : f32 to vector<2x8x8xf32>
    %89 = arith.mulf %87, %88 : vector<2x8x8xf32>
    %cst_34 = arith.constant dense<0xFF800000> : vector<2x8xf32>
    %90 = vector.multi_reduction <maximumf>, %89, %cst_34 [2] : vector<2x8x8xf32> to vector<2x8xf32>
    %91 = vector.shape_cast %90 : vector<2x8xf32> to vector<2x8x1xf32>
    %92 = vector.broadcast %91 : vector<2x8x1xf32> to vector<2x8x8xf32>
    %93 = arith.subf %89, %92 : vector<2x8x8xf32>
    %94 = math.exp %93 : vector<2x8x8xf32>
    %cst_35 = arith.constant dense<0.000000e+00> : vector<2x8xf32>
    %95 = vector.multi_reduction <add>, %94, %cst_35 [2] : vector<2x8x8xf32> to vector<2x8xf32>
    %96 = vector.shape_cast %95 : vector<2x8xf32> to vector<2x8x1xf32>
    %97 = vector.broadcast %96 : vector<2x8x1xf32> to vector<2x8x8xf32>
    %98 = arith.divf %94, %97 : vector<2x8x8xf32>
    "tpu.trace_start"() <{level = 10 : i32, message = "bqk,bkd->bqd"}> : () -> ()
    %cst_36 = arith.constant dense<0.000000e+00> : vector<2x8x8xf32>
    %99 = tpu.matmul %98, %86, %cst_36 {dimension_numbers = #tpu.dot_dimension_numbers<[2], [1], [1], [2], [0, 0, 0, 1, 1, 2], [0], [0]>} : vector<2x8x8xf32>, vector<2x8x8xf32>, vector<2x8x8xf32> -> vector<2x8x8xf32>
    "tpu.trace_stop"() : () -> ()
    %100 = vector.shape_cast %99 : vector<2x8x8xf32> to vector<16x8xf32>
    %101 = vector.extract_strided_slice %33 {offsets = [16, 0], sizes = [8, 32], strides = [1, 1]} : vector<32x32xf32> to vector<8x32xf32>
    %cst_37 = arith.constant dense<0.000000e+00> : vector<16x32xf32>
    %102 = tpu.matmul %100, %101, %cst_37 {dimension_numbers = #tpu.dot_dimension_numbers<[1], [0], [0], [1], [0, 0, 1, 1], [], []>} : vector<16x8xf32>, vector<8x32xf32>, vector<16x32xf32> -> vector<16x32xf32>
    %103 = arith.addf %80, %102 : vector<16x32xf32>
    %104 = vector.extract_strided_slice %31 {offsets = [0, 24], sizes = [16, 8], strides = [1, 1]} : vector<16x96xf32> to vector<16x8xf32>
    %105 = vector.shape_cast %104 : vector<16x8xf32> to vector<2x8x8xf32>
    %106 = vector.extract_strided_slice %31 {offsets = [0, 56], sizes = [16, 8], strides = [1, 1]} : vector<16x96xf32> to vector<16x8xf32>
    %107 = vector.shape_cast %106 : vector<16x8xf32> to vector<2x8x8xf32>
    %108 = vector.extract_strided_slice %31 {offsets = [0, 88], sizes = [16, 8], strides = [1, 1]} : vector<16x96xf32> to vector<16x8xf32>
    %109 = vector.shape_cast %108 : vector<16x8xf32> to vector<2x8x8xf32>
    "tpu.trace_start"() <{level = 10 : i32, message = "bqd,bkd->bqk"}> : () -> ()
    %cst_38 = arith.constant dense<0.000000e+00> : vector<2x8x8xf32>
    %110 = tpu.matmul %105, %107, %cst_38 {dimension_numbers = #tpu.dot_dimension_numbers<[2], [2], [1], [1], [0, 0, 0, 1, 1, 1], [0], [0]>} : vector<2x8x8xf32>, vector<2x8x8xf32>, vector<2x8x8xf32> -> vector<2x8x8xf32>
    "tpu.trace_stop"() : () -> ()
    %cst_39 = arith.constant 0.353553385 : f32
    %111 = vector.broadcast %cst_39 : f32 to vector<2x8x8xf32>
    %112 = arith.mulf %110, %111 : vector<2x8x8xf32>
    %cst_40 = arith.constant dense<0xFF800000> : vector<2x8xf32>
    %113 = vector.multi_reduction <maximumf>, %112, %cst_40 [2] : vector<2x8x8xf32> to vector<2x8xf32>
    %114 = vector.shape_cast %113 : vector<2x8xf32> to vector<2x8x1xf32>
    %115 = vector.broadcast %114 : vector<2x8x1xf32> to vector<2x8x8xf32>
    %116 = arith.subf %112, %115 : vector<2x8x8xf32>
    %117 = math.exp %116 : vector<2x8x8xf32>
    %cst_41 = arith.constant dense<0.000000e+00> : vector<2x8xf32>
    %118 = vector.multi_reduction <add>, %117, %cst_41 [2] : vector<2x8x8xf32> to vector<2x8xf32>
    %119 = vector.shape_cast %118 : vector<2x8xf32> to vector<2x8x1xf32>
    %120 = vector.broadcast %119 : vector<2x8x1xf32> to vector<2x8x8xf32>
    %121 = arith.divf %117, %120 : vector<2x8x8xf32>
    "tpu.trace_start"() <{level = 10 : i32, message = "bqk,bkd->bqd"}> : () -> ()
    %cst_42 = arith.constant dense<0.000000e+00> : vector<2x8x8xf32>
    %122 = tpu.matmul %121, %109, %cst_42 {dimension_numbers = #tpu.dot_dimension_numbers<[2], [1], [1], [2], [0, 0, 0, 1, 1, 2], [0], [0]>} : vector<2x8x8xf32>, vector<2x8x8xf32>, vector<2x8x8xf32> -> vector<2x8x8xf32>
    "tpu.trace_stop"() : () -> ()
    %123 = vector.shape_cast %122 : vector<2x8x8xf32> to vector<16x8xf32>
    %124 = vector.extract_strided_slice %33 {offsets = [24, 0], sizes = [8, 32], strides = [1, 1]} : vector<32x32xf32> to vector<8x32xf32>
    %cst_43 = arith.constant dense<0.000000e+00> : vector<16x32xf32>
    %125 = tpu.matmul %123, %124, %cst_43 {dimension_numbers = #tpu.dot_dimension_numbers<[1], [0], [0], [1], [0, 0, 1, 1], [], []>} : vector<16x8xf32>, vector<8x32xf32>, vector<16x32xf32> -> vector<16x32xf32>
    %126 = arith.addf %103, %125 : vector<16x32xf32>
    %c0_44 = arith.constant 0 : index
    %c0_45 = arith.constant 0 : index
    %c0_46 = arith.constant 0 : index
    %127 = vector.load %arg6[%c0_44, %c0_45, %c0_46] : memref<2x1x32xf32, #tpu.memory_space<vmem>>, vector<1x1x32xf32>
    %128 = vector.shape_cast %127 : vector<1x1x32xf32> to vector<1x32xf32>
    %129 = vector.broadcast %128 : vector<1x32xf32> to vector<16x32xf32>
    %130 = arith.addf %126, %129 : vector<16x32xf32>
    %131 = arith.addf %130, %24 : vector<16x32xf32>
    %c0_47 = arith.constant 0 : index
    %c0_48 = arith.constant 0 : index
    %c0_49 = arith.constant 0 : index
    %132 = vector.load %arg7[%c0_47, %c0_48, %c0_49] : memref<2x1x32xf32, #tpu.memory_space<vmem>>, vector<1x1x32xf32>
    %133 = vector.shape_cast %132 : vector<1x1x32xf32> to vector<1x32xf32>
    %c0_50 = arith.constant 0 : index
    %c0_51 = arith.constant 0 : index
    %c0_52 = arith.constant 0 : index
    %134 = vector.load %arg8[%c0_50, %c0_51, %c0_52] : memref<2x1x32xf32, #tpu.memory_space<vmem>>, vector<1x1x32xf32>
    %135 = vector.shape_cast %134 : vector<1x1x32xf32> to vector<1x32xf32>
    %cst_53 = arith.constant dense<0.000000e+00> : vector<16xf32>
    %136 = vector.multi_reduction <add>, %131, %cst_53 [1] : vector<16x32xf32> to vector<16xf32>
    %137 = vector.shape_cast %136 : vector<16xf32> to vector<16x1xf32>
    %cst_54 = arith.constant 3.200000e+01 : f32
    %138 = vector.broadcast %cst_54 : f32 to vector<16x1xf32>
    %139 = arith.divf %137, %138 : vector<16x1xf32>
    %140 = vector.broadcast %139 : vector<16x1xf32> to vector<16x32xf32>
    %141 = arith.subf %131, %140 : vector<16x32xf32>
    %142 = arith.mulf %141, %141 : vector<16x32xf32>
    %cst_55 = arith.constant dense<0.000000e+00> : vector<16xf32>
    %143 = vector.multi_reduction <add>, %142, %cst_55 [1] : vector<16x32xf32> to vector<16xf32>
    %144 = vector.shape_cast %143 : vector<16xf32> to vector<16x1xf32>
    %cst_56 = arith.constant 3.200000e+01 : f32
    %145 = vector.broadcast %cst_56 : f32 to vector<16x1xf32>
    %146 = arith.divf %144, %145 : vector<16x1xf32>
    %147 = vector.broadcast %139 : vector<16x1xf32> to vector<16x32xf32>
    %148 = arith.subf %131, %147 : vector<16x32xf32>
    %cst_57 = arith.constant 9.99999996E-13 : f32
    %149 = vector.broadcast %cst_57 : f32 to vector<16x1xf32>
    %150 = arith.addf %146, %149 : vector<16x1xf32>
    %151 = math.rsqrt %150 : vector<16x1xf32>
    %152 = vector.broadcast %151 : vector<16x1xf32> to vector<16x32xf32>
    %153 = arith.mulf %148, %152 : vector<16x32xf32>
    %154 = vector.broadcast %133 : vector<1x32xf32> to vector<16x32xf32>
    %155 = arith.mulf %153, %154 : vector<16x32xf32>
    %156 = vector.broadcast %135 : vector<1x32xf32> to vector<16x32xf32>
    %157 = arith.addf %155, %156 : vector<16x32xf32>
    %c0_58 = arith.constant 0 : index
    %c0_59 = arith.constant 0 : index
    %c0_60 = arith.constant 0 : index
    %158 = vector.load %arg9[%c0_58, %c0_59, %c0_60] : memref<2x32x64xf32, #tpu.memory_space<vmem>>, vector<1x32x64xf32>
    %159 = vector.shape_cast %158 : vector<1x32x64xf32> to vector<32x64xf32>
    %cst_61 = arith.constant dense<0.000000e+00> : vector<16x64xf32>
    %160 = tpu.matmul %157, %159, %cst_61 {dimension_numbers = #tpu.dot_dimension_numbers<[1], [0], [0], [1], [0, 0, 1, 1], [], []>} : vector<16x32xf32>, vector<32x64xf32>, vector<16x64xf32> -> vector<16x64xf32>
    %c0_62 = arith.constant 0 : index
    %c0_63 = arith.constant 0 : index
    %c0_64 = arith.constant 0 : index
    %161 = vector.load %arg10[%c0_62, %c0_63, %c0_64] : memref<2x1x64xf32, #tpu.memory_space<vmem>>, vector<1x1x64xf32>
    %162 = vector.shape_cast %161 : vector<1x1x64xf32> to vector<1x64xf32>
    %163 = vector.broadcast %162 : vector<1x64xf32> to vector<16x64xf32>
    %164 = arith.addf %160, %163 : vector<16x64xf32>
    %cst_65 = arith.constant 5.000000e-01 : f32
    %165 = vector.broadcast %cst_65 : f32 to vector<16x64xf32>
    %166 = arith.mulf %165, %164 : vector<16x64xf32>
    %cst_66 = arith.constant 0.707106769 : f32
    %167 = vector.broadcast %cst_66 : f32 to vector<16x64xf32>
    %168 = arith.mulf %164, %167 : vector<16x64xf32>
    %169 = math.erf %168 : vector<16x64xf32>
    %cst_67 = arith.constant 1.000000e+00 : f32
    %170 = vector.broadcast %cst_67 : f32 to vector<16x64xf32>
    %171 = arith.addf %170, %169 : vector<16x64xf32>
    %172 = arith.mulf %166, %171 : vector<16x64xf32>
    %c0_68 = arith.constant 0 : index
    %c0_69 = arith.constant 0 : index
    %c0_70 = arith.constant 0 : index
    %173 = vector.load %arg11[%c0_68, %c0_69, %c0_70] : memref<2x64x32xf32, #tpu.memory_space<vmem>>, vector<1x64x32xf32>
    %174 = vector.shape_cast %173 : vector<1x64x32xf32> to vector<64x32xf32>
    %cst_71 = arith.constant dense<0.000000e+00> : vector<16x32xf32>
    %175 = tpu.matmul %172, %174, %cst_71 {dimension_numbers = #tpu.dot_dimension_numbers<[1], [0], [0], [1], [0, 0, 1, 1], [], []>} : vector<16x64xf32>, vector<64x32xf32>, vector<16x32xf32> -> vector<16x32xf32>
    %c0_72 = arith.constant 0 : index
    %c0_73 = arith.constant 0 : index
    %c0_74 = arith.constant 0 : index
    %176 = vector.load %arg12[%c0_72, %c0_73, %c0_74] : memref<2x1x32xf32, #tpu.memory_space<vmem>>, vector<1x1x32xf32>
    %177 = vector.shape_cast %176 : vector<1x1x32xf32> to vector<1x32xf32>
    %178 = vector.broadcast %177 : vector<1x32xf32> to vector<16x32xf32>
    %179 = arith.addf %175, %178 : vector<16x32xf32>
    %180 = arith.addf %179, %157 : vector<16x32xf32>
    %c0_75 = arith.constant 0 : index
    %c0_76 = arith.constant 0 : index
    %c0_77 = arith.constant 0 : index
    %181 = vector.load %arg13[%c0_75, %c0_76, %c0_77] : memref<2x1x32xf32, #tpu.memory_space<vmem>>, vector<1x1x32xf32>
    %182 = vector.shape_cast %181 : vector<1x1x32xf32> to vector<1x32xf32>
    %c0_78 = arith.constant 0 : index
    %c0_79 = arith.constant 0 : index
    %c0_80 = arith.constant 0 : index
    %183 = vector.load %arg14[%c0_78, %c0_79, %c0_80] : memref<2x1x32xf32, #tpu.memory_space<vmem>>, vector<1x1x32xf32>
    %184 = vector.shape_cast %183 : vector<1x1x32xf32> to vector<1x32xf32>
    %cst_81 = arith.constant dense<0.000000e+00> : vector<16xf32>
    %185 = vector.multi_reduction <add>, %180, %cst_81 [1] : vector<16x32xf32> to vector<16xf32>
    %186 = vector.shape_cast %185 : vector<16xf32> to vector<16x1xf32>
    %cst_82 = arith.constant 3.200000e+01 : f32
    %187 = vector.broadcast %cst_82 : f32 to vector<16x1xf32>
    %188 = arith.divf %186, %187 : vector<16x1xf32>
    %189 = vector.broadcast %188 : vector<16x1xf32> to vector<16x32xf32>
    %190 = arith.subf %180, %189 : vector<16x32xf32>
    %191 = arith.mulf %190, %190 : vector<16x32xf32>
    %cst_83 = arith.constant dense<0.000000e+00> : vector<16xf32>
    %192 = vector.multi_reduction <add>, %191, %cst_83 [1] : vector<16x32xf32> to vector<16xf32>
    %193 = vector.shape_cast %192 : vector<16xf32> to vector<16x1xf32>
    %cst_84 = arith.constant 3.200000e+01 : f32
    %194 = vector.broadcast %cst_84 : f32 to vector<16x1xf32>
    %195 = arith.divf %193, %194 : vector<16x1xf32>
    %196 = vector.broadcast %188 : vector<16x1xf32> to vector<16x32xf32>
    %197 = arith.subf %180, %196 : vector<16x32xf32>
    %cst_85 = arith.constant 9.99999996E-13 : f32
    %198 = vector.broadcast %cst_85 : f32 to vector<16x1xf32>
    %199 = arith.addf %195, %198 : vector<16x1xf32>
    %200 = math.rsqrt %199 : vector<16x1xf32>
    %201 = vector.broadcast %200 : vector<16x1xf32> to vector<16x32xf32>
    %202 = arith.mulf %197, %201 : vector<16x32xf32>
    %203 = vector.broadcast %182 : vector<1x32xf32> to vector<16x32xf32>
    %204 = arith.mulf %202, %203 : vector<16x32xf32>
    %205 = vector.broadcast %184 : vector<1x32xf32> to vector<16x32xf32>
    %206 = arith.addf %204, %205 : vector<16x32xf32>
    %c1 = arith.constant 1 : index
    %c0_86 = arith.constant 0 : index
    %c0_87 = arith.constant 0 : index
    %207 = vector.load %arg3[%c1, %c0_86, %c0_87] : memref<2x32x96xf32, #tpu.memory_space<vmem>>, vector<1x32x96xf32>
    %208 = vector.shape_cast %207 : vector<1x32x96xf32> to vector<32x96xf32>
    %cst_88 = arith.constant dense<0.000000e+00> : vector<16x96xf32>
    %209 = tpu.matmul %206, %208, %cst_88 {dimension_numbers = #tpu.dot_dimension_numbers<[1], [0], [0], [1], [0, 0, 1, 1], [], []>} : vector<16x32xf32>, vector<32x96xf32>, vector<16x96xf32> -> vector<16x96xf32>
    %c1_89 = arith.constant 1 : index
    %c0_90 = arith.constant 0 : index
    %c0_91 = arith.constant 0 : index
    %210 = vector.load %arg4[%c1_89, %c0_90, %c0_91] : memref<2x1x96xf32, #tpu.memory_space<vmem>>, vector<1x1x96xf32>
    %211 = vector.shape_cast %210 : vector<1x1x96xf32> to vector<1x96xf32>
    %212 = vector.broadcast %211 : vector<1x96xf32> to vector<16x96xf32>
    %213 = arith.addf %209, %212 : vector<16x96xf32>
    %c1_92 = arith.constant 1 : index
    %c0_93 = arith.constant 0 : index
    %c0_94 = arith.constant 0 : index
    %214 = vector.load %arg5[%c1_92, %c0_93, %c0_94] : memref<2x32x32xf32, #tpu.memory_space<vmem>>, vector<1x32x32xf32>
    %215 = vector.shape_cast %214 : vector<1x32x32xf32> to vector<32x32xf32>
    %cst_95 = arith.constant 0.000000e+00 : f32
    %216 = vector.broadcast %cst_95 : f32 to vector<16x32xf32>
    %217 = vector.extract_strided_slice %213 {offsets = [0, 0], sizes = [16, 8], strides = [1, 1]} : vector<16x96xf32> to vector<16x8xf32>
    %218 = vector.shape_cast %217 : vector<16x8xf32> to vector<2x8x8xf32>
    %219 = vector.extract_strided_slice %213 {offsets = [0, 32], sizes = [16, 8], strides = [1, 1]} : vector<16x96xf32> to vector<16x8xf32>
    %220 = vector.shape_cast %219 : vector<16x8xf32> to vector<2x8x8xf32>
    %221 = vector.extract_strided_slice %213 {offsets = [0, 64], sizes = [16, 8], strides = [1, 1]} : vector<16x96xf32> to vector<16x8xf32>
    %222 = vector.shape_cast %221 : vector<16x8xf32> to vector<2x8x8xf32>
    "tpu.trace_start"() <{level = 10 : i32, message = "bqd,bkd->bqk"}> : () -> ()
    %cst_96 = arith.constant dense<0.000000e+00> : vector<2x8x8xf32>
    %223 = tpu.matmul %218, %220, %cst_96 {dimension_numbers = #tpu.dot_dimension_numbers<[2], [2], [1], [1], [0, 0, 0, 1, 1, 1], [0], [0]>} : vector<2x8x8xf32>, vector<2x8x8xf32>, vector<2x8x8xf32> -> vector<2x8x8xf32>
    "tpu.trace_stop"() : () -> ()
    %cst_97 = arith.constant 0.353553385 : f32
    %224 = vector.broadcast %cst_97 : f32 to vector<2x8x8xf32>
    %225 = arith.mulf %223, %224 : vector<2x8x8xf32>
    %cst_98 = arith.constant dense<0xFF800000> : vector<2x8xf32>
    %226 = vector.multi_reduction <maximumf>, %225, %cst_98 [2] : vector<2x8x8xf32> to vector<2x8xf32>
    %227 = vector.shape_cast %226 : vector<2x8xf32> to vector<2x8x1xf32>
    %228 = vector.broadcast %227 : vector<2x8x1xf32> to vector<2x8x8xf32>
    %229 = arith.subf %225, %228 : vector<2x8x8xf32>
    %230 = math.exp %229 : vector<2x8x8xf32>
    %cst_99 = arith.constant dense<0.000000e+00> : vector<2x8xf32>
    %231 = vector.multi_reduction <add>, %230, %cst_99 [2] : vector<2x8x8xf32> to vector<2x8xf32>
    %232 = vector.shape_cast %231 : vector<2x8xf32> to vector<2x8x1xf32>
    %233 = vector.broadcast %232 : vector<2x8x1xf32> to vector<2x8x8xf32>
    %234 = arith.divf %230, %233 : vector<2x8x8xf32>
    "tpu.trace_start"() <{level = 10 : i32, message = "bqk,bkd->bqd"}> : () -> ()
    %cst_100 = arith.constant dense<0.000000e+00> : vector<2x8x8xf32>
    %235 = tpu.matmul %234, %222, %cst_100 {dimension_numbers = #tpu.dot_dimension_numbers<[2], [1], [1], [2], [0, 0, 0, 1, 1, 2], [0], [0]>} : vector<2x8x8xf32>, vector<2x8x8xf32>, vector<2x8x8xf32> -> vector<2x8x8xf32>
    "tpu.trace_stop"() : () -> ()
    %236 = vector.shape_cast %235 : vector<2x8x8xf32> to vector<16x8xf32>
    %237 = vector.extract_strided_slice %215 {offsets = [0, 0], sizes = [8, 32], strides = [1, 1]} : vector<32x32xf32> to vector<8x32xf32>
    %cst_101 = arith.constant dense<0.000000e+00> : vector<16x32xf32>
    %238 = tpu.matmul %236, %237, %cst_101 {dimension_numbers = #tpu.dot_dimension_numbers<[1], [0], [0], [1], [0, 0, 1, 1], [], []>} : vector<16x8xf32>, vector<8x32xf32>, vector<16x32xf32> -> vector<16x32xf32>
    %239 = arith.addf %216, %238 : vector<16x32xf32>
    %240 = vector.extract_strided_slice %213 {offsets = [0, 8], sizes = [16, 8], strides = [1, 1]} : vector<16x96xf32> to vector<16x8xf32>
    %241 = vector.shape_cast %240 : vector<16x8xf32> to vector<2x8x8xf32>
    %242 = vector.extract_strided_slice %213 {offsets = [0, 40], sizes = [16, 8], strides = [1, 1]} : vector<16x96xf32> to vector<16x8xf32>
    %243 = vector.shape_cast %242 : vector<16x8xf32> to vector<2x8x8xf32>
    %244 = vector.extract_strided_slice %213 {offsets = [0, 72], sizes = [16, 8], strides = [1, 1]} : vector<16x96xf32> to vector<16x8xf32>
    %245 = vector.shape_cast %244 : vector<16x8xf32> to vector<2x8x8xf32>
    "tpu.trace_start"() <{level = 10 : i32, message = "bqd,bkd->bqk"}> : () -> ()
    %cst_102 = arith.constant dense<0.000000e+00> : vector<2x8x8xf32>
    %246 = tpu.matmul %241, %243, %cst_102 {dimension_numbers = #tpu.dot_dimension_numbers<[2], [2], [1], [1], [0, 0, 0, 1, 1, 1], [0], [0]>} : vector<2x8x8xf32>, vector<2x8x8xf32>, vector<2x8x8xf32> -> vector<2x8x8xf32>
    "tpu.trace_stop"() : () -> ()
    %cst_103 = arith.constant 0.353553385 : f32
    %247 = vector.broadcast %cst_103 : f32 to vector<2x8x8xf32>
    %248 = arith.mulf %246, %247 : vector<2x8x8xf32>
    %cst_104 = arith.constant dense<0xFF800000> : vector<2x8xf32>
    %249 = vector.multi_reduction <maximumf>, %248, %cst_104 [2] : vector<2x8x8xf32> to vector<2x8xf32>
    %250 = vector.shape_cast %249 : vector<2x8xf32> to vector<2x8x1xf32>
    %251 = vector.broadcast %250 : vector<2x8x1xf32> to vector<2x8x8xf32>
    %252 = arith.subf %248, %251 : vector<2x8x8xf32>
    %253 = math.exp %252 : vector<2x8x8xf32>
    %cst_105 = arith.constant dense<0.000000e+00> : vector<2x8xf32>
    %254 = vector.multi_reduction <add>, %253, %cst_105 [2] : vector<2x8x8xf32> to vector<2x8xf32>
    %255 = vector.shape_cast %254 : vector<2x8xf32> to vector<2x8x1xf32>
    %256 = vector.broadcast %255 : vector<2x8x1xf32> to vector<2x8x8xf32>
    %257 = arith.divf %253, %256 : vector<2x8x8xf32>
    "tpu.trace_start"() <{level = 10 : i32, message = "bqk,bkd->bqd"}> : () -> ()
    %cst_106 = arith.constant dense<0.000000e+00> : vector<2x8x8xf32>
    %258 = tpu.matmul %257, %245, %cst_106 {dimension_numbers = #tpu.dot_dimension_numbers<[2], [1], [1], [2], [0, 0, 0, 1, 1, 2], [0], [0]>} : vector<2x8x8xf32>, vector<2x8x8xf32>, vector<2x8x8xf32> -> vector<2x8x8xf32>
    "tpu.trace_stop"() : () -> ()
    %259 = vector.shape_cast %258 : vector<2x8x8xf32> to vector<16x8xf32>
    %260 = vector.extract_strided_slice %215 {offsets = [8, 0], sizes = [8, 32], strides = [1, 1]} : vector<32x32xf32> to vector<8x32xf32>
    %cst_107 = arith.constant dense<0.000000e+00> : vector<16x32xf32>
    %261 = tpu.matmul %259, %260, %cst_107 {dimension_numbers = #tpu.dot_dimension_numbers<[1], [0], [0], [1], [0, 0, 1, 1], [], []>} : vector<16x8xf32>, vector<8x32xf32>, vector<16x32xf32> -> vector<16x32xf32>
    %262 = arith.addf %239, %261 : vector<16x32xf32>
    %263 = vector.extract_strided_slice %213 {offsets = [0, 16], sizes = [16, 8], strides = [1, 1]} : vector<16x96xf32> to vector<16x8xf32>
    %264 = vector.shape_cast %263 : vector<16x8xf32> to vector<2x8x8xf32>
    %265 = vector.extract_strided_slice %213 {offsets = [0, 48], sizes = [16, 8], strides = [1, 1]} : vector<16x96xf32> to vector<16x8xf32>
    %266 = vector.shape_cast %265 : vector<16x8xf32> to vector<2x8x8xf32>
    %267 = vector.extract_strided_slice %213 {offsets = [0, 80], sizes = [16, 8], strides = [1, 1]} : vector<16x96xf32> to vector<16x8xf32>
    %268 = vector.shape_cast %267 : vector<16x8xf32> to vector<2x8x8xf32>
    "tpu.trace_start"() <{level = 10 : i32, message = "bqd,bkd->bqk"}> : () -> ()
    %cst_108 = arith.constant dense<0.000000e+00> : vector<2x8x8xf32>
    %269 = tpu.matmul %264, %266, %cst_108 {dimension_numbers = #tpu.dot_dimension_numbers<[2], [2], [1], [1], [0, 0, 0, 1, 1, 1], [0], [0]>} : vector<2x8x8xf32>, vector<2x8x8xf32>, vector<2x8x8xf32> -> vector<2x8x8xf32>
    "tpu.trace_stop"() : () -> ()
    %cst_109 = arith.constant 0.353553385 : f32
    %270 = vector.broadcast %cst_109 : f32 to vector<2x8x8xf32>
    %271 = arith.mulf %269, %270 : vector<2x8x8xf32>
    %cst_110 = arith.constant dense<0xFF800000> : vector<2x8xf32>
    %272 = vector.multi_reduction <maximumf>, %271, %cst_110 [2] : vector<2x8x8xf32> to vector<2x8xf32>
    %273 = vector.shape_cast %272 : vector<2x8xf32> to vector<2x8x1xf32>
    %274 = vector.broadcast %273 : vector<2x8x1xf32> to vector<2x8x8xf32>
    %275 = arith.subf %271, %274 : vector<2x8x8xf32>
    %276 = math.exp %275 : vector<2x8x8xf32>
    %cst_111 = arith.constant dense<0.000000e+00> : vector<2x8xf32>
    %277 = vector.multi_reduction <add>, %276, %cst_111 [2] : vector<2x8x8xf32> to vector<2x8xf32>
    %278 = vector.shape_cast %277 : vector<2x8xf32> to vector<2x8x1xf32>
    %279 = vector.broadcast %278 : vector<2x8x1xf32> to vector<2x8x8xf32>
    %280 = arith.divf %276, %279 : vector<2x8x8xf32>
    "tpu.trace_start"() <{level = 10 : i32, message = "bqk,bkd->bqd"}> : () -> ()
    %cst_112 = arith.constant dense<0.000000e+00> : vector<2x8x8xf32>
    %281 = tpu.matmul %280, %268, %cst_112 {dimension_numbers = #tpu.dot_dimension_numbers<[2], [1], [1], [2], [0, 0, 0, 1, 1, 2], [0], [0]>} : vector<2x8x8xf32>, vector<2x8x8xf32>, vector<2x8x8xf32> -> vector<2x8x8xf32>
    "tpu.trace_stop"() : () -> ()
    %282 = vector.shape_cast %281 : vector<2x8x8xf32> to vector<16x8xf32>
    %283 = vector.extract_strided_slice %215 {offsets = [16, 0], sizes = [8, 32], strides = [1, 1]} : vector<32x32xf32> to vector<8x32xf32>
    %cst_113 = arith.constant dense<0.000000e+00> : vector<16x32xf32>
    %284 = tpu.matmul %282, %283, %cst_113 {dimension_numbers = #tpu.dot_dimension_numbers<[1], [0], [0], [1], [0, 0, 1, 1], [], []>} : vector<16x8xf32>, vector<8x32xf32>, vector<16x32xf32> -> vector<16x32xf32>
    %285 = arith.addf %262, %284 : vector<16x32xf32>
    %286 = vector.extract_strided_slice %213 {offsets = [0, 24], sizes = [16, 8], strides = [1, 1]} : vector<16x96xf32> to vector<16x8xf32>
    %287 = vector.shape_cast %286 : vector<16x8xf32> to vector<2x8x8xf32>
    %288 = vector.extract_strided_slice %213 {offsets = [0, 56], sizes = [16, 8], strides = [1, 1]} : vector<16x96xf32> to vector<16x8xf32>
    %289 = vector.shape_cast %288 : vector<16x8xf32> to vector<2x8x8xf32>
    %290 = vector.extract_strided_slice %213 {offsets = [0, 88], sizes = [16, 8], strides = [1, 1]} : vector<16x96xf32> to vector<16x8xf32>
    %291 = vector.shape_cast %290 : vector<16x8xf32> to vector<2x8x8xf32>
    "tpu.trace_start"() <{level = 10 : i32, message = "bqd,bkd->bqk"}> : () -> ()
    %cst_114 = arith.constant dense<0.000000e+00> : vector<2x8x8xf32>
    %292 = tpu.matmul %287, %289, %cst_114 {dimension_numbers = #tpu.dot_dimension_numbers<[2], [2], [1], [1], [0, 0, 0, 1, 1, 1], [0], [0]>} : vector<2x8x8xf32>, vector<2x8x8xf32>, vector<2x8x8xf32> -> vector<2x8x8xf32>
    "tpu.trace_stop"() : () -> ()
    %cst_115 = arith.constant 0.353553385 : f32
    %293 = vector.broadcast %cst_115 : f32 to vector<2x8x8xf32>
    %294 = arith.mulf %292, %293 : vector<2x8x8xf32>
    %cst_116 = arith.constant dense<0xFF800000> : vector<2x8xf32>
    %295 = vector.multi_reduction <maximumf>, %294, %cst_116 [2] : vector<2x8x8xf32> to vector<2x8xf32>
    %296 = vector.shape_cast %295 : vector<2x8xf32> to vector<2x8x1xf32>
    %297 = vector.broadcast %296 : vector<2x8x1xf32> to vector<2x8x8xf32>
    %298 = arith.subf %294, %297 : vector<2x8x8xf32>
    %299 = math.exp %298 : vector<2x8x8xf32>
    %cst_117 = arith.constant dense<0.000000e+00> : vector<2x8xf32>
    %300 = vector.multi_reduction <add>, %299, %cst_117 [2] : vector<2x8x8xf32> to vector<2x8xf32>
    %301 = vector.shape_cast %300 : vector<2x8xf32> to vector<2x8x1xf32>
    %302 = vector.broadcast %301 : vector<2x8x1xf32> to vector<2x8x8xf32>
    %303 = arith.divf %299, %302 : vector<2x8x8xf32>
    "tpu.trace_start"() <{level = 10 : i32, message = "bqk,bkd->bqd"}> : () -> ()
    %cst_118 = arith.constant dense<0.000000e+00> : vector<2x8x8xf32>
    %304 = tpu.matmul %303, %291, %cst_118 {dimension_numbers = #tpu.dot_dimension_numbers<[2], [1], [1], [2], [0, 0, 0, 1, 1, 2], [0], [0]>} : vector<2x8x8xf32>, vector<2x8x8xf32>, vector<2x8x8xf32> -> vector<2x8x8xf32>
    "tpu.trace_stop"() : () -> ()
    %305 = vector.shape_cast %304 : vector<2x8x8xf32> to vector<16x8xf32>
    %306 = vector.extract_strided_slice %215 {offsets = [24, 0], sizes = [8, 32], strides = [1, 1]} : vector<32x32xf32> to vector<8x32xf32>
    %cst_119 = arith.constant dense<0.000000e+00> : vector<16x32xf32>
    %307 = tpu.matmul %305, %306, %cst_119 {dimension_numbers = #tpu.dot_dimension_numbers<[1], [0], [0], [1], [0, 0, 1, 1], [], []>} : vector<16x8xf32>, vector<8x32xf32>, vector<16x32xf32> -> vector<16x32xf32>
    %308 = arith.addf %285, %307 : vector<16x32xf32>
    %c1_120 = arith.constant 1 : index
    %c0_121 = arith.constant 0 : index
    %c0_122 = arith.constant 0 : index
    %309 = vector.load %arg6[%c1_120, %c0_121, %c0_122] : memref<2x1x32xf32, #tpu.memory_space<vmem>>, vector<1x1x32xf32>
    %310 = vector.shape_cast %309 : vector<1x1x32xf32> to vector<1x32xf32>
    %311 = vector.broadcast %310 : vector<1x32xf32> to vector<16x32xf32>
    %312 = arith.addf %308, %311 : vector<16x32xf32>
    %313 = arith.addf %312, %206 : vector<16x32xf32>
    %c1_123 = arith.constant 1 : index
    %c0_124 = arith.constant 0 : index
    %c0_125 = arith.constant 0 : index
    %314 = vector.load %arg7[%c1_123, %c0_124, %c0_125] : memref<2x1x32xf32, #tpu.memory_space<vmem>>, vector<1x1x32xf32>
    %315 = vector.shape_cast %314 : vector<1x1x32xf32> to vector<1x32xf32>
    %c1_126 = arith.constant 1 : index
    %c0_127 = arith.constant 0 : index
    %c0_128 = arith.constant 0 : index
    %316 = vector.load %arg8[%c1_126, %c0_127, %c0_128] : memref<2x1x32xf32, #tpu.memory_space<vmem>>, vector<1x1x32xf32>
    %317 = vector.shape_cast %316 : vector<1x1x32xf32> to vector<1x32xf32>
    %cst_129 = arith.constant dense<0.000000e+00> : vector<16xf32>
    %318 = vector.multi_reduction <add>, %313, %cst_129 [1] : vector<16x32xf32> to vector<16xf32>
    %319 = vector.shape_cast %318 : vector<16xf32> to vector<16x1xf32>
    %cst_130 = arith.constant 3.200000e+01 : f32
    %320 = vector.broadcast %cst_130 : f32 to vector<16x1xf32>
    %321 = arith.divf %319, %320 : vector<16x1xf32>
    %322 = vector.broadcast %321 : vector<16x1xf32> to vector<16x32xf32>
    %323 = arith.subf %313, %322 : vector<16x32xf32>
    %324 = arith.mulf %323, %323 : vector<16x32xf32>
    %cst_131 = arith.constant dense<0.000000e+00> : vector<16xf32>
    %325 = vector.multi_reduction <add>, %324, %cst_131 [1] : vector<16x32xf32> to vector<16xf32>
    %326 = vector.shape_cast %325 : vector<16xf32> to vector<16x1xf32>
    %cst_132 = arith.constant 3.200000e+01 : f32
    %327 = vector.broadcast %cst_132 : f32 to vector<16x1xf32>
    %328 = arith.divf %326, %327 : vector<16x1xf32>
    %329 = vector.broadcast %321 : vector<16x1xf32> to vector<16x32xf32>
    %330 = arith.subf %313, %329 : vector<16x32xf32>
    %cst_133 = arith.constant 9.99999996E-13 : f32
    %331 = vector.broadcast %cst_133 : f32 to vector<16x1xf32>
    %332 = arith.addf %328, %331 : vector<16x1xf32>
    %333 = math.rsqrt %332 : vector<16x1xf32>
    %334 = vector.broadcast %333 : vector<16x1xf32> to vector<16x32xf32>
    %335 = arith.mulf %330, %334 : vector<16x32xf32>
    %336 = vector.broadcast %315 : vector<1x32xf32> to vector<16x32xf32>
    %337 = arith.mulf %335, %336 : vector<16x32xf32>
    %338 = vector.broadcast %317 : vector<1x32xf32> to vector<16x32xf32>
    %339 = arith.addf %337, %338 : vector<16x32xf32>
    %c1_134 = arith.constant 1 : index
    %c0_135 = arith.constant 0 : index
    %c0_136 = arith.constant 0 : index
    %340 = vector.load %arg9[%c1_134, %c0_135, %c0_136] : memref<2x32x64xf32, #tpu.memory_space<vmem>>, vector<1x32x64xf32>
    %341 = vector.shape_cast %340 : vector<1x32x64xf32> to vector<32x64xf32>
    %cst_137 = arith.constant dense<0.000000e+00> : vector<16x64xf32>
    %342 = tpu.matmul %339, %341, %cst_137 {dimension_numbers = #tpu.dot_dimension_numbers<[1], [0], [0], [1], [0, 0, 1, 1], [], []>} : vector<16x32xf32>, vector<32x64xf32>, vector<16x64xf32> -> vector<16x64xf32>
    %c1_138 = arith.constant 1 : index
    %c0_139 = arith.constant 0 : index
    %c0_140 = arith.constant 0 : index
    %343 = vector.load %arg10[%c1_138, %c0_139, %c0_140] : memref<2x1x64xf32, #tpu.memory_space<vmem>>, vector<1x1x64xf32>
    %344 = vector.shape_cast %343 : vector<1x1x64xf32> to vector<1x64xf32>
    %345 = vector.broadcast %344 : vector<1x64xf32> to vector<16x64xf32>
    %346 = arith.addf %342, %345 : vector<16x64xf32>
    %cst_141 = arith.constant 5.000000e-01 : f32
    %347 = vector.broadcast %cst_141 : f32 to vector<16x64xf32>
    %348 = arith.mulf %347, %346 : vector<16x64xf32>
    %cst_142 = arith.constant 0.707106769 : f32
    %349 = vector.broadcast %cst_142 : f32 to vector<16x64xf32>
    %350 = arith.mulf %346, %349 : vector<16x64xf32>
    %351 = math.erf %350 : vector<16x64xf32>
    %cst_143 = arith.constant 1.000000e+00 : f32
    %352 = vector.broadcast %cst_143 : f32 to vector<16x64xf32>
    %353 = arith.addf %352, %351 : vector<16x64xf32>
    %354 = arith.mulf %348, %353 : vector<16x64xf32>
    %c1_144 = arith.constant 1 : index
    %c0_145 = arith.constant 0 : index
    %c0_146 = arith.constant 0 : index
    %355 = vector.load %arg11[%c1_144, %c0_145, %c0_146] : memref<2x64x32xf32, #tpu.memory_space<vmem>>, vector<1x64x32xf32>
    %356 = vector.shape_cast %355 : vector<1x64x32xf32> to vector<64x32xf32>
    %cst_147 = arith.constant dense<0.000000e+00> : vector<16x32xf32>
    %357 = tpu.matmul %354, %356, %cst_147 {dimension_numbers = #tpu.dot_dimension_numbers<[1], [0], [0], [1], [0, 0, 1, 1], [], []>} : vector<16x64xf32>, vector<64x32xf32>, vector<16x32xf32> -> vector<16x32xf32>
    %c1_148 = arith.constant 1 : index
    %c0_149 = arith.constant 0 : index
    %c0_150 = arith.constant 0 : index
    %358 = vector.load %arg12[%c1_148, %c0_149, %c0_150] : memref<2x1x32xf32, #tpu.memory_space<vmem>>, vector<1x1x32xf32>
    %359 = vector.shape_cast %358 : vector<1x1x32xf32> to vector<1x32xf32>
    %360 = vector.broadcast %359 : vector<1x32xf32> to vector<16x32xf32>
    %361 = arith.addf %357, %360 : vector<16x32xf32>
    %362 = arith.addf %361, %339 : vector<16x32xf32>
    %c1_151 = arith.constant 1 : index
    %c0_152 = arith.constant 0 : index
    %c0_153 = arith.constant 0 : index
    %363 = vector.load %arg13[%c1_151, %c0_152, %c0_153] : memref<2x1x32xf32, #tpu.memory_space<vmem>>, vector<1x1x32xf32>
    %364 = vector.shape_cast %363 : vector<1x1x32xf32> to vector<1x32xf32>
    %c1_154 = arith.constant 1 : index
    %c0_155 = arith.constant 0 : index
    %c0_156 = arith.constant 0 : index
    %365 = vector.load %arg14[%c1_154, %c0_155, %c0_156] : memref<2x1x32xf32, #tpu.memory_space<vmem>>, vector<1x1x32xf32>
    %366 = vector.shape_cast %365 : vector<1x1x32xf32> to vector<1x32xf32>
    %cst_157 = arith.constant dense<0.000000e+00> : vector<16xf32>
    %367 = vector.multi_reduction <add>, %362, %cst_157 [1] : vector<16x32xf32> to vector<16xf32>
    %368 = vector.shape_cast %367 : vector<16xf32> to vector<16x1xf32>
    %cst_158 = arith.constant 3.200000e+01 : f32
    %369 = vector.broadcast %cst_158 : f32 to vector<16x1xf32>
    %370 = arith.divf %368, %369 : vector<16x1xf32>
    %371 = vector.broadcast %370 : vector<16x1xf32> to vector<16x32xf32>
    %372 = arith.subf %362, %371 : vector<16x32xf32>
    %373 = arith.mulf %372, %372 : vector<16x32xf32>
    %cst_159 = arith.constant dense<0.000000e+00> : vector<16xf32>
    %374 = vector.multi_reduction <add>, %373, %cst_159 [1] : vector<16x32xf32> to vector<16xf32>
    %375 = vector.shape_cast %374 : vector<16xf32> to vector<16x1xf32>
    %cst_160 = arith.constant 3.200000e+01 : f32
    %376 = vector.broadcast %cst_160 : f32 to vector<16x1xf32>
    %377 = arith.divf %375, %376 : vector<16x1xf32>
    %378 = vector.broadcast %370 : vector<16x1xf32> to vector<16x32xf32>
    %379 = arith.subf %362, %378 : vector<16x32xf32>
    %cst_161 = arith.constant 9.99999996E-13 : f32
    %380 = vector.broadcast %cst_161 : f32 to vector<16x1xf32>
    %381 = arith.addf %377, %380 : vector<16x1xf32>
    %382 = math.rsqrt %381 : vector<16x1xf32>
    %383 = vector.broadcast %382 : vector<16x1xf32> to vector<16x32xf32>
    %384 = arith.mulf %379, %383 : vector<16x32xf32>
    %385 = vector.broadcast %364 : vector<1x32xf32> to vector<16x32xf32>
    %386 = arith.mulf %384, %385 : vector<16x32xf32>
    %387 = vector.broadcast %366 : vector<1x32xf32> to vector<16x32xf32>
    %388 = arith.addf %386, %387 : vector<16x32xf32>
    %389 = vector.extract_strided_slice %388 {offsets = [0, 0], sizes = [1, 32], strides = [1, 1]} : vector<16x32xf32> to vector<1x32xf32>
    %390 = vector.extract_strided_slice %388 {offsets = [8, 0], sizes = [1, 32], strides = [1, 1]} : vector<16x32xf32> to vector<1x32xf32>
    %391 = tpu.concatenate %389, %390 in 0 : vector<1x32xf32>, vector<1x32xf32> -> vector<2x32xf32>
    %c0_162 = arith.constant 0 : index
    %c0_163 = arith.constant 0 : index
    %392 = vector.load %arg15[%c0_162, %c0_163] : memref<32x32xf32, #tpu.memory_space<vmem>>, vector<32x32xf32>
    %cst_164 = arith.constant dense<0.000000e+00> : vector<2x32xf32>
    %393 = tpu.matmul %391, %392, %cst_164 {dimension_numbers = #tpu.dot_dimension_numbers<[1], [0], [0], [1], [0, 0, 1, 1], [], []>} : vector<2x32xf32>, vector<32x32xf32>, vector<2x32xf32> -> vector<2x32xf32>
    %c0_165 = arith.constant 0 : index
    %c0_166 = arith.constant 0 : index
    %394 = vector.load %arg16[%c0_165, %c0_166] : memref<1x32xf32, #tpu.memory_space<vmem>>, vector<1x32xf32>
    %395 = vector.broadcast %394 : vector<1x32xf32> to vector<2x32xf32>
    %396 = arith.addf %393, %395 : vector<2x32xf32>
    %397 = math.tanh %396 : vector<2x32xf32>
    %c0_167 = arith.constant 0 : index
    %c0_168 = arith.constant 0 : index
    %398 = vector.load %arg17[%c0_167, %c0_168] : memref<2x32xf32, #tpu.memory_space<vmem>>, vector<2x32xf32>
    tpu.vector_store %arg17[%c0_167, %c0_168], %397 {strides = array<i32>} : memref<2x32xf32, #tpu.memory_space<vmem>>, vector<2x32xf32>,
    return
  }
}

</mosaic_0001>

<llo_original>
// kernel: tpu_custom_call.1
$region0: #{tpu_custom_call.1}
  #allocation0 [shape = 'u32[]', space=smem, size = 0x4, offset = 0x4, fixed_abs, tag = 'smem constant byte address 0x4 - core index']
  #allocation1 [shape = 'u32[144,128]{1,0:T(1,128)}', space=vmem, size = 0x12000, scoped, tag = 'internal scratch']
  %s0 = inlined_call_operand.hbm [shape: f32[16,32], index: 0, kind: input, shape index: {}]
  %s1 = inlined_call_operand.hbm [shape: f32[1,32], index: 1, kind: input, shape index: {}]
  %s2 = inlined_call_operand.hbm [shape: f32[1,32], index: 2, kind: input, shape index: {}]
  %s3 = inlined_call_operand.vmem [shape: f32[2,32,96], index: 3, kind: input, shape index: {}]
  %s4 = inlined_call_operand.vmem [shape: f32[2,1,96], index: 4, kind: input, shape index: {}]
  %s5 = inlined_call_operand.vmem [shape: f32[2,32,32], index: 5, kind: input, shape index: {}]
  %s6 = inlined_call_operand.vmem [shape: f32[2,1,32], index: 6, kind: input, shape index: {}]
  %s7 = inlined_call_operand.vmem [shape: f32[2,1,32], index: 7, kind: input, shape index: {}]
  %s8 = inlined_call_operand.vmem [shape: f32[2,1,32], index: 8, kind: input, shape index: {}]
  %s9 = inlined_call_operand.vmem [shape: f32[2,32,64], index: 9, kind: input, shape index: {}]
  %s10 = inlined_call_operand.vmem [shape: f32[2,1,64], index: 10, kind: input, shape index: {}]
  %s11 = inlined_call_operand.vmem [shape: f32[2,64,32], index: 11, kind: input, shape index: {}]
  %s12 = inlined_call_operand.vmem [shape: f32[2,1,32], index: 12, kind: input, shape index: {}]
  %s13 = inlined_call_operand.vmem [shape: f32[2,1,32], index: 13, kind: input, shape index: {}]
  %s14 = inlined_call_operand.vmem [shape: f32[2,1,32], index: 14, kind: input, shape index: {}]
  %s15 = inlined_call_operand.hbm [shape: f32[32,32], index: 15, kind: input, shape index: {}]
  %s16 = inlined_call_operand.vmem [shape: f32[1,32], index: 16, kind: input, shape index: {}]
  %s17 = inlined_call_operand.hbm [shape: f32[2,32], index: 17, kind: output, shape index: {}]
  %s18 = sld [smem:[#allocation0]]
  $region94: #{tpu_custom_call.1} parent=0
    _
  %s20 = ssub.s32 1, %s18
  %s21 = scalar_select 0, %s20, %s18
  $region1: #{tpu_custom_call.1} parent=0
    #allocation2 [shape = 'u8[8192]{0}', space=vmem, size = 0x2000, scoped, tag = 'input window, operand 0, single buffered']
    #allocation3 [shape = 's32[1]{0}', space=sflag, size = 0x4, scoped, tag = 'scoped memory for tpu_custom_call.1']
    #allocation4 [shape = 's32[1]{0}', space=sflag, size = 0x4, scoped, tag = 'scoped memory for tpu_custom_call.1']
    #allocation5 [shape = 'u8[512]{0}', space=vmem, size = 0x400, scoped, tag = 'input window, operand 1, single buffered']
    #allocation6 [shape = 's32[1]{0}', space=sflag, size = 0x4, scoped, tag = 'scoped memory for tpu_custom_call.1']
    #allocation7 [shape = 'u8[512]{0}', space=vmem, size = 0x400, scoped, tag = 'input window, operand 2, single buffered']
    #allocation8 [shape = 'u8[16384]{0}', space=vmem, size = 0x4000, scoped, tag = 'input window, operand 15, single buffered']
    #allocation9 [shape = 's32[1]{0}', space=sflag, size = 0x4, scoped, tag = 'scoped memory for tpu_custom_call.1']
    #allocation10 [shape = 'u8[1024]{0}', space=vmem, size = 0x400, scoped, tag = 'output window, operand 0, single buffered']
    %22 = vsyncpa [#allocation3], 0
    %23 = vsyncpa [#allocation6], 0
    %24 = vsyncpa [#allocation9], 0
    %25 = vsyncpa [#allocation4], 0
    // Predicated region
    $region2: #{tpu_custom_call.1} parent=1 // pred_check
      _
    $region3: #{tpu_custom_call.1} parent=1 // pred_check_branch
      %27 = sbr.rel (0) target = $region5
    $region4: #{tpu_custom_call.1} parent=1 // pred_region
      %s29 = ssub.s32 256, 256
      %30 = vsyncadd [#allocation3], %s29
      %s31 = sshll.u32 [#allocation2], 4
      %s32 = int_to_ptr.vmem [resolvable:$true] %s31
      %37 = dma.hbm_to_vmem [thread:$0]  %s0, 256, %s32, [#allocation3], 128, 128, 8
    $region5: #{tpu_custom_call.1} parent=1 // pred_fallthru
      _
    // Predicated region
    $region6: #{tpu_custom_call.1} parent=1 // pred_check
      _
    $region7: #{tpu_custom_call.1} parent=1 // pred_check_branch
      %39 = sbr.rel (0) target = $region9
    $region8: #{tpu_custom_call.1} parent=1 // pred_region
      %s41 = ssub.s32 16, 16
      %42 = vsyncadd [#allocation6], %s41
      %s44 = sshll.u32 [#allocation5], 4
      %s45 = int_to_ptr.vmem [resolvable:$true] %s44
      %47 = dma.hbm_to_vmem [thread:$0]  %s1, 16, %s45, [#allocation6]
    $region9: #{tpu_custom_call.1} parent=1 // pred_fallthru
      _
    // Predicated region
    $region10: #{tpu_custom_call.1} parent=1 // pred_check
      _
    $region11: #{tpu_custom_call.1} parent=1 // pred_check_branch
      %49 = sbr.rel (0) target = $region13
    $region12: #{tpu_custom_call.1} parent=1 // pred_region
      %s51 = ssub.s32 16, 16
      %52 = vsyncadd [#allocation6], %s51
      %s54 = sshll.u32 [#allocation7], 4
      %s55 = int_to_ptr.vmem [resolvable:$true] %s54
      %57 = dma.hbm_to_vmem [thread:$0]  %s2, 16, %s55, [#allocation6]
    $region13: #{tpu_custom_call.1} parent=1 // pred_fallthru
      _
    // Predicated region
    $region14: #{tpu_custom_call.1} parent=1 // pred_check
      _
    $region15: #{tpu_custom_call.1} parent=1 // pred_check_branch
      %59 = sbr.rel (0) target = $region17
    $region16: #{tpu_custom_call.1} parent=1 // pred_region
      _
    $region17: #{tpu_custom_call.1} parent=1 // pred_fallthru
      _
    // Predicated region
    $region18: #{tpu_custom_call.1} parent=1 // pred_check
      _
    $region19: #{tpu_custom_call.1} parent=1 // pred_check_branch
      %61 = sbr.rel (0) target = $region21
    $region20: #{tpu_custom_call.1} parent=1 // pred_region
      _
    $region21: #{tpu_custom_call.1} parent=1 // pred_fallthru
      _
    // Predicated region
    $region22: #{tpu_custom_call.1} parent=1 // pred_check
      _
    $region23: #{tpu_custom_call.1} parent=1 // pred_check_branch
      %63 = sbr.rel (0) target = $region25
    $region24: #{tpu_custom_call.1} parent=1 // pred_region
      _
    $region25: #{tpu_custom_call.1} parent=1 // pred_fallthru
      _
    // Predicated region
    $region26: #{tpu_custom_call.1} parent=1 // pred_check
      _
    $region27: #{tpu_custom_call.1} parent=1 // pred_check_branch
      %65 = sbr.rel (0) target = $region29
    $region28: #{tpu_custom_call.1} parent=1 // pred_region
      _
    $region29: #{tpu_custom_call.1} parent=1 // pred_fallthru
      _
    // Predicated region
    $region30: #{tpu_custom_call.1} parent=1 // pred_check
      _
    $region31: #{tpu_custom_call.1} parent=1 // pred_check_branch
      %67 = sbr.rel (0) target = $region33
    $region32: #{tpu_custom_call.1} parent=1 // pred_region
      _
    $region33: #{tpu_custom_call.1} parent=1 // pred_fallthru
      _
    // Predicated region
    $region34: #{tpu_custom_call.1} parent=1 // pred_check
      _
    $region35: #{tpu_custom_call.1} parent=1 // pred_check_branch
      %69 = sbr.rel (0) target = $region37
    $region36: #{tpu_custom_call.1} parent=1 // pred_region
      _
    $region37: #{tpu_custom_call.1} parent=1 // pred_fallthru
      _
    // Predicated region
    $region38: #{tpu_custom_call.1} parent=1 // pred_check
      _
    $region39: #{tpu_custom_call.1} parent=1 // pred_check_branch
      %71 = sbr.rel (0) target = $region41
    $region40: #{tpu_custom_call.1} parent=1 // pred_region
      _
    $region41: #{tpu_custom_call.1} parent=1 // pred_fallthru
      _
    // Predicated region
    $region42: #{tpu_custom_call.1} parent=1 // pred_check
      _
    $region43: #{tpu_custom_call.1} parent=1 // pred_check_branch
      %73 = sbr.rel (0) target = $region45
    $region44: #{tpu_custom_call.1} parent=1 // pred_region
      _
    $region45: #{tpu_custom_call.1} parent=1 // pred_fallthru
      _
    // Predicated region
    $region46: #{tpu_custom_call.1} parent=1 // pred_check
      _
    $region47: #{tpu_custom_call.1} parent=1 // pred_check_branch
      %75 = sbr.rel (0) target = $region49
    $region48: #{tpu_custom_call.1} parent=1 // pred_region
      _
    $region49: #{tpu_custom_call.1} parent=1 // pred_fallthru
      _
    // Predicated region
    $region50: #{tpu_custom_call.1} parent=1 // pred_check
      _
    $region51: #{tpu_custom_call.1} parent=1 // pred_check_branch
      %77 = sbr.rel (0) target = $region53
    $region52: #{tpu_custom_call.1} parent=1 // pred_region
      _
    $region53: #{tpu_custom_call.1} parent=1 // pred_fallthru
      _
    // Predicated region
    $region54: #{tpu_custom_call.1} parent=1 // pred_check
      _
    $region55: #{tpu_custom_call.1} parent=1 // pred_check_branch
      %79 = sbr.rel (0) target = $region57
    $region56: #{tpu_custom_call.1} parent=1 // pred_region
      _
    $region57: #{tpu_custom_call.1} parent=1 // pred_fallthru
      _
    // Predicated region
    $region58: #{tpu_custom_call.1} parent=1 // pred_check
      _
    $region59: #{tpu_custom_call.1} parent=1 // pred_check_branch
      %81 = sbr.rel (0) target = $region61
    $region60: #{tpu_custom_call.1} parent=1 // pred_region
      _
    $region61: #{tpu_custom_call.1} parent=1 // pred_fallthru
      _
    // Predicated region
    $region62: #{tpu_custom_call.1} parent=1 // pred_check
      _
    $region63: #{tpu_custom_call.1} parent=1 // pred_check_branch
      %83 = sbr.rel (0) target = $region65
    $region64: #{tpu_custom_call.1} parent=1 // pred_region
      %s85 = ssub.s32 512, 512
      %86 = vsyncadd [#allocation9], %s85
      %s87 = sshll.u32 [#allocation8], 4
      %s88 = int_to_ptr.vmem [resolvable:$true] %s87
      %93 = dma.hbm_to_vmem [thread:$0]  %s15, 512, %s88, [#allocation9], 128, 128, 8
    $region65: #{tpu_custom_call.1} parent=1 // pred_fallthru
      _
    // Predicated region
    $region66: #{tpu_custom_call.1} parent=1 // pred_check
      _
    $region67: #{tpu_custom_call.1} parent=1 // pred_check_branch
      %95 = sbr.rel (0) target = $region69
    $region68: #{tpu_custom_call.1} parent=1 // pred_region
      _
    $region69: #{tpu_custom_call.1} parent=1 // pred_fallthru
      _
    // Predicated region
    $region70: #{tpu_custom_call.1} parent=1 // pred_check
      _
    $region71: #{tpu_custom_call.1} parent=1 // pred_check_branch
      %97 = sbr.rel (0) target = $region73
    $region72: #{tpu_custom_call.1} parent=1 // pred_region
      %98 = dma.done [#allocation3], 256
    $region73: #{tpu_custom_call.1} parent=1 // pred_fallthru
      _
    // Predicated region
    $region74: #{tpu_custom_call.1} parent=1 // pred_check
      _
    $region75: #{tpu_custom_call.1} parent=1 // pred_check_branch
      %100 = sbr.rel (0) target = $region77
    $region76: #{tpu_custom_call.1} parent=1 // pred_region
      %101 = dma.done [#allocation6], 16
    $region77: #{tpu_custom_call.1} parent=1 // pred_fallthru
      _
    // Predicated region
    $region78: #{tpu_custom_call.1} parent=1 // pred_check
      _
    $region79: #{tpu_custom_call.1} parent=1 // pred_check_branch
      %103 = sbr.rel (0) target = $region81
    $region80: #{tpu_custom_call.1} parent=1 // pred_region
      %104 = dma.done [#allocation6], 16
    $region81: #{tpu_custom_call.1} parent=1 // pred_fallthru
      _
    // Predicated region
    $region82: #{tpu_custom_call.1} parent=1 // pred_check
      _
    $region83: #{tpu_custom_call.1} parent=1 // pred_check_branch
      %106 = sbr.rel (0) target = $region85
    $region84: #{tpu_custom_call.1} parent=1 // pred_region
      %107 = dma.done [#allocation9], 512
    $region85: #{tpu_custom_call.1} parent=1 // pred_fallthru
      _
    %v108 = vld [vmem:[#allocation2] sm:$0xff]
    %v109 = vld [vmem:[#allocation2 + $0x8] sm:$0xff]
    %v110 = vld [vmem:[#allocation5] sm:$0x1]
    %v111 = vld [vmem:[#allocation7] sm:$0x1]
    %vm112 = vcmask 261120
    %v113 = vsel %vm112, %v108, 0.0
    %114 = vadd.xlane.f32.xlu0 %v113
    %v115 = vpop.xlane.xlu0 %114
    %v116 = vsel %vm112, %v109, 0.0
    %117 = vadd.xlane.f32.xlu0 %v116
    %v118 = vpop.xlane.xlu0 %117
    %v119 = vrcp.pop 32.0
    %v120 = vmul.f32 %v115, %v119
    %v121 = vmul.f32 %v118, %v119
    %v122 = vsub.f32 %v108, %v120
    %v123 = vsub.f32 %v109, %v121
    %v124 = vmul.f32 %v122, %v122
    %v125 = vmul.f32 %v123, %v123
    %v126 = vsel %vm112, %v124, 0.0
    %127 = vadd.xlane.f32.xlu0 %v126
    %v128 = vpop.xlane.xlu0 %127
    %v129 = vsel %vm112, %v125, 0.0
    %130 = vadd.xlane.f32.xlu0 %v129
    %v131 = vpop.xlane.xlu0 %130
    %v132 = vmul.f32 %v128, %v119
    %v133 = vmul.f32 %v131, %v119
    %v134 = vadd.f32 %v132, 1e-12
    %v135 = vadd.f32 %v133, 1e-12
    %v136 = vrsqrt.pop %v134
    %v137 = vrsqrt.pop %v135
    %v138 = vmul.f32 %v122, %v136
    %v139 = vmul.f32 %v123, %v137
    %v141 = vlaneseq
    %v142 = vshrl.u32 %v141, 7
    %v143 = vsub.s32 0, %v142
    %v144 = vrot.slane %v110, %v143
    %v146 = vmul.f32 %v138, %v144
    %v147 = vmul.f32 %v139, %v144
    %v149 = vlaneseq
    %v150 = vshrl.u32 %v149, 7
    %v151 = vsub.s32 0, %v150
    %v152 = vrot.slane %v111, %v151
    %v154 = vadd.f32 %v146, %v152
    %v155 = vadd.f32 %v147, %v152
    %v156 = vld [vmem:[%s3] sm:$0xff]
    %v157 = vld [vmem:[%s3 + $0x8] sm:$0xff]
    %v158 = vld [vmem:[%s3 + $0x10] sm:$0xff]
    %v159 = vld [vmem:[%s3 + $0x18] sm:$0xff]
    %v160 = vld [vmem:[%s4] sm:$0x1]
    %v162 = vlaneseq
    %v163 = vshrl.u32 %v162, 7
    %v164 = vsub.s32 0, %v163
    %v165 = vrot.slane %v160, %v164
    %v168 = vsel %vm112, %v154, 0
    %v171 = vsel %vm112, %v155, 0
    %173 = vmatprep.subr.mxu0 0.0
    %174 = vmatpush1.msra.mxu0 0.0
    %175 = vmatprep.subr.mxu0 0.0
    %176 = vmatpush1.msra.mxu0 0.0
    %177 = vmatprep.subr.mxu0 0.0
    %178 = vmatpush1.msra.mxu0 0.0
    %179 = vmatprep.subr.mxu0 0.0
    %180 = vmatpush1.msra.mxu0 0.0
    %181 = vmatprep.subr.mxu0 0.0
    %182 = vmatpush1.msra.mxu0 0.0
    %183 = vmatprep.subr.mxu0 0.0
    %184 = vmatpush1.msra.mxu0 0.0
    %185 = vmatprep.subr.mxu0 0.0
    %186 = vmatpush1.msra.mxu0 0.0
    %187 = vmatprep.subr.mxu0 0.0
    %188 = vmatpush1.msra.mxu0 0.0
    %189 = vmatprep.subr.mxu0 0.0
    %190 = vmatpush1.msra.mxu0 0.0
    %191 = vmatprep.subr.mxu0 0.0
    %192 = vmatpush1.msra.mxu0 0.0
    %193 = vmatprep.subr.mxu0 0.0
    %194 = vmatpush1.msra.mxu0 0.0
    %195 = vmatprep.subr.mxu0 0.0
    %196 = vmatpush1.msra.mxu0 0.0
    %197 = vmatprep.subr.mxu0 0.0
    %198 = vmatpush1.msra.mxu0 %v159
    %199 = vmatprep.subr.mxu0 0.0
    %200 = vmatpush1.msra.mxu0 %v158
    %201 = vmatprep.subr.mxu0 0.0
    %202 = vmatpush1.msra.mxu0 %v157
    %203 = vmatprep.subr.mxu0 0.0
    %204 = vmatpush1.msra.mxu0 %v156
    %205 = vmatprep.subr.mxu0 0.0
    %206 = vmatpush2.msra.mxu0 0.0
    %207 = vmatprep.subr.mxu0 0.0
    %208 = vmatpush2.msra.mxu0 0.0
    %209 = vmatprep.subr.mxu0 0.0
    %210 = vmatpush2.msra.mxu0 0.0
    %211 = vmatprep.subr.mxu0 0.0
    %212 = vmatpush2.msra.mxu0 0.0
    %213 = vmatprep.subr.mxu0 0.0
    %214 = vmatpush2.msra.mxu0 0.0
    %215 = vmatprep.subr.mxu0 0.0
    %216 = vmatpush2.msra.mxu0 0.0
    %217 = vmatprep.subr.mxu0 0.0
    %218 = vmatpush2.msra.mxu0 0.0
    %219 = vmatprep.subr.mxu0 0.0
    %220 = vmatpush2.msra.mxu0 0.0
    %221 = vmatprep.subr.mxu0 0.0
    %222 = vmatpush2.msra.mxu0 0.0
    %223 = vmatprep.subr.mxu0 0.0
    %224 = vmatpush2.msra.mxu0 0.0
    %225 = vmatprep.subr.mxu0 0.0
    %226 = vmatpush2.msra.mxu0 0.0
    %227 = vmatprep.subr.mxu0 0.0
    %228 = vmatpush2.msra.mxu0 0.0
    %229 = vmatprep.subr.mxu0 0.0
    %230 = vmatpush2.msra.mxu0 0.0
    %231 = vmatprep.subr.mxu0 0.0
    %232 = vmatpush2.msra.mxu0 0.0
    %233 = vmatprep.subr.mxu0 0.0
    %234 = vmatpush2.msra.mxu0 0.0
    %235 = vmatprep.subr.mxu0 0.0
    %236 = vmatpush2.msra.mxu0 0.0
    %237 = vmatprep.mubr.f32.mxu0 0.0
    %238 = vmatmul.mubr.f32.gmra.mxu0 %v168
    %v239 = vpop.f32.mrf.mxu0
    %v240 = vadd.f32 %v165, %v239
    %v241 = vpop.f32.mrf.mxu0
    %242 = vmatprep.mubr.f32.mxu0 0.0
    %243 = vmatmul.mubr.f32.gmra.mxu0 %v171
    %v244 = vpop.f32.mrf.mxu0
    %v245 = vadd.f32 %v165, %v244
    %v246 = vpop.f32.mrf.mxu0
    %247 = vdwg.mxu0
    %v248 = vld [vmem:[%s5] sm:$0xff]
    %v249 = vld [vmem:[%s5 + $0x8] sm:$0xff]
    %v250 = vld [vmem:[%s5 + $0x10] sm:$0xff]
    %v251 = vld [vmem:[%s5 + $0x18] sm:$0xff]
    %253 = vrot.lane.b32.xlu0 %v240, 96
    %v254 = vpop.permute.xlu0 %253
    %vm255 = vcmask 64512
    %v256 = vsel %vm255, %v240, 0
    %v258 = vsel %vm255, %v254, 0
    %260 = vmatprep.subr.mxu0 0.0
    %261 = vmatpush1.xpose.msra.mxu0 0.0
    %262 = vmatprep.subr.mxu0 0.0
    %263 = vmatpush1.xpose.msra.mxu0 0.0
    %264 = vmatprep.subr.mxu0 0.0
    %265 = vmatpush1.xpose.msra.mxu0 0.0
    %266 = vmatprep.subr.mxu0 0.0
    %267 = vmatpush1.xpose.msra.mxu0 0.0
    %268 = vmatprep.subr.mxu0 0.0
    %269 = vmatpush1.xpose.msra.mxu0 0.0
    %270 = vmatprep.subr.mxu0 0.0
    %271 = vmatpush1.xpose.msra.mxu0 0.0
    %272 = vmatprep.subr.mxu0 0.0
    %273 = vmatpush1.xpose.msra.mxu0 0.0
    %274 = vmatprep.subr.mxu0 0.0
    %275 = vmatpush1.xpose.msra.mxu0 0.0
    %276 = vmatprep.subr.mxu0 0.0
    %277 = vmatpush1.xpose.msra.mxu0 0.0
    %278 = vmatprep.subr.mxu0 0.0
    %279 = vmatpush1.xpose.msra.mxu0 0.0
    %280 = vmatprep.subr.mxu0 0.0
    %281 = vmatpush1.xpose.msra.mxu0 0.0
    %282 = vmatprep.subr.mxu0 0.0
    %283 = vmatpush1.xpose.msra.mxu0 0.0
    %284 = vmatprep.subr.mxu0 0.0
    %285 = vmatpush1.xpose.msra.mxu0 0.0
    %286 = vmatprep.subr.mxu0 0.0
    %287 = vmatpush1.xpose.msra.mxu0 0.0
    %288 = vmatprep.subr.mxu0 0.0
    %289 = vmatpush1.xpose.msra.mxu0 0.0
    %290 = vmatprep.subr.mxu0 0.0
    %291 = vmatpush1.xpose.msra.mxu0 %v258
    %292 = vmatprep.subr.mxu0 0.0
    %293 = vmatpush2.xpose.msra.mxu0 0.0
    %294 = vmatprep.subr.mxu0 0.0
    %295 = vmatpush2.xpose.msra.mxu0 0.0
    %296 = vmatprep.subr.mxu0 0.0
    %297 = vmatpush2.xpose.msra.mxu0 0.0
    %298 = vmatprep.subr.mxu0 0.0
    %299 = vmatpush2.xpose.msra.mxu0 0.0
    %300 = vmatprep.subr.mxu0 0.0
    %301 = vmatpush2.xpose.msra.mxu0 0.0
    %302 = vmatprep.subr.mxu0 0.0
    %303 = vmatpush2.xpose.msra.mxu0 0.0
    %304 = vmatprep.subr.mxu0 0.0
    %305 = vmatpush2.xpose.msra.mxu0 0.0
    %306 = vmatprep.subr.mxu0 0.0
    %307 = vmatpush2.xpose.msra.mxu0 0.0
    %308 = vmatprep.subr.mxu0 0.0
    %309 = vmatpush2.xpose.msra.mxu0 0.0
    %310 = vmatprep.subr.mxu0 0.0
    %311 = vmatpush2.xpose.msra.mxu0 0.0
    %312 = vmatprep.subr.mxu0 0.0
    %313 = vmatpush2.xpose.msra.mxu0 0.0
    %314 = vmatprep.subr.mxu0 0.0
    %315 = vmatpush2.xpose.msra.mxu0 0.0
    %316 = vmatprep.subr.mxu0 0.0
    %317 = vmatpush2.xpose.msra.mxu0 0.0
    %318 = vmatprep.subr.mxu0 0.0
    %319 = vmatpush2.xpose.msra.mxu0 0.0
    %320 = vmatprep.subr.mxu0 0.0
    %321 = vmatpush2.xpose.msra.mxu0 0.0
    %322 = vmatprep.subr.mxu0 0.0
    %323 = vmatpush2.xpose.msra.mxu0 0.0
    %324 = vmatprep.mubr.f32.mxu0 0.0
    %325 = vmatmul.mubr.f32.gmra.mxu0 %v256
    %v326 = vpop.f32.mrf.mxu0
    %v327 = vadd.f32 0.0, %v326
    %v328 = vpop.f32.mrf.mxu0
    %329 = vdwg.mxu0
    %331 = vrot.lane.b32.xlu0 %v245, 96
    %v332 = vpop.permute.xlu0 %331
    %v333 = vsel %vm255, %v245, 0
    %v335 = vsel %vm255, %v332, 0
    %337 = vmatprep.subr.mxu0 0.0
    %338 = vmatpush1.xpose.msra.mxu0 0.0
    %339 = vmatprep.subr.mxu0 0.0
    %340 = vmatpush1.xpose.msra.mxu0 0.0
    %341 = vmatprep.subr.mxu0 0.0
    %342 = vmatpush1.xpose.msra.mxu0 0.0
    %343 = vmatprep.subr.mxu0 0.0
    %344 = vmatpush1.xpose.msra.mxu0 0.0
    %345 = vmatprep.subr.mxu0 0.0
    %346 = vmatpush1.xpose.msra.mxu0 0.0
    %347 = vmatprep.subr.mxu0 0.0
    %348 = vmatpush1.xpose.msra.mxu0 0.0
    %349 = vmatprep.subr.mxu0 0.0
    %350 = vmatpush1.xpose.msra.mxu0 0.0
    %351 = vmatprep.subr.mxu0 0.0
    %352 = vmatpush1.xpose.msra.mxu0 0.0
    %353 = vmatprep.subr.mxu0 0.0
    %354 = vmatpush1.xpose.msra.mxu0 0.0
    %355 = vmatprep.subr.mxu0 0.0
    %356 = vmatpush1.xpose.msra.mxu0 0.0
    %357 = vmatprep.subr.mxu0 0.0
    %358 = vmatpush1.xpose.msra.mxu0 0.0
    %359 = vmatprep.subr.mxu0 0.0
    %360 = vmatpush1.xpose.msra.mxu0 0.0
    %361 = vmatprep.subr.mxu0 0.0
    %362 = vmatpush1.xpose.msra.mxu0 0.0
    %363 = vmatprep.subr.mxu0 0.0
    %364 = vmatpush1.xpose.msra.mxu0 0.0
    %365 = vmatprep.subr.mxu0 0.0
    %366 = vmatpush1.xpose.msra.mxu0 0.0
    %367 = vmatprep.subr.mxu0 0.0
    %368 = vmatpush1.xpose.msra.mxu0 %v335
    %369 = vmatprep.subr.mxu0 0.0
    %370 = vmatpush2.xpose.msra.mxu0 0.0
    %371 = vmatprep.subr.mxu0 0.0
    %372 = vmatpush2.xpose.msra.mxu0 0.0
    %373 = vmatprep.subr.mxu0 0.0
    %374 = vmatpush2.xpose.msra.mxu0 0.0
    %375 = vmatprep.subr.mxu0 0.0
    %376 = vmatpush2.xpose.msra.mxu0 0.0
    %377 = vmatprep.subr.mxu0 0.0
    %378 = vmatpush2.xpose.msra.mxu0 0.0
    %379 = vmatprep.subr.mxu0 0.0
    %380 = vmatpush2.xpose.msra.mxu0 0.0
    %381 = vmatprep.subr.mxu0 0.0
    %382 = vmatpush2.xpose.msra.mxu0 0.0
    %383 = vmatprep.subr.mxu0 0.0
    %384 = vmatpush2.xpose.msra.mxu0 0.0
    %385 = vmatprep.subr.mxu0 0.0
    %386 = vmatpush2.xpose.msra.mxu0 0.0
    %387 = vmatprep.subr.mxu0 0.0
    %388 = vmatpush2.xpose.msra.mxu0 0.0
    %389 = vmatprep.subr.mxu0 0.0
    %390 = vmatpush2.xpose.msra.mxu0 0.0
    %391 = vmatprep.subr.mxu0 0.0
    %392 = vmatpush2.xpose.msra.mxu0 0.0
    %393 = vmatprep.subr.mxu0 0.0
    %394 = vmatpush2.xpose.msra.mxu0 0.0
    %395 = vmatprep.subr.mxu0 0.0
    %396 = vmatpush2.xpose.msra.mxu0 0.0
    %397 = vmatprep.subr.mxu0 0.0
    %398 = vmatpush2.xpose.msra.mxu0 0.0
    %399 = vmatprep.subr.mxu0 0.0
    %400 = vmatpush2.xpose.msra.mxu0 0.0
    %401 = vmatprep.mubr.f32.mxu0 0.0
    %402 = vmatmul.mubr.f32.gmra.mxu0 %v333
    %v403 = vpop.f32.mrf.mxu0
    %v404 = vadd.f32 0.0, %v403
    %v405 = vpop.f32.mrf.mxu0
    %406 = vdwg.mxu0
    %v407 = vmul.f32 %v327, 0.35355338
    %v408 = vmul.f32 %v404, 0.35355338
    %v409 = vsel %vm255, %v407, -inf
    %410 = vmax.xlane.f32.xlu0 %v409
    %v411 = vpop.xlane.xlu0 %410
    %v412 = vsel %vm255, %v408, -inf
    %413 = vmax.xlane.f32.xlu0 %v412
    %v414 = vpop.xlane.xlu0 %413
    %v415 = vsub.f32 %v407, %v411
    %v416 = vsub.f32 %v408, %v414
    %v417 = vmul.f32 %v415, 1.442695
    %v418 = vpow.pop %v417
    %v419 = vmul.f32 %v416, 1.442695
    %v420 = vpow.pop %v419
    %v421 = vsel %vm255, %v418, 0.0
    %422 = vadd.xlane.f32.xlu0 %v421
    %v423 = vpop.xlane.xlu0 %422
    %v424 = vsel %vm255, %v420, 0.0
    %425 = vadd.xlane.f32.xlu0 %v424
    %v426 = vpop.xlane.xlu0 %425
    %v427 = vrcp.pop %v423
    %v428 = vmul.f32 %v418, %v427
    %v429 = vrcp.pop %v426
    %v430 = vmul.f32 %v420, %v429
    %431 = vrot.lane.b32.xlu0 %v240, 64
    %v432 = vpop.permute.xlu0 %431
    %v435 = vsel %vm255, %v428, 0
    %437 = vmatprep.subr.mxu0 0.0
    %438 = vmatpush1.msra.mxu0 0.0
    %439 = vmatprep.subr.mxu0 0.0
    %440 = vmatpush1.msra.mxu0 0.0
    %441 = vmatprep.subr.mxu0 0.0
    %442 = vmatpush1.msra.mxu0 0.0
    %443 = vmatprep.subr.mxu0 0.0
    %444 = vmatpush1.msra.mxu0 0.0
    %445 = vmatprep.subr.mxu0 0.0
    %446 = vmatpush1.msra.mxu0 0.0
    %447 = vmatprep.subr.mxu0 0.0
    %448 = vmatpush1.msra.mxu0 0.0
    %449 = vmatprep.subr.mxu0 0.0
    %450 = vmatpush1.msra.mxu0 0.0
    %451 = vmatprep.subr.mxu0 0.0
    %452 = vmatpush1.msra.mxu0 0.0
    %453 = vmatprep.subr.mxu0 0.0
    %454 = vmatpush1.msra.mxu0 0.0
    %455 = vmatprep.subr.mxu0 0.0
    %456 = vmatpush1.msra.mxu0 0.0
    %457 = vmatprep.subr.mxu0 0.0
    %458 = vmatpush1.msra.mxu0 0.0
    %459 = vmatprep.subr.mxu0 0.0
    %460 = vmatpush1.msra.mxu0 0.0
    %461 = vmatprep.subr.mxu0 0.0
    %462 = vmatpush1.msra.mxu0 0.0
    %463 = vmatprep.subr.mxu0 0.0
    %464 = vmatpush1.msra.mxu0 0.0
    %465 = vmatprep.subr.mxu0 0.0
    %466 = vmatpush1.msra.mxu0 0.0
    %467 = vmatprep.subr.mxu0 0.0
    %468 = vmatpush1.msra.mxu0 %v432
    %469 = vmatprep.subr.mxu0 0.0
    %470 = vmatpush2.msra.mxu0 0.0
    %471 = vmatprep.subr.mxu0 0.0
    %472 = vmatpush2.msra.mxu0 0.0
    %473 = vmatprep.subr.mxu0 0.0
    %474 = vmatpush2.msra.mxu0 0.0
    %475 = vmatprep.subr.mxu0 0.0
    %476 = vmatpush2.msra.mxu0 0.0
    %477 = vmatprep.subr.mxu0 0.0
    %478 = vmatpush2.msra.mxu0 0.0
    %479 = vmatprep.subr.mxu0 0.0
    %480 = vmatpush2.msra.mxu0 0.0
    %481 = vmatprep.subr.mxu0 0.0
    %482 = vmatpush2.msra.mxu0 0.0
    %483 = vmatprep.subr.mxu0 0.0
    %484 = vmatpush2.msra.mxu0 0.0
    %485 = vmatprep.subr.mxu0 0.0
    %486 = vmatpush2.msra.mxu0 0.0
    %487 = vmatprep.subr.mxu0 0.0
    %488 = vmatpush2.msra.mxu0 0.0
    %489 = vmatprep.subr.mxu0 0.0
    %490 = vmatpush2.msra.mxu0 0.0
    %491 = vmatprep.subr.mxu0 0.0
    %492 = vmatpush2.msra.mxu0 0.0
    %493 = vmatprep.subr.mxu0 0.0
    %494 = vmatpush2.msra.mxu0 0.0
    %495 = vmatprep.subr.mxu0 0.0
    %496 = vmatpush2.msra.mxu0 0.0
    %497 = vmatprep.subr.mxu0 0.0
    %498 = vmatpush2.msra.mxu0 0.0
    %499 = vmatprep.subr.mxu0 0.0
    %500 = vmatpush2.msra.mxu0 0.0
    %501 = vmatprep.mubr.f32.mxu0 0.0
    %502 = vmatmul.mubr.f32.gmra.mxu0 %v435
    %v503 = vpop.f32.mrf.mxu0
    %v504 = vadd.f32 0.0, %v503
    %v505 = vpop.f32.mrf.mxu0
    %506 = vdwg.mxu0
    %507 = vrot.lane.b32.xlu0 %v245, 64
    %v508 = vpop.permute.xlu0 %507
    %v511 = vsel %vm255, %v430, 0
    %513 = vmatprep.subr.mxu0 0.0
    %514 = vmatpush1.msra.mxu0 0.0
    %515 = vmatprep.subr.mxu0 0.0
    %516 = vmatpush1.msra.mxu0 0.0
    %517 = vmatprep.subr.mxu0 0.0
    %518 = vmatpush1.msra.mxu0 0.0
    %519 = vmatprep.subr.mxu0 0.0
    %520 = vmatpush1.msra.mxu0 0.0
    %521 = vmatprep.subr.mxu0 0.0
    %522 = vmatpush1.msra.mxu0 0.0
    %523 = vmatprep.subr.mxu0 0.0
    %524 = vmatpush1.msra.mxu0 0.0
    %525 = vmatprep.subr.mxu0 0.0
    %526 = vmatpush1.msra.mxu0 0.0
    %527 = vmatprep.subr.mxu0 0.0
    %528 = vmatpush1.msra.mxu0 0.0
    %529 = vmatprep.subr.mxu0 0.0
    %530 = vmatpush1.msra.mxu0 0.0
    %531 = vmatprep.subr.mxu0 0.0
    %532 = vmatpush1.msra.mxu0 0.0
    %533 = vmatprep.subr.mxu0 0.0
    %534 = vmatpush1.msra.mxu0 0.0
    %535 = vmatprep.subr.mxu0 0.0
    %536 = vmatpush1.msra.mxu0 0.0
    %537 = vmatprep.subr.mxu0 0.0
    %538 = vmatpush1.msra.mxu0 0.0
    %539 = vmatprep.subr.mxu0 0.0
    %540 = vmatpush1.msra.mxu0 0.0
    %541 = vmatprep.subr.mxu0 0.0
    %542 = vmatpush1.msra.mxu0 0.0
    %543 = vmatprep.subr.mxu0 0.0
    %544 = vmatpush1.msra.mxu0 %v508
    %545 = vmatprep.subr.mxu0 0.0
    %546 = vmatpush2.msra.mxu0 0.0
    %547 = vmatprep.subr.mxu0 0.0
    %548 = vmatpush2.msra.mxu0 0.0
    %549 = vmatprep.subr.mxu0 0.0
    %550 = vmatpush2.msra.mxu0 0.0
    %551 = vmatprep.subr.mxu0 0.0
    %552 = vmatpush2.msra.mxu0 0.0
    %553 = vmatprep.subr.mxu0 0.0
    %554 = vmatpush2.msra.mxu0 0.0
    %555 = vmatprep.subr.mxu0 0.0
    %556 = vmatpush2.msra.mxu0 0.0
    %557 = vmatprep.subr.mxu0 0.0
    %558 = vmatpush2.msra.mxu0 0.0
    %559 = vmatprep.subr.mxu0 0.0
    %560 = vmatpush2.msra.mxu0 0.0
    %561 = vmatprep.subr.mxu0 0.0
    %562 = vmatpush2.msra.mxu0 0.0
    %563 = vmatprep.subr.mxu0 0.0
    %564 = vmatpush2.msra.mxu0 0.0
    %565 = vmatprep.subr.mxu0 0.0
    %566 = vmatpush2.msra.mxu0 0.0
    %567 = vmatprep.subr.mxu0 0.0
    %568 = vmatpush2.msra.mxu0 0.0
    %569 = vmatprep.subr.mxu0 0.0
    %570 = vmatpush2.msra.mxu0 0.0
    %571 = vmatprep.subr.mxu0 0.0
    %572 = vmatpush2.msra.mxu0 0.0
    %573 = vmatprep.subr.mxu0 0.0
    %574 = vmatpush2.msra.mxu0 0.0
    %575 = vmatprep.subr.mxu0 0.0
    %576 = vmatpush2.msra.mxu0 0.0
    %577 = vmatprep.mubr.f32.mxu0 0.0
    %578 = vmatmul.mubr.f32.gmra.mxu0 %v511
    %v579 = vpop.f32.mrf.mxu0
    %v580 = vadd.f32 0.0, %v579
    %v581 = vpop.f32.mrf.mxu0
    %582 = vdwg.mxu0
    %583 = vrot.lane.b32.xlu0 %v240, 120
    %v584 = vpop.permute.xlu0 %583
    %585 = vrot.lane.b32.xlu0 %v240, 88
    %v586 = vpop.permute.xlu0 %585
    %v587 = vsel %vm255, %v584, 0
    %v589 = vsel %vm255, %v586, 0
    %591 = vmatprep.subr.mxu0 0.0
    %592 = vmatpush1.xpose.msra.mxu0 0.0
    %593 = vmatprep.subr.mxu0 0.0
    %594 = vmatpush1.xpose.msra.mxu0 0.0
    %595 = vmatprep.subr.mxu0 0.0
    %596 = vmatpush1.xpose.msra.mxu0 0.0
    %597 = vmatprep.subr.mxu0 0.0
    %598 = vmatpush1.xpose.msra.mxu0 0.0
    %599 = vmatprep.subr.mxu0 0.0
    %600 = vmatpush1.xpose.msra.mxu0 0.0
    %601 = vmatprep.subr.mxu0 0.0
    %602 = vmatpush1.xpose.msra.mxu0 0.0
    %603 = vmatprep.subr.mxu0 0.0
    %604 = vmatpush1.xpose.msra.mxu0 0.0
    %605 = vmatprep.subr.mxu0 0.0
    %606 = vmatpush1.xpose.msra.mxu0 0.0
    %607 = vmatprep.subr.mxu0 0.0
    %608 = vmatpush1.xpose.msra.mxu0 0.0
    %609 = vmatprep.subr.mxu0 0.0
    %610 = vmatpush1.xpose.msra.mxu0 0.0
    %611 = vmatprep.subr.mxu0 0.0
    %612 = vmatpush1.xpose.msra.mxu0 0.0
    %613 = vmatprep.subr.mxu0 0.0
    %614 = vmatpush1.xpose.msra.mxu0 0.0
    %615 = vmatprep.subr.mxu0 0.0
    %616 = vmatpush1.xpose.msra.mxu0 0.0
    %617 = vmatprep.subr.mxu0 0.0
    %618 = vmatpush1.xpose.msra.mxu0 0.0
    %619 = vmatprep.subr.mxu0 0.0
    %620 = vmatpush1.xpose.msra.mxu0 0.0
    %621 = vmatprep.subr.mxu0 0.0
    %622 = vmatpush1.xpose.msra.mxu0 %v589
    %623 = vmatprep.subr.mxu0 0.0
    %624 = vmatpush2.xpose.msra.mxu0 0.0
    %625 = vmatprep.subr.mxu0 0.0
    %626 = vmatpush2.xpose.msra.mxu0 0.0
    %627 = vmatprep.subr.mxu0 0.0
    %628 = vmatpush2.xpose.msra.mxu0 0.0
    %629 = vmatprep.subr.mxu0 0.0
    %630 = vmatpush2.xpose.msra.mxu0 0.0
    %631 = vmatprep.subr.mxu0 0.0
    %632 = vmatpush2.xpose.msra.mxu0 0.0
    %633 = vmatprep.subr.mxu0 0.0
    %634 = vmatpush2.xpose.msra.mxu0 0.0
    %635 = vmatprep.subr.mxu0 0.0
    %636 = vmatpush2.xpose.msra.mxu0 0.0
    %637 = vmatprep.subr.mxu0 0.0
    %638 = vmatpush2.xpose.msra.mxu0 0.0
    %639 = vmatprep.subr.mxu0 0.0
    %640 = vmatpush2.xpose.msra.mxu0 0.0
    %641 = vmatprep.subr.mxu0 0.0
    %642 = vmatpush2.xpose.msra.mxu0 0.0
    %643 = vmatprep.subr.mxu0 0.0
    %644 = vmatpush2.xpose.msra.mxu0 0.0
    %645 = vmatprep.subr.mxu0 0.0
    %646 = vmatpush2.xpose.msra.mxu0 0.0
    %647 = vmatprep.subr.mxu0 0.0
    %648 = vmatpush2.xpose.msra.mxu0 0.0
    %649 = vmatprep.subr.mxu0 0.0
    %650 = vmatpush2.xpose.msra.mxu0 0.0
    %651 = vmatprep.subr.mxu0 0.0
    %652 = vmatpush2.xpose.msra.mxu0 0.0
    %653 = vmatprep.subr.mxu0 0.0
    %654 = vmatpush2.xpose.msra.mxu0 0.0
    %655 = vmatprep.mubr.f32.mxu0 0.0
    %656 = vmatmul.mubr.f32.gmra.mxu0 %v587
    %v657 = vpop.f32.mrf.mxu0
    %v658 = vadd.f32 0.0, %v657
    %v659 = vpop.f32.mrf.mxu0
    %660 = vdwg.mxu0
    %661 = vrot.lane.b32.xlu0 %v245, 120
    %v662 = vpop.permute.xlu0 %661
    %663 = vrot.lane.b32.xlu0 %v245, 88
    %v664 = vpop.permute.xlu0 %663
    %v665 = vsel %vm255, %v662, 0
    %v667 = vsel %vm255, %v664, 0
    %669 = vmatprep.subr.mxu0 0.0
    %670 = vmatpush1.xpose.msra.mxu0 0.0
    %671 = vmatprep.subr.mxu0 0.0
    %672 = vmatpush1.xpose.msra.mxu0 0.0
    %673 = vmatprep.subr.mxu0 0.0
    %674 = vmatpush1.xpose.msra.mxu0 0.0
    %675 = vmatprep.subr.mxu0 0.0
    %676 = vmatpush1.xpose.msra.mxu0 0.0
    %677 = vmatprep.subr.mxu0 0.0
    %678 = vmatpush1.xpose.msra.mxu0 0.0
    %679 = vmatprep.subr.mxu0 0.0
    %680 = vmatpush1.xpose.msra.mxu0 0.0
    %681 = vmatprep.subr.mxu0 0.0
    %682 = vmatpush1.xpose.msra.mxu0 0.0
    %683 = vmatprep.subr.mxu0 0.0
    %684 = vmatpush1.xpose.msra.mxu0 0.0
    %685 = vmatprep.subr.mxu0 0.0
    %686 = vmatpush1.xpose.msra.mxu0 0.0
    %687 = vmatprep.subr.mxu0 0.0
    %688 = vmatpush1.xpose.msra.mxu0 0.0
    %689 = vmatprep.subr.mxu0 0.0
    %690 = vmatpush1.xpose.msra.mxu0 0.0
    %691 = vmatprep.subr.mxu0 0.0
    %692 = vmatpush1.xpose.msra.mxu0 0.0
    %693 = vmatprep.subr.mxu0 0.0
    %694 = vmatpush1.xpose.msra.mxu0 0.0
    %695 = vmatprep.subr.mxu0 0.0
    %696 = vmatpush1.xpose.msra.mxu0 0.0
    %697 = vmatprep.subr.mxu0 0.0
    %698 = vmatpush1.xpose.msra.mxu0 0.0
    %699 = vmatprep.subr.mxu0 0.0
    %700 = vmatpush1.xpose.msra.mxu0 %v667
    %701 = vmatprep.subr.mxu0 0.0
    %702 = vmatpush2.xpose.msra.mxu0 0.0
    %703 = vmatprep.subr.mxu0 0.0
    %704 = vmatpush2.xpose.msra.mxu0 0.0
    %705 = vmatprep.subr.mxu0 0.0
    %706 = vmatpush2.xpose.msra.mxu0 0.0
    %707 = vmatprep.subr.mxu0 0.0
    %708 = vmatpush2.xpose.msra.mxu0 0.0
    %709 = vmatprep.subr.mxu0 0.0
    %710 = vmatpush2.xpose.msra.mxu0 0.0
    %711 = vmatprep.subr.mxu0 0.0
    %712 = vmatpush2.xpose.msra.mxu0 0.0
    %713 = vmatprep.subr.mxu0 0.0
    %714 = vmatpush2.xpose.msra.mxu0 0.0
    %715 = vmatprep.subr.mxu0 0.0
    %716 = vmatpush2.xpose.msra.mxu0 0.0
    %717 = vmatprep.subr.mxu0 0.0
    %718 = vmatpush2.xpose.msra.mxu0 0.0
    %719 = vmatprep.subr.mxu0 0.0
    %720 = vmatpush2.xpose.msra.mxu0 0.0
    %721 = vmatprep.subr.mxu0 0.0
    %722 = vmatpush2.xpose.msra.mxu0 0.0
    %723 = vmatprep.subr.mxu0 0.0
    %724 = vmatpush2.xpose.msra.mxu0 0.0
    %725 = vmatprep.subr.mxu0 0.0
    %726 = vmatpush2.xpose.msra.mxu0 0.0
    %727 = vmatprep.subr.mxu0 0.0
    %728 = vmatpush2.xpose.msra.mxu0 0.0
    %729 = vmatprep.subr.mxu0 0.0
    %730 = vmatpush2.xpose.msra.mxu0 0.0
    %731 = vmatprep.subr.mxu0 0.0
    %732 = vmatpush2.xpose.msra.mxu0 0.0
    %733 = vmatprep.mubr.f32.mxu0 0.0
    %734 = vmatmul.mubr.f32.gmra.mxu0 %v665
    %v735 = vpop.f32.mrf.mxu0
    %v736 = vadd.f32 0.0, %v735
    %v737 = vpop.f32.mrf.mxu0
    %738 = vdwg.mxu0
    %v739 = vmul.f32 %v658, 0.35355338
    %v740 = vmul.f32 %v736, 0.35355338
    %v741 = vsel %vm255, %v739, -inf
    %742 = vmax.xlane.f32.xlu0 %v741
    %v743 = vpop.xlane.xlu0 %742
    %v744 = vsel %vm255, %v740, -inf
    %745 = vmax.xlane.f32.xlu0 %v744
    %v746 = vpop.xlane.xlu0 %745
    %v747 = vsub.f32 %v739, %v743
    %v748 = vsub.f32 %v740, %v746
    %v749 = vmul.f32 %v747, 1.442695
    %v750 = vpow.pop %v749
    %v751 = vmul.f32 %v748, 1.442695
    %v752 = vpow.pop %v751
    %v753 = vsel %vm255, %v750, 0.0
    %754 = vadd.xlane.f32.xlu0 %v753
    %v755 = vpop.xlane.xlu0 %754
    %v756 = vsel %vm255, %v752, 0.0
    %757 = vadd.xlane.f32.xlu0 %v756
    %v758 = vpop.xlane.xlu0 %757
    %v759 = vrcp.pop %v755
    %v760 = vmul.f32 %v750, %v759
    %v761 = vrcp.pop %v758
    %v762 = vmul.f32 %v752, %v761
    %763 = vrot.lane.b32.xlu0 %v240, 56
    %v764 = vpop.permute.xlu0 %763
    %v767 = vsel %vm255, %v760, 0
    %769 = vmatprep.subr.mxu0 0.0
    %770 = vmatpush1.msra.mxu0 0.0
    %771 = vmatprep.subr.mxu0 0.0
    %772 = vmatpush1.msra.mxu0 0.0
    %773 = vmatprep.subr.mxu0 0.0
    %774 = vmatpush1.msra.mxu0 0.0
    %775 = vmatprep.subr.mxu0 0.0
    %776 = vmatpush1.msra.mxu0 0.0
    %777 = vmatprep.subr.mxu0 0.0
    %778 = vmatpush1.msra.mxu0 0.0
    %779 = vmatprep.subr.mxu0 0.0
    %780 = vmatpush1.msra.mxu0 0.0
    %781 = vmatprep.subr.mxu0 0.0
    %782 = vmatpush1.msra.mxu0 0.0
    %783 = vmatprep.subr.mxu0 0.0
    %784 = vmatpush1.msra.mxu0 0.0
    %785 = vmatprep.subr.mxu0 0.0
    %786 = vmatpush1.msra.mxu0 0.0
    %787 = vmatprep.subr.mxu0 0.0
    %788 = vmatpush1.msra.mxu0 0.0
    %789 = vmatprep.subr.mxu0 0.0
    %790 = vmatpush1.msra.mxu0 0.0
    %791 = vmatprep.subr.mxu0 0.0
    %792 = vmatpush1.msra.mxu0 0.0
    %793 = vmatprep.subr.mxu0 0.0
    %794 = vmatpush1.msra.mxu0 0.0
    %795 = vmatprep.subr.mxu0 0.0
    %796 = vmatpush1.msra.mxu0 0.0
    %797 = vmatprep.subr.mxu0 0.0
    %798 = vmatpush1.msra.mxu0 0.0
    %799 = vmatprep.subr.mxu0 0.0
    %800 = vmatpush1.msra.mxu0 %v764
    %801 = vmatprep.subr.mxu0 0.0
    %802 = vmatpush2.msra.mxu0 0.0
    %803 = vmatprep.subr.mxu0 0.0
    %804 = vmatpush2.msra.mxu0 0.0
    %805 = vmatprep.subr.mxu0 0.0
    %806 = vmatpush2.msra.mxu0 0.0
    %807 = vmatprep.subr.mxu0 0.0
    %808 = vmatpush2.msra.mxu0 0.0
    %809 = vmatprep.subr.mxu0 0.0
    %810 = vmatpush2.msra.mxu0 0.0
    %811 = vmatprep.subr.mxu0 0.0
    %812 = vmatpush2.msra.mxu0 0.0
    %813 = vmatprep.subr.mxu0 0.0
    %814 = vmatpush2.msra.mxu0 0.0
    %815 = vmatprep.subr.mxu0 0.0
    %816 = vmatpush2.msra.mxu0 0.0
    %817 = vmatprep.subr.mxu0 0.0
    %818 = vmatpush2.msra.mxu0 0.0
    %819 = vmatprep.subr.mxu0 0.0
    %820 = vmatpush2.msra.mxu0 0.0
    %821 = vmatprep.subr.mxu0 0.0
    %822 = vmatpush2.msra.mxu0 0.0
    %823 = vmatprep.subr.mxu0 0.0
    %824 = vmatpush2.msra.mxu0 0.0
    %825 = vmatprep.subr.mxu0 0.0
    %826 = vmatpush2.msra.mxu0 0.0
    %827 = vmatprep.subr.mxu0 0.0
    %828 = vmatpush2.msra.mxu0 0.0
    %829 = vmatprep.subr.mxu0 0.0
    %830 = vmatpush2.msra.mxu0 0.0
    %831 = vmatprep.subr.mxu0 0.0
    %832 = vmatpush2.msra.mxu0 0.0
    %833 = vmatprep.mubr.f32.mxu0 0.0
    %834 = vmatmul.mubr.f32.gmra.mxu0 %v767
    %v835 = vpop.f32.mrf.mxu0
    %v836 = vadd.f32 0.0, %v835
    %v837 = vpop.f32.mrf.mxu0
    %838 = vdwg.mxu0
    %839 = vrot.lane.b32.xlu0 %v245, 56
    %v840 = vpop.permute.xlu0 %839
    %v843 = vsel %vm255, %v762, 0
    %845 = vmatprep.subr.mxu0 0.0
    %846 = vmatpush1.msra.mxu0 0.0
    %847 = vmatprep.subr.mxu0 0.0
    %848 = vmatpush1.msra.mxu0 0.0
    %849 = vmatprep.subr.mxu0 0.0
    %850 = vmatpush1.msra.mxu0 0.0
    %851 = vmatprep.subr.mxu0 0.0
    %852 = vmatpush1.msra.mxu0 0.0
    %853 = vmatprep.subr.mxu0 0.0
    %854 = vmatpush1.msra.mxu0 0.0
    %855 = vmatprep.subr.mxu0 0.0
    %856 = vmatpush1.msra.mxu0 0.0
    %857 = vmatprep.subr.mxu0 0.0
    %858 = vmatpush1.msra.mxu0 0.0
    %859 = vmatprep.subr.mxu0 0.0
    %860 = vmatpush1.msra.mxu0 0.0
    %861 = vmatprep.subr.mxu0 0.0
    %862 = vmatpush1.msra.mxu0 0.0
    %863 = vmatprep.subr.mxu0 0.0
    %864 = vmatpush1.msra.mxu0 0.0
    %865 = vmatprep.subr.mxu0 0.0
    %866 = vmatpush1.msra.mxu0 0.0
    %867 = vmatprep.subr.mxu0 0.0
    %868 = vmatpush1.msra.mxu0 0.0
    %869 = vmatprep.subr.mxu0 0.0
    %870 = vmatpush1.msra.mxu0 0.0
    %871 = vmatprep.subr.mxu0 0.0
    %872 = vmatpush1.msra.mxu0 0.0
    %873 = vmatprep.subr.mxu0 0.0
    %874 = vmatpush1.msra.mxu0 0.0
    %875 = vmatprep.subr.mxu0 0.0
    %876 = vmatpush1.msra.mxu0 %v840
    %877 = vmatprep.subr.mxu0 0.0
    %878 = vmatpush2.msra.mxu0 0.0
    %879 = vmatprep.subr.mxu0 0.0
    %880 = vmatpush2.msra.mxu0 0.0
    %881 = vmatprep.subr.mxu0 0.0
    %882 = vmatpush2.msra.mxu0 0.0
    %883 = vmatprep.subr.mxu0 0.0
    %884 = vmatpush2.msra.mxu0 0.0
    %885 = vmatprep.subr.mxu0 0.0
    %886 = vmatpush2.msra.mxu0 0.0
    %887 = vmatprep.subr.mxu0 0.0
    %888 = vmatpush2.msra.mxu0 0.0
    %889 = vmatprep.subr.mxu0 0.0
    %890 = vmatpush2.msra.mxu0 0.0
    %891 = vmatprep.subr.mxu0 0.0
    %892 = vmatpush2.msra.mxu0 0.0
    %893 = vmatprep.subr.mxu0 0.0
    %894 = vmatpush2.msra.mxu0 0.0
    %895 = vmatprep.subr.mxu0 0.0
    %896 = vmatpush2.msra.mxu0 0.0
    %897 = vmatprep.subr.mxu0 0.0
    %898 = vmatpush2.msra.mxu0 0.0
    %899 = vmatprep.subr.mxu0 0.0
    %900 = vmatpush2.msra.mxu0 0.0
    %901 = vmatprep.subr.mxu0 0.0
    %902 = vmatpush2.msra.mxu0 0.0
    %903 = vmatprep.subr.mxu0 0.0
    %904 = vmatpush2.msra.mxu0 0.0
    %905 = vmatprep.subr.mxu0 0.0
    %906 = vmatpush2.msra.mxu0 0.0
    %907 = vmatprep.subr.mxu0 0.0
    %908 = vmatpush2.msra.mxu0 0.0
    %909 = vmatprep.mubr.f32.mxu0 0.0
    %910 = vmatmul.mubr.f32.gmra.mxu0 %v843
    %v911 = vpop.f32.mrf.mxu0
    %v912 = vadd.f32 0.0, %v911
    %v913 = vpop.f32.mrf.mxu0
    %914 = vdwg.mxu0
    %v916 = vsel %vm255, %v836, 0
    %v919 = vsel %vm255, %v912, 0
    %921 = vmatprep.subr.mxu0 0.0
    %922 = vmatpush1.msra.mxu0 0.0
    %923 = vmatprep.subr.mxu0 0.0
    %924 = vmatpush1.msra.mxu0 0.0
    %925 = vmatprep.subr.mxu0 0.0
    %926 = vmatpush1.msra.mxu0 0.0
    %927 = vmatprep.subr.mxu0 0.0
    %928 = vmatpush1.msra.mxu0 0.0
    %929 = vmatprep.subr.mxu0 0.0
    %930 = vmatpush1.msra.mxu0 0.0
    %931 = vmatprep.subr.mxu0 0.0
    %932 = vmatpush1.msra.mxu0 0.0
    %933 = vmatprep.subr.mxu0 0.0
    %934 = vmatpush1.msra.mxu0 0.0
    %935 = vmatprep.subr.mxu0 0.0
    %936 = vmatpush1.msra.mxu0 0.0
    %937 = vmatprep.subr.mxu0 0.0
    %938 = vmatpush1.msra.mxu0 0.0
    %939 = vmatprep.subr.mxu0 0.0
    %940 = vmatpush1.msra.mxu0 0.0
    %941 = vmatprep.subr.mxu0 0.0
    %942 = vmatpush1.msra.mxu0 0.0
    %943 = vmatprep.subr.mxu0 0.0
    %944 = vmatpush1.msra.mxu0 0.0
    %945 = vmatprep.subr.mxu0 0.0
    %946 = vmatpush1.msra.mxu0 0.0
    %947 = vmatprep.subr.mxu0 0.0
    %948 = vmatpush1.msra.mxu0 0.0
    %949 = vmatprep.subr.mxu0 0.0
    %950 = vmatpush1.msra.mxu0 0.0
    %951 = vmatprep.subr.mxu0 0.0
    %952 = vmatpush1.msra.mxu0 %v249
    %953 = vmatprep.subr.mxu0 0.0
    %954 = vmatpush2.msra.mxu0 0.0
    %955 = vmatprep.subr.mxu0 0.0
    %956 = vmatpush2.msra.mxu0 0.0
    %957 = vmatprep.subr.mxu0 0.0
    %958 = vmatpush2.msra.mxu0 0.0
    %959 = vmatprep.subr.mxu0 0.0
    %960 = vmatpush2.msra.mxu0 0.0
    %961 = vmatprep.subr.mxu0 0.0
    %962 = vmatpush2.msra.mxu0 0.0
    %963 = vmatprep.subr.mxu0 0.0
    %964 = vmatpush2.msra.mxu0 0.0
    %965 = vmatprep.subr.mxu0 0.0
    %966 = vmatpush2.msra.mxu0 0.0
    %967 = vmatprep.subr.mxu0 0.0
    %968 = vmatpush2.msra.mxu0 0.0
    %969 = vmatprep.subr.mxu0 0.0
    %970 = vmatpush2.msra.mxu0 0.0
    %971 = vmatprep.subr.mxu0 0.0
    %972 = vmatpush2.msra.mxu0 0.0
    %973 = vmatprep.subr.mxu0 0.0
    %974 = vmatpush2.msra.mxu0 0.0
    %975 = vmatprep.subr.mxu0 0.0
    %976 = vmatpush2.msra.mxu0 0.0
    %977 = vmatprep.subr.mxu0 0.0
    %978 = vmatpush2.msra.mxu0 0.0
    %979 = vmatprep.subr.mxu0 0.0
    %980 = vmatpush2.msra.mxu0 0.0
    %981 = vmatprep.subr.mxu0 0.0
    %982 = vmatpush2.msra.mxu0 0.0
    %983 = vmatprep.subr.mxu0 0.0
    %984 = vmatpush2.msra.mxu0 0.0
    %985 = vmatprep.mubr.f32.mxu0 0.0
    %986 = vmatmul.mubr.f32.gmra.mxu0 %v916
    %v987 = vpop.f32.mrf.mxu0
    %v988 = vadd.f32 0.0, %v987
    %v989 = vpop.f32.mrf.mxu0
    %990 = vmatprep.mubr.f32.mxu0 0.0
    %991 = vmatmul.mubr.f32.gmra.mxu0 %v919
    %v992 = vpop.f32.mrf.mxu0
    %v993 = vadd.f32 0.0, %v992
    %v994 = vpop.f32.mrf.mxu0
    %995 = vdwg.mxu0
    %v997 = vsel %vm255, %v504, 0
    %v1000 = vsel %vm255, %v580, 0
    %1002 = vmatprep.subr.mxu0 0.0
    %1003 = vmatpush1.msra.mxu0 0.0
    %1004 = vmatprep.subr.mxu0 0.0
    %1005 = vmatpush1.msra.mxu0 0.0
    %1006 = vmatprep.subr.mxu0 0.0
    %1007 = vmatpush1.msra.mxu0 0.0
    %1008 = vmatprep.subr.mxu0 0.0
    %1009 = vmatpush1.msra.mxu0 0.0
    %1010 = vmatprep.subr.mxu0 0.0
    %1011 = vmatpush1.msra.mxu0 0.0
    %1012 = vmatprep.subr.mxu0 0.0
    %1013 = vmatpush1.msra.mxu0 0.0
    %1014 = vmatprep.subr.mxu0 0.0
    %1015 = vmatpush1.msra.mxu0 0.0
    %1016 = vmatprep.subr.mxu0 0.0
    %1017 = vmatpush1.msra.mxu0 0.0
    %1018 = vmatprep.subr.mxu0 0.0
    %1019 = vmatpush1.msra.mxu0 0.0
    %1020 = vmatprep.subr.mxu0 0.0
    %1021 = vmatpush1.msra.mxu0 0.0
    %1022 = vmatprep.subr.mxu0 0.0
    %1023 = vmatpush1.msra.mxu0 0.0
    %1024 = vmatprep.subr.mxu0 0.0
    %1025 = vmatpush1.msra.mxu0 0.0
    %1026 = vmatprep.subr.mxu0 0.0
    %1027 = vmatpush1.msra.mxu0 0.0
    %1028 = vmatprep.subr.mxu0 0.0
    %1029 = vmatpush1.msra.mxu0 0.0
    %1030 = vmatprep.subr.mxu0 0.0
    %1031 = vmatpush1.msra.mxu0 0.0
    %1032 = vmatprep.subr.mxu0 0.0
    %1033 = vmatpush1.msra.mxu0 %v248
    %1034 = vmatprep.subr.mxu0 0.0
    %1035 = vmatpush2.msra.mxu0 0.0
    %1036 = vmatprep.subr.mxu0 0.0
    %1037 = vmatpush2.msra.mxu0 0.0
    %1038 = vmatprep.subr.mxu0 0.0
    %1039 = vmatpush2.msra.mxu0 0.0
    %1040 = vmatprep.subr.mxu0 0.0
    %1041 = vmatpush2.msra.mxu0 0.0
    %1042 = vmatprep.subr.mxu0 0.0
    %1043 = vmatpush2.msra.mxu0 0.0
    %1044 = vmatprep.subr.mxu0 0.0
    %1045 = vmatpush2.msra.mxu0 0.0
    %1046 = vmatprep.subr.mxu0 0.0
    %1047 = vmatpush2.msra.mxu0 0.0
    %1048 = vmatprep.subr.mxu0 0.0
    %1049 = vmatpush2.msra.mxu0 0.0
    %1050 = vmatprep.subr.mxu0 0.0
    %1051 = vmatpush2.msra.mxu0 0.0
    %1052 = vmatprep.subr.mxu0 0.0
    %1053 = vmatpush2.msra.mxu0 0.0
    %1054 = vmatprep.subr.mxu0 0.0
    %1055 = vmatpush2.msra.mxu0 0.0
    %1056 = vmatprep.subr.mxu0 0.0
    %1057 = vmatpush2.msra.mxu0 0.0
    %1058 = vmatprep.subr.mxu0 0.0
    %1059 = vmatpush2.msra.mxu0 0.0
    %1060 = vmatprep.subr.mxu0 0.0
    %1061 = vmatpush2.msra.mxu0 0.0
    %1062 = vmatprep.subr.mxu0 0.0
    %1063 = vmatpush2.msra.mxu0 0.0
    %1064 = vmatprep.subr.mxu0 0.0
    %1065 = vmatpush2.msra.mxu0 0.0
    %1066 = vmatprep.mubr.f32.mxu0 0.0
    %1067 = vmatmul.mubr.f32.gmra.mxu0 %v997
    %v1068 = vpop.f32.mrf.mxu0
    %v1069 = vadd.f32 %v988, %v1068
    %v1070 = vpop.f32.mrf.mxu0
    %1071 = vmatprep.mubr.f32.mxu0 0.0
    %1072 = vmatmul.mubr.f32.gmra.mxu0 %v1000
    %v1073 = vpop.f32.mrf.mxu0
    %v1074 = vadd.f32 %v993, %v1073
    %v1075 = vpop.f32.mrf.mxu0
    %1076 = vdwg.mxu0
    %1077 = vrot.lane.b32.xlu0 %v240, 112
    %v1078 = vpop.permute.xlu0 %1077
    %1079 = vrot.lane.b32.xlu0 %v240, 80
    %v1080 = vpop.permute.xlu0 %1079
    %v1081 = vsel %vm255, %v1078, 0
    %v1083 = vsel %vm255, %v1080, 0
    %1085 = vmatprep.subr.mxu0 0.0
    %1086 = vmatpush1.xpose.msra.mxu0 0.0
    %1087 = vmatprep.subr.mxu0 0.0
    %1088 = vmatpush1.xpose.msra.mxu0 0.0
    %1089 = vmatprep.subr.mxu0 0.0
    %1090 = vmatpush1.xpose.msra.mxu0 0.0
    %1091 = vmatprep.subr.mxu0 0.0
    %1092 = vmatpush1.xpose.msra.mxu0 0.0
    %1093 = vmatprep.subr.mxu0 0.0
    %1094 = vmatpush1.xpose.msra.mxu0 0.0
    %1095 = vmatprep.subr.mxu0 0.0
    %1096 = vmatpush1.xpose.msra.mxu0 0.0
    %1097 = vmatprep.subr.mxu0 0.0
    %1098 = vmatpush1.xpose.msra.mxu0 0.0
    %1099 = vmatprep.subr.mxu0 0.0
    %1100 = vmatpush1.xpose.msra.mxu0 0.0
    %1101 = vmatprep.subr.mxu0 0.0
    %1102 = vmatpush1.xpose.msra.mxu0 0.0
    %1103 = vmatprep.subr.mxu0 0.0
    %1104 = vmatpush1.xpose.msra.mxu0 0.0
    %1105 = vmatprep.subr.mxu0 0.0
    %1106 = vmatpush1.xpose.msra.mxu0 0.0
    %1107 = vmatprep.subr.mxu0 0.0
    %1108 = vmatpush1.xpose.msra.mxu0 0.0
    %1109 = vmatprep.subr.mxu0 0.0
    %1110 = vmatpush1.xpose.msra.mxu0 0.0
    %1111 = vmatprep.subr.mxu0 0.0
    %1112 = vmatpush1.xpose.msra.mxu0 0.0
    %1113 = vmatprep.subr.mxu0 0.0
    %1114 = vmatpush1.xpose.msra.mxu0 0.0
    %1115 = vmatprep.subr.mxu0 0.0
    %1116 = vmatpush1.xpose.msra.mxu0 %v1083
    %1117 = vmatprep.subr.mxu0 0.0
    %1118 = vmatpush2.xpose.msra.mxu0 0.0
    %1119 = vmatprep.subr.mxu0 0.0
    %1120 = vmatpush2.xpose.msra.mxu0 0.0
    %1121 = vmatprep.subr.mxu0 0.0
    %1122 = vmatpush2.xpose.msra.mxu0 0.0
    %1123 = vmatprep.subr.mxu0 0.0
    %1124 = vmatpush2.xpose.msra.mxu0 0.0
    %1125 = vmatprep.subr.mxu0 0.0
    %1126 = vmatpush2.xpose.msra.mxu0 0.0
    %1127 = vmatprep.subr.mxu0 0.0
    %1128 = vmatpush2.xpose.msra.mxu0 0.0
    %1129 = vmatprep.subr.mxu0 0.0
    %1130 = vmatpush2.xpose.msra.mxu0 0.0
    %1131 = vmatprep.subr.mxu0 0.0
    %1132 = vmatpush2.xpose.msra.mxu0 0.0
    %1133 = vmatprep.subr.mxu0 0.0
    %1134 = vmatpush2.xpose.msra.mxu0 0.0
    %1135 = vmatprep.subr.mxu0 0.0
    %1136 = vmatpush2.xpose.msra.mxu0 0.0
    %1137 = vmatprep.subr.mxu0 0.0
    %1138 = vmatpush2.xpose.msra.mxu0 0.0
    %1139 = vmatprep.subr.mxu0 0.0
    %1140 = vmatpush2.xpose.msra.mxu0 0.0
    %1141 = vmatprep.subr.mxu0 0.0
    %1142 = vmatpush2.xpose.msra.mxu0 0.0
    %1143 = vmatprep.subr.mxu0 0.0
    %1144 = vmatpush2.xpose.msra.mxu0 0.0
    %1145 = vmatprep.subr.mxu0 0.0
    %1146 = vmatpush2.xpose.msra.mxu0 0.0
    %1147 = vmatprep.subr.mxu0 0.0
    %1148 = vmatpush2.xpose.msra.mxu0 0.0
    %1149 = vmatprep.mubr.f32.mxu0 0.0
    %1150 = vmatmul.mubr.f32.gmra.mxu0 %v1081
    %v1151 = vpop.f32.mrf.mxu0
    %v1152 = vadd.f32 0.0, %v1151
    %v1153 = vpop.f32.mrf.mxu0
    %1154 = vdwg.mxu0
    %1155 = vrot.lane.b32.xlu0 %v245, 112
    %v1156 = vpop.permute.xlu0 %1155
    %1157 = vrot.lane.b32.xlu0 %v245, 80
    %v1158 = vpop.permute.xlu0 %1157
    %v1159 = vsel %vm255, %v1156, 0
    %v1161 = vsel %vm255, %v1158, 0
    %1163 = vmatprep.subr.mxu0 0.0
    %1164 = vmatpush1.xpose.msra.mxu0 0.0
    %1165 = vmatprep.subr.mxu0 0.0
    %1166 = vmatpush1.xpose.msra.mxu0 0.0
    %1167 = vmatprep.subr.mxu0 0.0
    %1168 = vmatpush1.xpose.msra.mxu0 0.0
    %1169 = vmatprep.subr.mxu0 0.0
    %1170 = vmatpush1.xpose.msra.mxu0 0.0
    %1171 = vmatprep.subr.mxu0 0.0
    %1172 = vmatpush1.xpose.msra.mxu0 0.0
    %1173 = vmatprep.subr.mxu0 0.0
    %1174 = vmatpush1.xpose.msra.mxu0 0.0
    %1175 = vmatprep.subr.mxu0 0.0
    %1176 = vmatpush1.xpose.msra.mxu0 0.0
    %1177 = vmatprep.subr.mxu0 0.0
    %1178 = vmatpush1.xpose.msra.mxu0 0.0
    %1179 = vmatprep.subr.mxu0 0.0
    %1180 = vmatpush1.xpose.msra.mxu0 0.0
    %1181 = vmatprep.subr.mxu0 0.0
    %1182 = vmatpush1.xpose.msra.mxu0 0.0
    %1183 = vmatprep.subr.mxu0 0.0
    %1184 = vmatpush1.xpose.msra.mxu0 0.0
    %1185 = vmatprep.subr.mxu0 0.0
    %1186 = vmatpush1.xpose.msra.mxu0 0.0
    %1187 = vmatprep.subr.mxu0 0.0
    %1188 = vmatpush1.xpose.msra.mxu0 0.0
    %1189 = vmatprep.subr.mxu0 0.0
    %1190 = vmatpush1.xpose.msra.mxu0 0.0
    %1191 = vmatprep.subr.mxu0 0.0
    %1192 = vmatpush1.xpose.msra.mxu0 0.0
    %1193 = vmatprep.subr.mxu0 0.0
    %1194 = vmatpush1.xpose.msra.mxu0 %v1161
    %1195 = vmatprep.subr.mxu0 0.0
    %1196 = vmatpush2.xpose.msra.mxu0 0.0
    %1197 = vmatprep.subr.mxu0 0.0
    %1198 = vmatpush2.xpose.msra.mxu0 0.0
    %1199 = vmatprep.subr.mxu0 0.0
    %1200 = vmatpush2.xpose.msra.mxu0 0.0
    %1201 = vmatprep.subr.mxu0 0.0
    %1202 = vmatpush2.xpose.msra.mxu0 0.0
    %1203 = vmatprep.subr.mxu0 0.0
    %1204 = vmatpush2.xpose.msra.mxu0 0.0
    %1205 = vmatprep.subr.mxu0 0.0
    %1206 = vmatpush2.xpose.msra.mxu0 0.0
    %1207 = vmatprep.subr.mxu0 0.0
    %1208 = vmatpush2.xpose.msra.mxu0 0.0
    %1209 = vmatprep.subr.mxu0 0.0
    %1210 = vmatpush2.xpose.msra.mxu0 0.0
    %1211 = vmatprep.subr.mxu0 0.0
    %1212 = vmatpush2.xpose.msra.mxu0 0.0
    %1213 = vmatprep.subr.mxu0 0.0
    %1214 = vmatpush2.xpose.msra.mxu0 0.0
    %1215 = vmatprep.subr.mxu0 0.0
    %1216 = vmatpush2.xpose.msra.mxu0 0.0
    %1217 = vmatprep.subr.mxu0 0.0
    %1218 = vmatpush2.xpose.msra.mxu0 0.0
    %1219 = vmatprep.subr.mxu0 0.0
    %1220 = vmatpush2.xpose.msra.mxu0 0.0
    %1221 = vmatprep.subr.mxu0 0.0
    %1222 = vmatpush2.xpose.msra.mxu0 0.0
    %1223 = vmatprep.subr.mxu0 0.0
    %1224 = vmatpush2.xpose.msra.mxu0 0.0
    %1225 = vmatprep.subr.mxu0 0.0
    %1226 = vmatpush2.xpose.msra.mxu0 0.0
    %1227 = vmatprep.mubr.f32.mxu0 0.0
    %1228 = vmatmul.mubr.f32.gmra.mxu0 %v1159
    %v1229 = vpop.f32.mrf.mxu0
    %v1230 = vadd.f32 0.0, %v1229
    %v1231 = vpop.f32.mrf.mxu0
    %1232 = vdwg.mxu0
    %v1233 = vmul.f32 %v1152, 0.35355338
    %v1234 = vmul.f32 %v1230, 0.35355338
    %v1235 = vsel %vm255, %v1233, -inf
    %1236 = vmax.xlane.f32.xlu0 %v1235
    %v1237 = vpop.xlane.xlu0 %1236
    %v1238 = vsel %vm255, %v1234, -inf
    %1239 = vmax.xlane.f32.xlu0 %v1238
    %v1240 = vpop.xlane.xlu0 %1239
    %v1241 = vsub.f32 %v1233, %v1237
    %v1242 = vsub.f32 %v1234, %v1240
    %v1243 = vmul.f32 %v1241, 1.442695
    %v1244 = vpow.pop %v1243
    %v1245 = vmul.f32 %v1242, 1.442695
    %v1246 = vpow.pop %v1245
    %v1247 = vsel %vm255, %v1244, 0.0
    %1248 = vadd.xlane.f32.xlu0 %v1247
    %v1249 = vpop.xlane.xlu0 %1248
    %v1250 = vsel %vm255, %v1246, 0.0
    %1251 = vadd.xlane.f32.xlu0 %v1250
    %v1252 = vpop.xlane.xlu0 %1251
    %v1253 = vrcp.pop %v1249
    %v1254 = vmul.f32 %v1244, %v1253
    %v1255 = vrcp.pop %v1252
    %v1256 = vmul.f32 %v1246, %v1255
    %1257 = vrot.lane.b32.xlu0 %v240, 48
    %v1258 = vpop.permute.xlu0 %1257
    %v1261 = vsel %vm255, %v1254, 0
    %1263 = vmatprep.subr.mxu0 0.0
    %1264 = vmatpush1.msra.mxu0 0.0
    %1265 = vmatprep.subr.mxu0 0.0
    %1266 = vmatpush1.msra.mxu0 0.0
    %1267 = vmatprep.subr.mxu0 0.0
    %1268 = vmatpush1.msra.mxu0 0.0
    %1269 = vmatprep.subr.mxu0 0.0
    %1270 = vmatpush1.msra.mxu0 0.0
    %1271 = vmatprep.subr.mxu0 0.0
    %1272 = vmatpush1.msra.mxu0 0.0
    %1273 = vmatprep.subr.mxu0 0.0
    %1274 = vmatpush1.msra.mxu0 0.0
    %1275 = vmatprep.subr.mxu0 0.0
    %1276 = vmatpush1.msra.mxu0 0.0
    %1277 = vmatprep.subr.mxu0 0.0
    %1278 = vmatpush1.msra.mxu0 0.0
    %1279 = vmatprep.subr.mxu0 0.0
    %1280 = vmatpush1.msra.mxu0 0.0
    %1281 = vmatprep.subr.mxu0 0.0
    %1282 = vmatpush1.msra.mxu0 0.0
    %1283 = vmatprep.subr.mxu0 0.0
    %1284 = vmatpush1.msra.mxu0 0.0
    %1285 = vmatprep.subr.mxu0 0.0
    %1286 = vmatpush1.msra.mxu0 0.0
    %1287 = vmatprep.subr.mxu0 0.0
    %1288 = vmatpush1.msra.mxu0 0.0
    %1289 = vmatprep.subr.mxu0 0.0
    %1290 = vmatpush1.msra.mxu0 0.0
    %1291 = vmatprep.subr.mxu0 0.0
    %1292 = vmatpush1.msra.mxu0 0.0
    %1293 = vmatprep.subr.mxu0 0.0
    %1294 = vmatpush1.msra.mxu0 %v1258
    %1295 = vmatprep.subr.mxu0 0.0
    %1296 = vmatpush2.msra.mxu0 0.0
    %1297 = vmatprep.subr.mxu0 0.0
    %1298 = vmatpush2.msra.mxu0 0.0
    %1299 = vmatprep.subr.mxu0 0.0
    %1300 = vmatpush2.msra.mxu0 0.0
    %1301 = vmatprep.subr.mxu0 0.0
    %1302 = vmatpush2.msra.mxu0 0.0
    %1303 = vmatprep.subr.mxu0 0.0
    %1304 = vmatpush2.msra.mxu0 0.0
    %1305 = vmatprep.subr.mxu0 0.0
    %1306 = vmatpush2.msra.mxu0 0.0
    %1307 = vmatprep.subr.mxu0 0.0
    %1308 = vmatpush2.msra.mxu0 0.0
    %1309 = vmatprep.subr.mxu0 0.0
    %1310 = vmatpush2.msra.mxu0 0.0
    %1311 = vmatprep.subr.mxu0 0.0
    %1312 = vmatpush2.msra.mxu0 0.0
    %1313 = vmatprep.subr.mxu0 0.0
    %1314 = vmatpush2.msra.mxu0 0.0
    %1315 = vmatprep.subr.mxu0 0.0
    %1316 = vmatpush2.msra.mxu0 0.0
    %1317 = vmatprep.subr.mxu0 0.0
    %1318 = vmatpush2.msra.mxu0 0.0
    %1319 = vmatprep.subr.mxu0 0.0
    %1320 = vmatpush2.msra.mxu0 0.0
    %1321 = vmatprep.subr.mxu0 0.0
    %1322 = vmatpush2.msra.mxu0 0.0
    %1323 = vmatprep.subr.mxu0 0.0
    %1324 = vmatpush2.msra.mxu0 0.0
    %1325 = vmatprep.subr.mxu0 0.0
    %1326 = vmatpush2.msra.mxu0 0.0
    %1327 = vmatprep.mubr.f32.mxu0 0.0
    %1328 = vmatmul.mubr.f32.gmra.mxu0 %v1261
    %v1329 = vpop.f32.mrf.mxu0
    %v1330 = vadd.f32 0.0, %v1329
    %v1331 = vpop.f32.mrf.mxu0
    %1332 = vdwg.mxu0
    %1333 = vrot.lane.b32.xlu0 %v245, 48
    %v1334 = vpop.permute.xlu0 %1333
    %v1337 = vsel %vm255, %v1256, 0
    %1339 = vmatprep.subr.mxu0 0.0
    %1340 = vmatpush1.msra.mxu0 0.0
    %1341 = vmatprep.subr.mxu0 0.0
    %1342 = vmatpush1.msra.mxu0 0.0
    %1343 = vmatprep.subr.mxu0 0.0
    %1344 = vmatpush1.msra.mxu0 0.0
    %1345 = vmatprep.subr.mxu0 0.0
    %1346 = vmatpush1.msra.mxu0 0.0
    %1347 = vmatprep.subr.mxu0 0.0
    %1348 = vmatpush1.msra.mxu0 0.0
    %1349 = vmatprep.subr.mxu0 0.0
    %1350 = vmatpush1.msra.mxu0 0.0
    %1351 = vmatprep.subr.mxu0 0.0
    %1352 = vmatpush1.msra.mxu0 0.0
    %1353 = vmatprep.subr.mxu0 0.0
    %1354 = vmatpush1.msra.mxu0 0.0
    %1355 = vmatprep.subr.mxu0 0.0
    %1356 = vmatpush1.msra.mxu0 0.0
    %1357 = vmatprep.subr.mxu0 0.0
    %1358 = vmatpush1.msra.mxu0 0.0
    %1359 = vmatprep.subr.mxu0 0.0
    %1360 = vmatpush1.msra.mxu0 0.0
    %1361 = vmatprep.subr.mxu0 0.0
    %1362 = vmatpush1.msra.mxu0 0.0
    %1363 = vmatprep.subr.mxu0 0.0
    %1364 = vmatpush1.msra.mxu0 0.0
    %1365 = vmatprep.subr.mxu0 0.0
    %1366 = vmatpush1.msra.mxu0 0.0
    %1367 = vmatprep.subr.mxu0 0.0
    %1368 = vmatpush1.msra.mxu0 0.0
    %1369 = vmatprep.subr.mxu0 0.0
    %1370 = vmatpush1.msra.mxu0 %v1334
    %1371 = vmatprep.subr.mxu0 0.0
    %1372 = vmatpush2.msra.mxu0 0.0
    %1373 = vmatprep.subr.mxu0 0.0
    %1374 = vmatpush2.msra.mxu0 0.0
    %1375 = vmatprep.subr.mxu0 0.0
    %1376 = vmatpush2.msra.mxu0 0.0
    %1377 = vmatprep.subr.mxu0 0.0
    %1378 = vmatpush2.msra.mxu0 0.0
    %1379 = vmatprep.subr.mxu0 0.0
    %1380 = vmatpush2.msra.mxu0 0.0
    %1381 = vmatprep.subr.mxu0 0.0
    %1382 = vmatpush2.msra.mxu0 0.0
    %1383 = vmatprep.subr.mxu0 0.0
    %1384 = vmatpush2.msra.mxu0 0.0
    %1385 = vmatprep.subr.mxu0 0.0
    %1386 = vmatpush2.msra.mxu0 0.0
    %1387 = vmatprep.subr.mxu0 0.0
    %1388 = vmatpush2.msra.mxu0 0.0
    %1389 = vmatprep.subr.mxu0 0.0
    %1390 = vmatpush2.msra.mxu0 0.0
    %1391 = vmatprep.subr.mxu0 0.0
    %1392 = vmatpush2.msra.mxu0 0.0
    %1393 = vmatprep.subr.mxu0 0.0
    %1394 = vmatpush2.msra.mxu0 0.0
    %1395 = vmatprep.subr.mxu0 0.0
    %1396 = vmatpush2.msra.mxu0 0.0
    %1397 = vmatprep.subr.mxu0 0.0
    %1398 = vmatpush2.msra.mxu0 0.0
    %1399 = vmatprep.subr.mxu0 0.0
    %1400 = vmatpush2.msra.mxu0 0.0
    %1401 = vmatprep.subr.mxu0 0.0
    %1402 = vmatpush2.msra.mxu0 0.0
    %1403 = vmatprep.mubr.f32.mxu0 0.0
    %1404 = vmatmul.mubr.f32.gmra.mxu0 %v1337
    %v1405 = vpop.f32.mrf.mxu0
    %v1406 = vadd.f32 0.0, %v1405
    %v1407 = vpop.f32.mrf.mxu0
    %1408 = vdwg.mxu0
    %v1410 = vsel %vm255, %v1330, 0
    %v1413 = vsel %vm255, %v1406, 0
    %1415 = vmatprep.subr.mxu0 0.0
    %1416 = vmatpush1.msra.mxu0 0.0
    %1417 = vmatprep.subr.mxu0 0.0
    %1418 = vmatpush1.msra.mxu0 0.0
    %1419 = vmatprep.subr.mxu0 0.0
    %1420 = vmatpush1.msra.mxu0 0.0
    %1421 = vmatprep.subr.mxu0 0.0
    %1422 = vmatpush1.msra.mxu0 0.0
    %1423 = vmatprep.subr.mxu0 0.0
    %1424 = vmatpush1.msra.mxu0 0.0
    %1425 = vmatprep.subr.mxu0 0.0
    %1426 = vmatpush1.msra.mxu0 0.0
    %1427 = vmatprep.subr.mxu0 0.0
    %1428 = vmatpush1.msra.mxu0 0.0
    %1429 = vmatprep.subr.mxu0 0.0
    %1430 = vmatpush1.msra.mxu0 0.0
    %1431 = vmatprep.subr.mxu0 0.0
    %1432 = vmatpush1.msra.mxu0 0.0
    %1433 = vmatprep.subr.mxu0 0.0
    %1434 = vmatpush1.msra.mxu0 0.0
    %1435 = vmatprep.subr.mxu0 0.0
    %1436 = vmatpush1.msra.mxu0 0.0
    %1437 = vmatprep.subr.mxu0 0.0
    %1438 = vmatpush1.msra.mxu0 0.0
    %1439 = vmatprep.subr.mxu0 0.0
    %1440 = vmatpush1.msra.mxu0 0.0
    %1441 = vmatprep.subr.mxu0 0.0
    %1442 = vmatpush1.msra.mxu0 0.0
    %1443 = vmatprep.subr.mxu0 0.0
    %1444 = vmatpush1.msra.mxu0 0.0
    %1445 = vmatprep.subr.mxu0 0.0
    %1446 = vmatpush1.msra.mxu0 %v250
    %1447 = vmatprep.subr.mxu0 0.0
    %1448 = vmatpush2.msra.mxu0 0.0
    %1449 = vmatprep.subr.mxu0 0.0
    %1450 = vmatpush2.msra.mxu0 0.0
    %1451 = vmatprep.subr.mxu0 0.0
    %1452 = vmatpush2.msra.mxu0 0.0
    %1453 = vmatprep.subr.mxu0 0.0
    %1454 = vmatpush2.msra.mxu0 0.0
    %1455 = vmatprep.subr.mxu0 0.0
    %1456 = vmatpush2.msra.mxu0 0.0
    %1457 = vmatprep.subr.mxu0 0.0
    %1458 = vmatpush2.msra.mxu0 0.0
    %1459 = vmatprep.subr.mxu0 0.0
    %1460 = vmatpush2.msra.mxu0 0.0
    %1461 = vmatprep.subr.mxu0 0.0
    %1462 = vmatpush2.msra.mxu0 0.0
    %1463 = vmatprep.subr.mxu0 0.0
    %1464 = vmatpush2.msra.mxu0 0.0
    %1465 = vmatprep.subr.mxu0 0.0
    %1466 = vmatpush2.msra.mxu0 0.0
    %1467 = vmatprep.subr.mxu0 0.0
    %1468 = vmatpush2.msra.mxu0 0.0
    %1469 = vmatprep.subr.mxu0 0.0
    %1470 = vmatpush2.msra.mxu0 0.0
    %1471 = vmatprep.subr.mxu0 0.0
    %1472 = vmatpush2.msra.mxu0 0.0
    %1473 = vmatprep.subr.mxu0 0.0
    %1474 = vmatpush2.msra.mxu0 0.0
    %1475 = vmatprep.subr.mxu0 0.0
    %1476 = vmatpush2.msra.mxu0 0.0
    %1477 = vmatprep.subr.mxu0 0.0
    %1478 = vmatpush2.msra.mxu0 0.0
    %1479 = vmatprep.mubr.f32.mxu0 0.0
    %1480 = vmatmul.mubr.f32.gmra.mxu0 %v1410
    %v1481 = vpop.f32.mrf.mxu0
    %v1482 = vadd.f32 0.0, %v1481
    %v1483 = vpop.f32.mrf.mxu0
    %1484 = vmatprep.mubr.f32.mxu0 0.0
    %1485 = vmatmul.mubr.f32.gmra.mxu0 %v1413
    %v1486 = vpop.f32.mrf.mxu0
    %v1487 = vadd.f32 0.0, %v1486
    %v1488 = vpop.f32.mrf.mxu0
    %1489 = vdwg.mxu0
    %v1490 = vadd.f32 %v1069, %v1482
    %v1491 = vadd.f32 %v1074, %v1487
    %1492 = vrot.lane.b32.xlu0 %v240, 104
    %v1493 = vpop.permute.xlu0 %1492
    %1494 = vrot.lane.b32.xlu0 %v240, 72
    %v1495 = vpop.permute.xlu0 %1494
    %v1496 = vsel %vm255, %v1493, 0
    %v1498 = vsel %vm255, %v1495, 0
    %1500 = vmatprep.subr.mxu0 0.0
    %1501 = vmatpush1.xpose.msra.mxu0 0.0
    %1502 = vmatprep.subr.mxu0 0.0
    %1503 = vmatpush1.xpose.msra.mxu0 0.0
    %1504 = vmatprep.subr.mxu0 0.0
    %1505 = vmatpush1.xpose.msra.mxu0 0.0
    %1506 = vmatprep.subr.mxu0 0.0
    %1507 = vmatpush1.xpose.msra.mxu0 0.0
    %1508 = vmatprep.subr.mxu0 0.0
    %1509 = vmatpush1.xpose.msra.mxu0 0.0
    %1510 = vmatprep.subr.mxu0 0.0
    %1511 = vmatpush1.xpose.msra.mxu0 0.0
    %1512 = vmatprep.subr.mxu0 0.0
    %1513 = vmatpush1.xpose.msra.mxu0 0.0
    %1514 = vmatprep.subr.mxu0 0.0
    %1515 = vmatpush1.xpose.msra.mxu0 0.0
    %1516 = vmatprep.subr.mxu0 0.0
    %1517 = vmatpush1.xpose.msra.mxu0 0.0
    %1518 = vmatprep.subr.mxu0 0.0
    %1519 = vmatpush1.xpose.msra.mxu0 0.0
    %1520 = vmatprep.subr.mxu0 0.0
    %1521 = vmatpush1.xpose.msra.mxu0 0.0
    %1522 = vmatprep.subr.mxu0 0.0
    %1523 = vmatpush1.xpose.msra.mxu0 0.0
    %1524 = vmatprep.subr.mxu0 0.0
    %1525 = vmatpush1.xpose.msra.mxu0 0.0
    %1526 = vmatprep.subr.mxu0 0.0
    %1527 = vmatpush1.xpose.msra.mxu0 0.0
    %1528 = vmatprep.subr.mxu0 0.0
    %1529 = vmatpush1.xpose.msra.mxu0 0.0
    %1530 = vmatprep.subr.mxu0 0.0
    %1531 = vmatpush1.xpose.msra.mxu0 %v1498
    %1532 = vmatprep.subr.mxu0 0.0
    %1533 = vmatpush2.xpose.msra.mxu0 0.0
    %1534 = vmatprep.subr.mxu0 0.0
    %1535 = vmatpush2.xpose.msra.mxu0 0.0
    %1536 = vmatprep.subr.mxu0 0.0
    %1537 = vmatpush2.xpose.msra.mxu0 0.0
    %1538 = vmatprep.subr.mxu0 0.0
    %1539 = vmatpush2.xpose.msra.mxu0 0.0
    %1540 = vmatprep.subr.mxu0 0.0
    %1541 = vmatpush2.xpose.msra.mxu0 0.0
    %1542 = vmatprep.subr.mxu0 0.0
    %1543 = vmatpush2.xpose.msra.mxu0 0.0
    %1544 = vmatprep.subr.mxu0 0.0
    %1545 = vmatpush2.xpose.msra.mxu0 0.0
    %1546 = vmatprep.subr.mxu0 0.0
    %1547 = vmatpush2.xpose.msra.mxu0 0.0
    %1548 = vmatprep.subr.mxu0 0.0
    %1549 = vmatpush2.xpose.msra.mxu0 0.0
    %1550 = vmatprep.subr.mxu0 0.0
    %1551 = vmatpush2.xpose.msra.mxu0 0.0
    %1552 = vmatprep.subr.mxu0 0.0
    %1553 = vmatpush2.xpose.msra.mxu0 0.0
    %1554 = vmatprep.subr.mxu0 0.0
    %1555 = vmatpush2.xpose.msra.mxu0 0.0
    %1556 = vmatprep.subr.mxu0 0.0
    %1557 = vmatpush2.xpose.msra.mxu0 0.0
    %1558 = vmatprep.subr.mxu0 0.0
    %1559 = vmatpush2.xpose.msra.mxu0 0.0
    %1560 = vmatprep.subr.mxu0 0.0
    %1561 = vmatpush2.xpose.msra.mxu0 0.0
    %1562 = vmatprep.subr.mxu0 0.0
    %1563 = vmatpush2.xpose.msra.mxu0 0.0
    %1564 = vmatprep.mubr.f32.mxu0 0.0
    %1565 = vmatmul.mubr.f32.gmra.mxu0 %v1496
    %v1566 = vpop.f32.mrf.mxu0
    %v1567 = vadd.f32 0.0, %v1566
    %v1568 = vpop.f32.mrf.mxu0
    %1569 = vdwg.mxu0
    %1570 = vrot.lane.b32.xlu0 %v245, 104
    %v1571 = vpop.permute.xlu0 %1570
    %1572 = vrot.lane.b32.xlu0 %v245, 72
    %v1573 = vpop.permute.xlu0 %1572
    %v1574 = vsel %vm255, %v1571, 0
    %v1576 = vsel %vm255, %v1573, 0
    %1578 = vmatprep.subr.mxu0 0.0
    %1579 = vmatpush1.xpose.msra.mxu0 0.0
    %1580 = vmatprep.subr.mxu0 0.0
    %1581 = vmatpush1.xpose.msra.mxu0 0.0
    %1582 = vmatprep.subr.mxu0 0.0
    %1583 = vmatpush1.xpose.msra.mxu0 0.0
    %1584 = vmatprep.subr.mxu0 0.0
    %1585 = vmatpush1.xpose.msra.mxu0 0.0
    %1586 = vmatprep.subr.mxu0 0.0
    %1587 = vmatpush1.xpose.msra.mxu0 0.0
    %1588 = vmatprep.subr.mxu0 0.0
    %1589 = vmatpush1.xpose.msra.mxu0 0.0
    %1590 = vmatprep.subr.mxu0 0.0
    %1591 = vmatpush1.xpose.msra.mxu0 0.0
    %1592 = vmatprep.subr.mxu0 0.0
    %1593 = vmatpush1.xpose.msra.mxu0 0.0
    %1594 = vmatprep.subr.mxu0 0.0
    %1595 = vmatpush1.xpose.msra.mxu0 0.0
    %1596 = vmatprep.subr.mxu0 0.0
    %1597 = vmatpush1.xpose.msra.mxu0 0.0
    %1598 = vmatprep.subr.mxu0 0.0
    %1599 = vmatpush1.xpose.msra.mxu0 0.0
    %1600 = vmatprep.subr.mxu0 0.0
    %1601 = vmatpush1.xpose.msra.mxu0 0.0
    %1602 = vmatprep.subr.mxu0 0.0
    %1603 = vmatpush1.xpose.msra.mxu0 0.0
    %1604 = vmatprep.subr.mxu0 0.0
    %1605 = vmatpush1.xpose.msra.mxu0 0.0
    %1606 = vmatprep.subr.mxu0 0.0
    %1607 = vmatpush1.xpose.msra.mxu0 0.0
    %1608 = vmatprep.subr.mxu0 0.0
    %1609 = vmatpush1.xpose.msra.mxu0 %v1576
    %1610 = vmatprep.subr.mxu0 0.0
    %1611 = vmatpush2.xpose.msra.mxu0 0.0
    %1612 = vmatprep.subr.mxu0 0.0
    %1613 = vmatpush2.xpose.msra.mxu0 0.0
    %1614 = vmatprep.subr.mxu0 0.0
    %1615 = vmatpush2.xpose.msra.mxu0 0.0
    %1616 = vmatprep.subr.mxu0 0.0
    %1617 = vmatpush2.xpose.msra.mxu0 0.0
    %1618 = vmatprep.subr.mxu0 0.0
    %1619 = vmatpush2.xpose.msra.mxu0 0.0
    %1620 = vmatprep.subr.mxu0 0.0
    %1621 = vmatpush2.xpose.msra.mxu0 0.0
    %1622 = vmatprep.subr.mxu0 0.0
    %1623 = vmatpush2.xpose.msra.mxu0 0.0
    %1624 = vmatprep.subr.mxu0 0.0
    %1625 = vmatpush2.xpose.msra.mxu0 0.0
    %1626 = vmatprep.subr.mxu0 0.0
    %1627 = vmatpush2.xpose.msra.mxu0 0.0
    %1628 = vmatprep.subr.mxu0 0.0
    %1629 = vmatpush2.xpose.msra.mxu0 0.0
    %1630 = vmatprep.subr.mxu0 0.0
    %1631 = vmatpush2.xpose.msra.mxu0 0.0
    %1632 = vmatprep.subr.mxu0 0.0
    %1633 = vmatpush2.xpose.msra.mxu0 0.0
    %1634 = vmatprep.subr.mxu0 0.0
    %1635 = vmatpush2.xpose.msra.mxu0 0.0
    %1636 = vmatprep.subr.mxu0 0.0
    %1637 = vmatpush2.xpose.msra.mxu0 0.0
    %1638 = vmatprep.subr.mxu0 0.0
    %1639 = vmatpush2.xpose.msra.mxu0 0.0
    %1640 = vmatprep.subr.mxu0 0.0
    %1641 = vmatpush2.xpose.msra.mxu0 0.0
    %1642 = vmatprep.mubr.f32.mxu0 0.0
    %1643 = vmatmul.mubr.f32.gmra.mxu0 %v1574
    %v1644 = vpop.f32.mrf.mxu0
    %v1645 = vadd.f32 0.0, %v1644
    %v1646 = vpop.f32.mrf.mxu0
    %1647 = vdwg.mxu0
    %v1648 = vmul.f32 %v1567, 0.35355338
    %v1649 = vmul.f32 %v1645, 0.35355338
    %v1650 = vsel %vm255, %v1648, -inf
    %1651 = vmax.xlane.f32.xlu0 %v1650
    %v1652 = vpop.xlane.xlu0 %1651
    %v1653 = vsel %vm255, %v1649, -inf
    %1654 = vmax.xlane.f32.xlu0 %v1653
    %v1655 = vpop.xlane.xlu0 %1654
    %v1656 = vsub.f32 %v1648, %v1652
    %v1657 = vsub.f32 %v1649, %v1655
    %v1658 = vmul.f32 %v1656, 1.442695
    %v1659 = vpow.pop %v1658
    %v1660 = vmul.f32 %v1657, 1.442695
    %v1661 = vpow.pop %v1660
    %v1662 = vsel %vm255, %v1659, 0.0
    %1663 = vadd.xlane.f32.xlu0 %v1662
    %v1664 = vpop.xlane.xlu0 %1663
    %v1665 = vsel %vm255, %v1661, 0.0
    %1666 = vadd.xlane.f32.xlu0 %v1665
    %v1667 = vpop.xlane.xlu0 %1666
    %v1668 = vrcp.pop %v1664
    %v1669 = vmul.f32 %v1659, %v1668
    %v1670 = vrcp.pop %v1667
    %v1671 = vmul.f32 %v1661, %v1670
    %1672 = vrot.lane.b32.xlu0 %v240, 40
    %v1673 = vpop.permute.xlu0 %1672
    %v1676 = vsel %vm255, %v1669, 0
    %1678 = vmatprep.subr.mxu0 0.0
    %1679 = vmatpush1.msra.mxu0 0.0
    %1680 = vmatprep.subr.mxu0 0.0
    %1681 = vmatpush1.msra.mxu0 0.0
    %1682 = vmatprep.subr.mxu0 0.0
    %1683 = vmatpush1.msra.mxu0 0.0
    %1684 = vmatprep.subr.mxu0 0.0
    %1685 = vmatpush1.msra.mxu0 0.0
    %1686 = vmatprep.subr.mxu0 0.0
    %1687 = vmatpush1.msra.mxu0 0.0
    %1688 = vmatprep.subr.mxu0 0.0
    %1689 = vmatpush1.msra.mxu0 0.0
    %1690 = vmatprep.subr.mxu0 0.0
    %1691 = vmatpush1.msra.mxu0 0.0
    %1692 = vmatprep.subr.mxu0 0.0
    %1693 = vmatpush1.msra.mxu0 0.0
    %1694 = vmatprep.subr.mxu0 0.0
    %1695 = vmatpush1.msra.mxu0 0.0
    %1696 = vmatprep.subr.mxu0 0.0
    %1697 = vmatpush1.msra.mxu0 0.0
    %1698 = vmatprep.subr.mxu0 0.0
    %1699 = vmatpush1.msra.mxu0 0.0
    %1700 = vmatprep.subr.mxu0 0.0
    %1701 = vmatpush1.msra.mxu0 0.0
    %1702 = vmatprep.subr.mxu0 0.0
    %1703 = vmatpush1.msra.mxu0 0.0
    %1704 = vmatprep.subr.mxu0 0.0
    %1705 = vmatpush1.msra.mxu0 0.0
    %1706 = vmatprep.subr.mxu0 0.0
    %1707 = vmatpush1.msra.mxu0 0.0
    %1708 = vmatprep.subr.mxu0 0.0
    %1709 = vmatpush1.msra.mxu0 %v1673
    %1710 = vmatprep.subr.mxu0 0.0
    %1711 = vmatpush2.msra.mxu0 0.0
    %1712 = vmatprep.subr.mxu0 0.0
    %1713 = vmatpush2.msra.mxu0 0.0
    %1714 = vmatprep.subr.mxu0 0.0
    %1715 = vmatpush2.msra.mxu0 0.0
    %1716 = vmatprep.subr.mxu0 0.0
    %1717 = vmatpush2.msra.mxu0 0.0
    %1718 = vmatprep.subr.mxu0 0.0
    %1719 = vmatpush2.msra.mxu0 0.0
    %1720 = vmatprep.subr.mxu0 0.0
    %1721 = vmatpush2.msra.mxu0 0.0
    %1722 = vmatprep.subr.mxu0 0.0
    %1723 = vmatpush2.msra.mxu0 0.0
    %1724 = vmatprep.subr.mxu0 0.0
    %1725 = vmatpush2.msra.mxu0 0.0
    %1726 = vmatprep.subr.mxu0 0.0
    %1727 = vmatpush2.msra.mxu0 0.0
    %1728 = vmatprep.subr.mxu0 0.0
    %1729 = vmatpush2.msra.mxu0 0.0
    %1730 = vmatprep.subr.mxu0 0.0
    %1731 = vmatpush2.msra.mxu0 0.0
    %1732 = vmatprep.subr.mxu0 0.0
    %1733 = vmatpush2.msra.mxu0 0.0
    %1734 = vmatprep.subr.mxu0 0.0
    %1735 = vmatpush2.msra.mxu0 0.0
    %1736 = vmatprep.subr.mxu0 0.0
    %1737 = vmatpush2.msra.mxu0 0.0
    %1738 = vmatprep.subr.mxu0 0.0
    %1739 = vmatpush2.msra.mxu0 0.0
    %1740 = vmatprep.subr.mxu0 0.0
    %1741 = vmatpush2.msra.mxu0 0.0
    %1742 = vmatprep.mubr.f32.mxu0 0.0
    %1743 = vmatmul.mubr.f32.gmra.mxu0 %v1676
    %v1744 = vpop.f32.mrf.mxu0
    %v1745 = vadd.f32 0.0, %v1744
    %v1746 = vpop.f32.mrf.mxu0
    %1747 = vdwg.mxu0
    %1748 = vrot.lane.b32.xlu0 %v245, 40
    %v1749 = vpop.permute.xlu0 %1748
    %v1752 = vsel %vm255, %v1671, 0
    %1754 = vmatprep.subr.mxu0 0.0
    %1755 = vmatpush1.msra.mxu0 0.0
    %1756 = vmatprep.subr.mxu0 0.0
    %1757 = vmatpush1.msra.mxu0 0.0
    %1758 = vmatprep.subr.mxu0 0.0
    %1759 = vmatpush1.msra.mxu0 0.0
    %1760 = vmatprep.subr.mxu0 0.0
    %1761 = vmatpush1.msra.mxu0 0.0
    %1762 = vmatprep.subr.mxu0 0.0
    %1763 = vmatpush1.msra.mxu0 0.0
    %1764 = vmatprep.subr.mxu0 0.0
    %1765 = vmatpush1.msra.mxu0 0.0
    %1766 = vmatprep.subr.mxu0 0.0
    %1767 = vmatpush1.msra.mxu0 0.0
    %1768 = vmatprep.subr.mxu0 0.0
    %1769 = vmatpush1.msra.mxu0 0.0
    %1770 = vmatprep.subr.mxu0 0.0
    %1771 = vmatpush1.msra.mxu0 0.0
    %1772 = vmatprep.subr.mxu0 0.0
    %1773 = vmatpush1.msra.mxu0 0.0
    %1774 = vmatprep.subr.mxu0 0.0
    %1775 = vmatpush1.msra.mxu0 0.0
    %1776 = vmatprep.subr.mxu0 0.0
    %1777 = vmatpush1.msra.mxu0 0.0
    %1778 = vmatprep.subr.mxu0 0.0
    %1779 = vmatpush1.msra.mxu0 0.0
    %1780 = vmatprep.subr.mxu0 0.0
    %1781 = vmatpush1.msra.mxu0 0.0
    %1782 = vmatprep.subr.mxu0 0.0
    %1783 = vmatpush1.msra.mxu0 0.0
    %1784 = vmatprep.subr.mxu0 0.0
    %1785 = vmatpush1.msra.mxu0 %v1749
    %1786 = vmatprep.subr.mxu0 0.0
    %1787 = vmatpush2.msra.mxu0 0.0
    %1788 = vmatprep.subr.mxu0 0.0
    %1789 = vmatpush2.msra.mxu0 0.0
    %1790 = vmatprep.subr.mxu0 0.0
    %1791 = vmatpush2.msra.mxu0 0.0
    %1792 = vmatprep.subr.mxu0 0.0
    %1793 = vmatpush2.msra.mxu0 0.0
    %1794 = vmatprep.subr.mxu0 0.0
    %1795 = vmatpush2.msra.mxu0 0.0
    %1796 = vmatprep.subr.mxu0 0.0
    %1797 = vmatpush2.msra.mxu0 0.0
    %1798 = vmatprep.subr.mxu0 0.0
    %1799 = vmatpush2.msra.mxu0 0.0
    %1800 = vmatprep.subr.mxu0 0.0
    %1801 = vmatpush2.msra.mxu0 0.0
    %1802 = vmatprep.subr.mxu0 0.0
    %1803 = vmatpush2.msra.mxu0 0.0
    %1804 = vmatprep.subr.mxu0 0.0
    %1805 = vmatpush2.msra.mxu0 0.0
    %1806 = vmatprep.subr.mxu0 0.0
    %1807 = vmatpush2.msra.mxu0 0.0
    %1808 = vmatprep.subr.mxu0 0.0
    %1809 = vmatpush2.msra.mxu0 0.0
    %1810 = vmatprep.subr.mxu0 0.0
    %1811 = vmatpush2.msra.mxu0 0.0
    %1812 = vmatprep.subr.mxu0 0.0
    %1813 = vmatpush2.msra.mxu0 0.0
    %1814 = vmatprep.subr.mxu0 0.0
    %1815 = vmatpush2.msra.mxu0 0.0
    %1816 = vmatprep.subr.mxu0 0.0
    %1817 = vmatpush2.msra.mxu0 0.0
    %1818 = vmatprep.mubr.f32.mxu0 0.0
    %1819 = vmatmul.mubr.f32.gmra.mxu0 %v1752
    %v1820 = vpop.f32.mrf.mxu0
    %v1821 = vadd.f32 0.0, %v1820
    %v1822 = vpop.f32.mrf.mxu0
    %1823 = vdwg.mxu0
    %v1825 = vsel %vm255, %v1745, 0
    %v1828 = vsel %vm255, %v1821, 0
    %1830 = vmatprep.subr.mxu0 0.0
    %1831 = vmatpush1.msra.mxu0 0.0
    %1832 = vmatprep.subr.mxu0 0.0
    %1833 = vmatpush1.msra.mxu0 0.0
    %1834 = vmatprep.subr.mxu0 0.0
    %1835 = vmatpush1.msra.mxu0 0.0
    %1836 = vmatprep.subr.mxu0 0.0
    %1837 = vmatpush1.msra.mxu0 0.0
    %1838 = vmatprep.subr.mxu0 0.0
    %1839 = vmatpush1.msra.mxu0 0.0
    %1840 = vmatprep.subr.mxu0 0.0
    %1841 = vmatpush1.msra.mxu0 0.0
    %1842 = vmatprep.subr.mxu0 0.0
    %1843 = vmatpush1.msra.mxu0 0.0
    %1844 = vmatprep.subr.mxu0 0.0
    %1845 = vmatpush1.msra.mxu0 0.0
    %1846 = vmatprep.subr.mxu0 0.0
    %1847 = vmatpush1.msra.mxu0 0.0
    %1848 = vmatprep.subr.mxu0 0.0
    %1849 = vmatpush1.msra.mxu0 0.0
    %1850 = vmatprep.subr.mxu0 0.0
    %1851 = vmatpush1.msra.mxu0 0.0
    %1852 = vmatprep.subr.mxu0 0.0
    %1853 = vmatpush1.msra.mxu0 0.0
    %1854 = vmatprep.subr.mxu0 0.0
    %1855 = vmatpush1.msra.mxu0 0.0
    %1856 = vmatprep.subr.mxu0 0.0
    %1857 = vmatpush1.msra.mxu0 0.0
    %1858 = vmatprep.subr.mxu0 0.0
    %1859 = vmatpush1.msra.mxu0 0.0
    %1860 = vmatprep.subr.mxu0 0.0
    %1861 = vmatpush1.msra.mxu0 %v251
    %1862 = vmatprep.subr.mxu0 0.0
    %1863 = vmatpush2.msra.mxu0 0.0
    %1864 = vmatprep.subr.mxu0 0.0
    %1865 = vmatpush2.msra.mxu0 0.0
    %1866 = vmatprep.subr.mxu0 0.0
    %1867 = vmatpush2.msra.mxu0 0.0
    %1868 = vmatprep.subr.mxu0 0.0
    %1869 = vmatpush2.msra.mxu0 0.0
    %1870 = vmatprep.subr.mxu0 0.0
    %1871 = vmatpush2.msra.mxu0 0.0
    %1872 = vmatprep.subr.mxu0 0.0
    %1873 = vmatpush2.msra.mxu0 0.0
    %1874 = vmatprep.subr.mxu0 0.0
    %1875 = vmatpush2.msra.mxu0 0.0
    %1876 = vmatprep.subr.mxu0 0.0
    %1877 = vmatpush2.msra.mxu0 0.0
    %1878 = vmatprep.subr.mxu0 0.0
    %1879 = vmatpush2.msra.mxu0 0.0
    %1880 = vmatprep.subr.mxu0 0.0
    %1881 = vmatpush2.msra.mxu0 0.0
    %1882 = vmatprep.subr.mxu0 0.0
    %1883 = vmatpush2.msra.mxu0 0.0
    %1884 = vmatprep.subr.mxu0 0.0
    %1885 = vmatpush2.msra.mxu0 0.0
    %1886 = vmatprep.subr.mxu0 0.0
    %1887 = vmatpush2.msra.mxu0 0.0
    %1888 = vmatprep.subr.mxu0 0.0
    %1889 = vmatpush2.msra.mxu0 0.0
    %1890 = vmatprep.subr.mxu0 0.0
    %1891 = vmatpush2.msra.mxu0 0.0
    %1892 = vmatprep.subr.mxu0 0.0
    %1893 = vmatpush2.msra.mxu0 0.0
    %1894 = vmatprep.mubr.f32.mxu0 0.0
    %1895 = vmatmul.mubr.f32.gmra.mxu0 %v1825
    %v1896 = vpop.f32.mrf.mxu0
    %v1897 = vadd.f32 0.0, %v1896
    %v1898 = vpop.f32.mrf.mxu0
    %1899 = vmatprep.mubr.f32.mxu0 0.0
    %1900 = vmatmul.mubr.f32.gmra.mxu0 %v1828
    %v1901 = vpop.f32.mrf.mxu0
    %v1902 = vadd.f32 0.0, %v1901
    %v1903 = vpop.f32.mrf.mxu0
    %1904 = vdwg.mxu0
    %v1905 = vadd.f32 %v1490, %v1897
    %v1906 = vadd.f32 %v1491, %v1902
    %v1907 = vld [vmem:[%s6] sm:$0x1]
    %v1909 = vlaneseq
    %v1910 = vshrl.u32 %v1909, 7
    %v1911 = vsub.s32 0, %v1910
    %v1912 = vrot.slane %v1907, %v1911
    %v1914 = vadd.f32 %v1905, %v1912
    %v1915 = vadd.f32 %v1906, %v1912
    %v1916 = vadd.f32 %v1914, %v154
    %v1917 = vadd.f32 %v1915, %v155
    %v1918 = vld [vmem:[%s7] sm:$0x1]
    %v1919 = vld [vmem:[%s8] sm:$0x1]
    %v1920 = vsel %vm112, %v1916, 0.0
    %1921 = vadd.xlane.f32.xlu0 %v1920
    %v1922 = vpop.xlane.xlu0 %1921
    %v1923 = vsel %vm112, %v1917, 0.0
    %1924 = vadd.xlane.f32.xlu0 %v1923
    %v1925 = vpop.xlane.xlu0 %1924
    %v1926 = vmul.f32 %v1922, %v119
    %v1927 = vmul.f32 %v1925, %v119
    %v1928 = vsub.f32 %v1916, %v1926
    %v1929 = vsub.f32 %v1917, %v1927
    %v1930 = vmul.f32 %v1928, %v1928
    %v1931 = vmul.f32 %v1929, %v1929
    %v1932 = vsel %vm112, %v1930, 0.0
    %1933 = vadd.xlane.f32.xlu0 %v1932
    %v1934 = vpop.xlane.xlu0 %1933
    %v1935 = vsel %vm112, %v1931, 0.0
    %1936 = vadd.xlane.f32.xlu0 %v1935
    %v1937 = vpop.xlane.xlu0 %1936
    %v1938 = vmul.f32 %v1934, %v119
    %v1939 = vmul.f32 %v1937, %v119
    %v1940 = vadd.f32 %v1938, 1e-12
    %v1941 = vadd.f32 %v1939, 1e-12
    %v1942 = vrsqrt.pop %v1940
    %v1943 = vrsqrt.pop %v1941
    %v1944 = vmul.f32 %v1928, %v1942
    %v1945 = vmul.f32 %v1929, %v1943
    %v1947 = vlaneseq
    %v1948 = vshrl.u32 %v1947, 7
    %v1949 = vsub.s32 0, %v1948
    %v1950 = vrot.slane %v1918, %v1949
    %v1952 = vmul.f32 %v1944, %v1950
    %v1953 = vmul.f32 %v1945, %v1950
    %v1955 = vlaneseq
    %v1956 = vshrl.u32 %v1955, 7
    %v1957 = vsub.s32 0, %v1956
    %v1958 = vrot.slane %v1919, %v1957
    %v1960 = vadd.f32 %v1952, %v1958
    %v1961 = vadd.f32 %v1953, %v1958
    %v1962 = vld [vmem:[%s9] sm:$0xff]
    %v1963 = vld [vmem:[%s9 + $0x8] sm:$0xff]
    %v1964 = vld [vmem:[%s9 + $0x10] sm:$0xff]
    %v1965 = vld [vmem:[%s9 + $0x18] sm:$0xff]
    %v1966 = vld [vmem:[%s10] sm:$0x1]
    %v1968 = vlaneseq
    %v1969 = vshrl.u32 %v1968, 7
    %v1970 = vsub.s32 0, %v1969
    %v1971 = vrot.slane %v1966, %v1970
    %v1974 = vsel %vm112, %v1960, 0
    %v1977 = vsel %vm112, %v1961, 0
    %1979 = vmatprep.subr.mxu0 0.0
    %1980 = vmatpush1.msra.mxu0 0.0
    %1981 = vmatprep.subr.mxu0 0.0
    %1982 = vmatpush1.msra.mxu0 0.0
    %1983 = vmatprep.subr.mxu0 0.0
    %1984 = vmatpush1.msra.mxu0 0.0
    %1985 = vmatprep.subr.mxu0 0.0
    %1986 = vmatpush1.msra.mxu0 0.0
    %1987 = vmatprep.subr.mxu0 0.0
    %1988 = vmatpush1.msra.mxu0 0.0
    %1989 = vmatprep.subr.mxu0 0.0
    %1990 = vmatpush1.msra.mxu0 0.0
    %1991 = vmatprep.subr.mxu0 0.0
    %1992 = vmatpush1.msra.mxu0 0.0
    %1993 = vmatprep.subr.mxu0 0.0
    %1994 = vmatpush1.msra.mxu0 0.0
    %1995 = vmatprep.subr.mxu0 0.0
    %1996 = vmatpush1.msra.mxu0 0.0
    %1997 = vmatprep.subr.mxu0 0.0
    %1998 = vmatpush1.msra.mxu0 0.0
    %1999 = vmatprep.subr.mxu0 0.0
    %2000 = vmatpush1.msra.mxu0 0.0
    %2001 = vmatprep.subr.mxu0 0.0
    %2002 = vmatpush1.msra.mxu0 0.0
    %2003 = vmatprep.subr.mxu0 0.0
    %2004 = vmatpush1.msra.mxu0 %v1965
    %2005 = vmatprep.subr.mxu0 0.0
    %2006 = vmatpush1.msra.mxu0 %v1964
    %2007 = vmatprep.subr.mxu0 0.0
    %2008 = vmatpush1.msra.mxu0 %v1963
    %2009 = vmatprep.subr.mxu0 0.0
    %2010 = vmatpush1.msra.mxu0 %v1962
    %2011 = vmatprep.subr.mxu0 0.0
    %2012 = vmatpush2.msra.mxu0 0.0
    %2013 = vmatprep.subr.mxu0 0.0
    %2014 = vmatpush2.msra.mxu0 0.0
    %2015 = vmatprep.subr.mxu0 0.0
    %2016 = vmatpush2.msra.mxu0 0.0
    %2017 = vmatprep.subr.mxu0 0.0
    %2018 = vmatpush2.msra.mxu0 0.0
    %2019 = vmatprep.subr.mxu0 0.0
    %2020 = vmatpush2.msra.mxu0 0.0
    %2021 = vmatprep.subr.mxu0 0.0
    %2022 = vmatpush2.msra.mxu0 0.0
    %2023 = vmatprep.subr.mxu0 0.0
    %2024 = vmatpush2.msra.mxu0 0.0
    %2025 = vmatprep.subr.mxu0 0.0
    %2026 = vmatpush2.msra.mxu0 0.0
    %2027 = vmatprep.subr.mxu0 0.0
    %2028 = vmatpush2.msra.mxu0 0.0
    %2029 = vmatprep.subr.mxu0 0.0
    %2030 = vmatpush2.msra.mxu0 0.0
    %2031 = vmatprep.subr.mxu0 0.0
    %2032 = vmatpush2.msra.mxu0 0.0
    %2033 = vmatprep.subr.mxu0 0.0
    %2034 = vmatpush2.msra.mxu0 0.0
    %2035 = vmatprep.subr.mxu0 0.0
    %2036 = vmatpush2.msra.mxu0 0.0
    %2037 = vmatprep.subr.mxu0 0.0
    %2038 = vmatpush2.msra.mxu0 0.0
    %2039 = vmatprep.subr.mxu0 0.0
    %2040 = vmatpush2.msra.mxu0 0.0
    %2041 = vmatprep.subr.mxu0 0.0
    %2042 = vmatpush2.msra.mxu0 0.0
    %2043 = vmatprep.mubr.f32.mxu0 0.0
    %2044 = vmatmul.mubr.f32.gmra.mxu0 %v1974
    %v2045 = vpop.f32.mrf.mxu0
    %v2046 = vadd.f32 %v1971, %v2045
    %v2047 = vpop.f32.mrf.mxu0
    %2048 = vmatprep.mubr.f32.mxu0 0.0
    %2049 = vmatmul.mubr.f32.gmra.mxu0 %v1977
    %v2050 = vpop.f32.mrf.mxu0
    %v2051 = vadd.f32 %v1971, %v2050
    %v2052 = vpop.f32.mrf.mxu0
    %2053 = vdwg.mxu0
    %v2054 = vmul.f32 %v2046, 0.5
    %v2055 = vmul.f32 %v2051, 0.5
    %v2056 = vmul.f32 %v2046, 0.70710677
    %v2057 = vmul.f32 %v2051, 0.70710677
    %v2058 = verf.f32.pop %v2056
    %v2059 = verf.f32.pop %v2057
    %v2060 = vadd.f32 %v2058, 1.0
    %v2061 = vadd.f32 %v2059, 1.0
    %v2062 = vmul.f32 %v2054, %v2060
    %v2063 = vmul.f32 %v2055, %v2061
    %v2064 = vld [vmem:[%s11] sm:$0xff]
    %v2065 = vld [vmem:[%s11 + $0x8] sm:$0xff]
    %v2066 = vld [vmem:[%s11 + $0x10] sm:$0xff]
    %v2067 = vld [vmem:[%s11 + $0x18] sm:$0xff]
    %v2068 = vld [vmem:[%s11 + $0x20] sm:$0xff]
    %v2069 = vld [vmem:[%s11 + $0x28] sm:$0xff]
    %v2070 = vld [vmem:[%s11 + $0x30] sm:$0xff]
    %v2071 = vld [vmem:[%s11 + $0x38] sm:$0xff]
    %v2072 = vld [vmem:[%s12] sm:$0x1]
    %v2074 = vlaneseq
    %v2075 = vshrl.u32 %v2074, 7
    %v2076 = vsub.s32 0, %v2075
    %v2077 = vrot.slane %v2072, %v2076
    %vm2079 = vcmask 523264
    %v2081 = vsel %vm2079, %v2062, 0
    %v2084 = vsel %vm2079, %v2063, 0
    %2086 = vmatprep.subr.mxu0 0.0
    %2087 = vmatpush1.msra.mxu0 0.0
    %2088 = vmatprep.subr.mxu0 0.0
    %2089 = vmatpush1.msra.mxu0 0.0
    %2090 = vmatprep.subr.mxu0 0.0
    %2091 = vmatpush1.msra.mxu0 0.0
    %2092 = vmatprep.subr.mxu0 0.0
    %2093 = vmatpush1.msra.mxu0 0.0
    %2094 = vmatprep.subr.mxu0 0.0
    %2095 = vmatpush1.msra.mxu0 0.0
    %2096 = vmatprep.subr.mxu0 0.0
    %2097 = vmatpush1.msra.mxu0 0.0
    %2098 = vmatprep.subr.mxu0 0.0
    %2099 = vmatpush1.msra.mxu0 0.0
    %2100 = vmatprep.subr.mxu0 0.0
    %2101 = vmatpush1.msra.mxu0 0.0
    %2102 = vmatprep.subr.mxu0 0.0
    %2103 = vmatpush1.msra.mxu0 %v2071
    %2104 = vmatprep.subr.mxu0 0.0
    %2105 = vmatpush1.msra.mxu0 %v2070
    %2106 = vmatprep.subr.mxu0 0.0
    %2107 = vmatpush1.msra.mxu0 %v2069
    %2108 = vmatprep.subr.mxu0 0.0
    %2109 = vmatpush1.msra.mxu0 %v2068
    %2110 = vmatprep.subr.mxu0 0.0
    %2111 = vmatpush1.msra.mxu0 %v2067
    %2112 = vmatprep.subr.mxu0 0.0
    %2113 = vmatpush1.msra.mxu0 %v2066
    %2114 = vmatprep.subr.mxu0 0.0
    %2115 = vmatpush1.msra.mxu0 %v2065
    %2116 = vmatprep.subr.mxu0 0.0
    %2117 = vmatpush1.msra.mxu0 %v2064
    %2118 = vmatprep.subr.mxu0 0.0
    %2119 = vmatpush2.msra.mxu0 0.0
    %2120 = vmatprep.subr.mxu0 0.0
    %2121 = vmatpush2.msra.mxu0 0.0
    %2122 = vmatprep.subr.mxu0 0.0
    %2123 = vmatpush2.msra.mxu0 0.0
    %2124 = vmatprep.subr.mxu0 0.0
    %2125 = vmatpush2.msra.mxu0 0.0
    %2126 = vmatprep.subr.mxu0 0.0
    %2127 = vmatpush2.msra.mxu0 0.0
    %2128 = vmatprep.subr.mxu0 0.0
    %2129 = vmatpush2.msra.mxu0 0.0
    %2130 = vmatprep.subr.mxu0 0.0
    %2131 = vmatpush2.msra.mxu0 0.0
    %2132 = vmatprep.subr.mxu0 0.0
    %2133 = vmatpush2.msra.mxu0 0.0
    %2134 = vmatprep.subr.mxu0 0.0
    %2135 = vmatpush2.msra.mxu0 0.0
    %2136 = vmatprep.subr.mxu0 0.0
    %2137 = vmatpush2.msra.mxu0 0.0
    %2138 = vmatprep.subr.mxu0 0.0
    %2139 = vmatpush2.msra.mxu0 0.0
    %2140 = vmatprep.subr.mxu0 0.0
    %2141 = vmatpush2.msra.mxu0 0.0
    %2142 = vmatprep.subr.mxu0 0.0
    %2143 = vmatpush2.msra.mxu0 0.0
    %2144 = vmatprep.subr.mxu0 0.0
    %2145 = vmatpush2.msra.mxu0 0.0
    %2146 = vmatprep.subr.mxu0 0.0
    %2147 = vmatpush2.msra.mxu0 0.0
    %2148 = vmatprep.subr.mxu0 0.0
    %2149 = vmatpush2.msra.mxu0 0.0
    %2150 = vmatprep.mubr.f32.mxu0 0.0
    %2151 = vmatmul.mubr.f32.gmra.mxu0 %v2081
    %v2152 = vpop.f32.mrf.mxu0
    %v2153 = vadd.f32 %v2077, %v2152
    %v2154 = vpop.f32.mrf.mxu0
    %2155 = vmatprep.mubr.f32.mxu0 0.0
    %2156 = vmatmul.mubr.f32.gmra.mxu0 %v2084
    %v2157 = vpop.f32.mrf.mxu0
    %v2158 = vadd.f32 %v2077, %v2157
    %v2159 = vpop.f32.mrf.mxu0
    %2160 = vdwg.mxu0
    %v2161 = vadd.f32 %v2153, %v1960
    %v2162 = vadd.f32 %v2158, %v1961
    %v2163 = vld [vmem:[%s13] sm:$0x1]
    %v2164 = vld [vmem:[%s14] sm:$0x1]
    %v2165 = vsel %vm112, %v2161, 0.0
    %2166 = vadd.xlane.f32.xlu0 %v2165
    %v2167 = vpop.xlane.xlu0 %2166
    %v2168 = vsel %vm112, %v2162, 0.0
    %2169 = vadd.xlane.f32.xlu0 %v2168
    %v2170 = vpop.xlane.xlu0 %2169
    %v2171 = vmul.f32 %v2167, %v119
    %v2172 = vmul.f32 %v2170, %v119
    %v2173 = vsub.f32 %v2161, %v2171
    %v2174 = vsub.f32 %v2162, %v2172
    %v2175 = vmul.f32 %v2173, %v2173
    %v2176 = vmul.f32 %v2174, %v2174
    %v2177 = vsel %vm112, %v2175, 0.0
    %2178 = vadd.xlane.f32.xlu0 %v2177
    %v2179 = vpop.xlane.xlu0 %2178
    %v2180 = vsel %vm112, %v2176, 0.0
    %2181 = vadd.xlane.f32.xlu0 %v2180
    %v2182 = vpop.xlane.xlu0 %2181
    %v2183 = vmul.f32 %v2179, %v119
    %v2184 = vmul.f32 %v2182, %v119
    %v2185 = vadd.f32 %v2183, 1e-12
    %v2186 = vadd.f32 %v2184, 1e-12
    %v2187 = vrsqrt.pop %v2185
    %v2188 = vrsqrt.pop %v2186
    %v2189 = vmul.f32 %v2173, %v2187
    %v2190 = vmul.f32 %v2174, %v2188
    %v2192 = vlaneseq
    %v2193 = vshrl.u32 %v2192, 7
    %v2194 = vsub.s32 0, %v2193
    %v2195 = vrot.slane %v2163, %v2194
    %v2197 = vmul.f32 %v2189, %v2195
    %v2198 = vmul.f32 %v2190, %v2195
    %v2200 = vlaneseq
    %v2201 = vshrl.u32 %v2200, 7
    %v2202 = vsub.s32 0, %v2201
    %v2203 = vrot.slane %v2164, %v2202
    %v2205 = vadd.f32 %v2197, %v2203
    %v2206 = vadd.f32 %v2198, %v2203
    %s2207 = scalar_lea.vmem %s3, 32
    %v2208 = vld [vmem:[%s2207] sm:$0xff]
    %v2209 = vld [vmem:[%s2207 + $0x8] sm:$0xff]
    %v2210 = vld [vmem:[%s2207 + $0x10] sm:$0xff]
    %v2211 = vld [vmem:[%s2207 + $0x18] sm:$0xff]
    %s2212 = scalar_lea.vmem %s4, 1
    %v2213 = vld [vmem:[%s2212] sm:$0x1]
    %v2215 = vlaneseq
    %v2216 = vshrl.u32 %v2215, 7
    %v2217 = vsub.s32 0, %v2216
    %v2218 = vrot.slane %v2213, %v2217
    %v2221 = vsel %vm112, %v2205, 0
    %v2224 = vsel %vm112, %v2206, 0
    %2226 = vmatprep.subr.mxu0 0.0
    %2227 = vmatpush1.msra.mxu0 0.0
    %2228 = vmatprep.subr.mxu0 0.0
    %2229 = vmatpush1.msra.mxu0 0.0
    %2230 = vmatprep.subr.mxu0 0.0
    %2231 = vmatpush1.msra.mxu0 0.0
    %2232 = vmatprep.subr.mxu0 0.0
    %2233 = vmatpush1.msra.mxu0 0.0
    %2234 = vmatprep.subr.mxu0 0.0
    %2235 = vmatpush1.msra.mxu0 0.0
    %2236 = vmatprep.subr.mxu0 0.0
    %2237 = vmatpush1.msra.mxu0 0.0
    %2238 = vmatprep.subr.mxu0 0.0
    %2239 = vmatpush1.msra.mxu0 0.0
    %2240 = vmatprep.subr.mxu0 0.0
    %2241 = vmatpush1.msra.mxu0 0.0
    %2242 = vmatprep.subr.mxu0 0.0
    %2243 = vmatpush1.msra.mxu0 0.0
    %2244 = vmatprep.subr.mxu0 0.0
    %2245 = vmatpush1.msra.mxu0 0.0
    %2246 = vmatprep.subr.mxu0 0.0
    %2247 = vmatpush1.msra.mxu0 0.0
    %2248 = vmatprep.subr.mxu0 0.0
    %2249 = vmatpush1.msra.mxu0 0.0
    %2250 = vmatprep.subr.mxu0 0.0
    %2251 = vmatpush1.msra.mxu0 %v2211
    %2252 = vmatprep.subr.mxu0 0.0
    %2253 = vmatpush1.msra.mxu0 %v2210
    %2254 = vmatprep.subr.mxu0 0.0
    %2255 = vmatpush1.msra.mxu0 %v2209
    %2256 = vmatprep.subr.mxu0 0.0
    %2257 = vmatpush1.msra.mxu0 %v2208
    %2258 = vmatprep.subr.mxu0 0.0
    %2259 = vmatpush2.msra.mxu0 0.0
    %2260 = vmatprep.subr.mxu0 0.0
    %2261 = vmatpush2.msra.mxu0 0.0
    %2262 = vmatprep.subr.mxu0 0.0
    %2263 = vmatpush2.msra.mxu0 0.0
    %2264 = vmatprep.subr.mxu0 0.0
    %2265 = vmatpush2.msra.mxu0 0.0
    %2266 = vmatprep.subr.mxu0 0.0
    %2267 = vmatpush2.msra.mxu0 0.0
    %2268 = vmatprep.subr.mxu0 0.0
    %2269 = vmatpush2.msra.mxu0 0.0
    %2270 = vmatprep.subr.mxu0 0.0
    %2271 = vmatpush2.msra.mxu0 0.0
    %2272 = vmatprep.subr.mxu0 0.0
    %2273 = vmatpush2.msra.mxu0 0.0
    %2274 = vmatprep.subr.mxu0 0.0
    %2275 = vmatpush2.msra.mxu0 0.0
    %2276 = vmatprep.subr.mxu0 0.0
    %2277 = vmatpush2.msra.mxu0 0.0
    %2278 = vmatprep.subr.mxu0 0.0
    %2279 = vmatpush2.msra.mxu0 0.0
    %2280 = vmatprep.subr.mxu0 0.0
    %2281 = vmatpush2.msra.mxu0 0.0
    %2282 = vmatprep.subr.mxu0 0.0
    %2283 = vmatpush2.msra.mxu0 0.0
    %2284 = vmatprep.subr.mxu0 0.0
    %2285 = vmatpush2.msra.mxu0 0.0
    %2286 = vmatprep.subr.mxu0 0.0
    %2287 = vmatpush2.msra.mxu0 0.0
    %2288 = vmatprep.subr.mxu0 0.0
    %2289 = vmatpush2.msra.mxu0 0.0
    %2290 = vmatprep.mubr.f32.mxu0 0.0
    %2291 = vmatmul.mubr.f32.gmra.mxu0 %v2221
    %v2292 = vpop.f32.mrf.mxu0
    %v2293 = vadd.f32 %v2218, %v2292
    %v2294 = vpop.f32.mrf.mxu0
    %2295 = vmatprep.mubr.f32.mxu0 0.0
    %2296 = vmatmul.mubr.f32.gmra.mxu0 %v2224
    %v2297 = vpop.f32.mrf.mxu0
    %v2298 = vadd.f32 %v2218, %v2297
    %v2299 = vpop.f32.mrf.mxu0
    %2300 = vdwg.mxu0
    %s2301 = scalar_lea.vmem %s5, 32
    %v2302 = vld [vmem:[%s2301] sm:$0xff]
    %v2303 = vld [vmem:[%s2301 + $0x8] sm:$0xff]
    %v2304 = vld [vmem:[%s2301 + $0x10] sm:$0xff]
    %v2305 = vld [vmem:[%s2301 + $0x18] sm:$0xff]
    %2307 = vrot.lane.b32.xlu0 %v2293, 96
    %v2308 = vpop.permute.xlu0 %2307
    %v2309 = vsel %vm255, %v2293, 0
    %v2311 = vsel %vm255, %v2308, 0
    %2313 = vmatprep.subr.mxu0 0.0
    %2314 = vmatpush1.xpose.msra.mxu0 0.0
    %2315 = vmatprep.subr.mxu0 0.0
    %2316 = vmatpush1.xpose.msra.mxu0 0.0
    %2317 = vmatprep.subr.mxu0 0.0
    %2318 = vmatpush1.xpose.msra.mxu0 0.0
    %2319 = vmatprep.subr.mxu0 0.0
    %2320 = vmatpush1.xpose.msra.mxu0 0.0
    %2321 = vmatprep.subr.mxu0 0.0
    %2322 = vmatpush1.xpose.msra.mxu0 0.0
    %2323 = vmatprep.subr.mxu0 0.0
    %2324 = vmatpush1.xpose.msra.mxu0 0.0
    %2325 = vmatprep.subr.mxu0 0.0
    %2326 = vmatpush1.xpose.msra.mxu0 0.0
    %2327 = vmatprep.subr.mxu0 0.0
    %2328 = vmatpush1.xpose.msra.mxu0 0.0
    %2329 = vmatprep.subr.mxu0 0.0
    %2330 = vmatpush1.xpose.msra.mxu0 0.0
    %2331 = vmatprep.subr.mxu0 0.0
    %2332 = vmatpush1.xpose.msra.mxu0 0.0
    %2333 = vmatprep.subr.mxu0 0.0
    %2334 = vmatpush1.xpose.msra.mxu0 0.0
    %2335 = vmatprep.subr.mxu0 0.0
    %2336 = vmatpush1.xpose.msra.mxu0 0.0
    %2337 = vmatprep.subr.mxu0 0.0
    %2338 = vmatpush1.xpose.msra.mxu0 0.0
    %2339 = vmatprep.subr.mxu0 0.0
    %2340 = vmatpush1.xpose.msra.mxu0 0.0
    %2341 = vmatprep.subr.mxu0 0.0
    %2342 = vmatpush1.xpose.msra.mxu0 0.0
    %2343 = vmatprep.subr.mxu0 0.0
    %2344 = vmatpush1.xpose.msra.mxu0 %v2311
    %2345 = vmatprep.subr.mxu0 0.0
    %2346 = vmatpush2.xpose.msra.mxu0 0.0
    %2347 = vmatprep.subr.mxu0 0.0
    %2348 = vmatpush2.xpose.msra.mxu0 0.0
    %2349 = vmatprep.subr.mxu0 0.0
    %2350 = vmatpush2.xpose.msra.mxu0 0.0
    %2351 = vmatprep.subr.mxu0 0.0
    %2352 = vmatpush2.xpose.msra.mxu0 0.0
    %2353 = vmatprep.subr.mxu0 0.0
    %2354 = vmatpush2.xpose.msra.mxu0 0.0
    %2355 = vmatprep.subr.mxu0 0.0
    %2356 = vmatpush2.xpose.msra.mxu0 0.0
    %2357 = vmatprep.subr.mxu0 0.0
    %2358 = vmatpush2.xpose.msra.mxu0 0.0
    %2359 = vmatprep.subr.mxu0 0.0
    %2360 = vmatpush2.xpose.msra.mxu0 0.0
    %2361 = vmatprep.subr.mxu0 0.0
    %2362 = vmatpush2.xpose.msra.mxu0 0.0
    %2363 = vmatprep.subr.mxu0 0.0
    %2364 = vmatpush2.xpose.msra.mxu0 0.0
    %2365 = vmatprep.subr.mxu0 0.0
    %2366 = vmatpush2.xpose.msra.mxu0 0.0
    %2367 = vmatprep.subr.mxu0 0.0
    %2368 = vmatpush2.xpose.msra.mxu0 0.0
    %2369 = vmatprep.subr.mxu0 0.0
    %2370 = vmatpush2.xpose.msra.mxu0 0.0
    %2371 = vmatprep.subr.mxu0 0.0
    %2372 = vmatpush2.xpose.msra.mxu0 0.0
    %2373 = vmatprep.subr.mxu0 0.0
    %2374 = vmatpush2.xpose.msra.mxu0 0.0
    %2375 = vmatprep.subr.mxu0 0.0
    %2376 = vmatpush2.xpose.msra.mxu0 0.0
    %2377 = vmatprep.mubr.f32.mxu0 0.0
    %2378 = vmatmul.mubr.f32.gmra.mxu0 %v2309
    %v2379 = vpop.f32.mrf.mxu0
    %v2380 = vadd.f32 0.0, %v2379
    %v2381 = vpop.f32.mrf.mxu0
    %2382 = vdwg.mxu0
    %2384 = vrot.lane.b32.xlu0 %v2298, 96
    %v2385 = vpop.permute.xlu0 %2384
    %v2386 = vsel %vm255, %v2298, 0
    %v2388 = vsel %vm255, %v2385, 0
    %2390 = vmatprep.subr.mxu0 0.0
    %2391 = vmatpush1.xpose.msra.mxu0 0.0
    %2392 = vmatprep.subr.mxu0 0.0
    %2393 = vmatpush1.xpose.msra.mxu0 0.0
    %2394 = vmatprep.subr.mxu0 0.0
    %2395 = vmatpush1.xpose.msra.mxu0 0.0
    %2396 = vmatprep.subr.mxu0 0.0
    %2397 = vmatpush1.xpose.msra.mxu0 0.0
    %2398 = vmatprep.subr.mxu0 0.0
    %2399 = vmatpush1.xpose.msra.mxu0 0.0
    %2400 = vmatprep.subr.mxu0 0.0
    %2401 = vmatpush1.xpose.msra.mxu0 0.0
    %2402 = vmatprep.subr.mxu0 0.0
    %2403 = vmatpush1.xpose.msra.mxu0 0.0
    %2404 = vmatprep.subr.mxu0 0.0
    %2405 = vmatpush1.xpose.msra.mxu0 0.0
    %2406 = vmatprep.subr.mxu0 0.0
    %2407 = vmatpush1.xpose.msra.mxu0 0.0
    %2408 = vmatprep.subr.mxu0 0.0
    %2409 = vmatpush1.xpose.msra.mxu0 0.0
    %2410 = vmatprep.subr.mxu0 0.0
    %2411 = vmatpush1.xpose.msra.mxu0 0.0
    %2412 = vmatprep.subr.mxu0 0.0
    %2413 = vmatpush1.xpose.msra.mxu0 0.0
    %2414 = vmatprep.subr.mxu0 0.0
    %2415 = vmatpush1.xpose.msra.mxu0 0.0
    %2416 = vmatprep.subr.mxu0 0.0
    %2417 = vmatpush1.xpose.msra.mxu0 0.0
    %2418 = vmatprep.subr.mxu0 0.0
    %2419 = vmatpush1.xpose.msra.mxu0 0.0
    %2420 = vmatprep.subr.mxu0 0.0
    %2421 = vmatpush1.xpose.msra.mxu0 %v2388
    %2422 = vmatprep.subr.mxu0 0.0
    %2423 = vmatpush2.xpose.msra.mxu0 0.0
    %2424 = vmatprep.subr.mxu0 0.0
    %2425 = vmatpush2.xpose.msra.mxu0 0.0
    %2426 = vmatprep.subr.mxu0 0.0
    %2427 = vmatpush2.xpose.msra.mxu0 0.0
    %2428 = vmatprep.subr.mxu0 0.0
    %2429 = vmatpush2.xpose.msra.mxu0 0.0
    %2430 = vmatprep.subr.mxu0 0.0
    %2431 = vmatpush2.xpose.msra.mxu0 0.0
    %2432 = vmatprep.subr.mxu0 0.0
    %2433 = vmatpush2.xpose.msra.mxu0 0.0
    %2434 = vmatprep.subr.mxu0 0.0
    %2435 = vmatpush2.xpose.msra.mxu0 0.0
    %2436 = vmatprep.subr.mxu0 0.0
    %2437 = vmatpush2.xpose.msra.mxu0 0.0
    %2438 = vmatprep.subr.mxu0 0.0
    %2439 = vmatpush2.xpose.msra.mxu0 0.0
    %2440 = vmatprep.subr.mxu0 0.0
    %2441 = vmatpush2.xpose.msra.mxu0 0.0
    %2442 = vmatprep.subr.mxu0 0.0
    %2443 = vmatpush2.xpose.msra.mxu0 0.0
    %2444 = vmatprep.subr.mxu0 0.0
    %2445 = vmatpush2.xpose.msra.mxu0 0.0
    %2446 = vmatprep.subr.mxu0 0.0
    %2447 = vmatpush2.xpose.msra.mxu0 0.0
    %2448 = vmatprep.subr.mxu0 0.0
    %2449 = vmatpush2.xpose.msra.mxu0 0.0
    %2450 = vmatprep.subr.mxu0 0.0
    %2451 = vmatpush2.xpose.msra.mxu0 0.0
    %2452 = vmatprep.subr.mxu0 0.0
    %2453 = vmatpush2.xpose.msra.mxu0 0.0
    %2454 = vmatprep.mubr.f32.mxu0 0.0
    %2455 = vmatmul.mubr.f32.gmra.mxu0 %v2386
    %v2456 = vpop.f32.mrf.mxu0
    %v2457 = vadd.f32 0.0, %v2456
    %v2458 = vpop.f32.mrf.mxu0
    %2459 = vdwg.mxu0
    %v2460 = vmul.f32 %v2380, 0.35355338
    %v2461 = vmul.f32 %v2457, 0.35355338
    %v2462 = vsel %vm255, %v2460, -inf
    %2463 = vmax.xlane.f32.xlu0 %v2462
    %v2464 = vpop.xlane.xlu0 %2463
    %v2465 = vsel %vm255, %v2461, -inf
    %2466 = vmax.xlane.f32.xlu0 %v2465
    %v2467 = vpop.xlane.xlu0 %2466
    %v2468 = vsub.f32 %v2460, %v2464
    %v2469 = vsub.f32 %v2461, %v2467
    %v2470 = vmul.f32 %v2468, 1.442695
    %v2471 = vpow.pop %v2470
    %v2472 = vmul.f32 %v2469, 1.442695
    %v2473 = vpow.pop %v2472
    %v2474 = vsel %vm255, %v2471, 0.0
    %2475 = vadd.xlane.f32.xlu0 %v2474
    %v2476 = vpop.xlane.xlu0 %2475
    %v2477 = vsel %vm255, %v2473, 0.0
    %2478 = vadd.xlane.f32.xlu0 %v2477
    %v2479 = vpop.xlane.xlu0 %2478
    %v2480 = vrcp.pop %v2476
    %v2481 = vmul.f32 %v2471, %v2480
    %v2482 = vrcp.pop %v2479
    %v2483 = vmul.f32 %v2473, %v2482
    %2484 = vrot.lane.b32.xlu0 %v2293, 64
    %v2485 = vpop.permute.xlu0 %2484
    %v2488 = vsel %vm255, %v2481, 0
    %2490 = vmatprep.subr.mxu0 0.0
    %2491 = vmatpush1.msra.mxu0 0.0
    %2492 = vmatprep.subr.mxu0 0.0
    %2493 = vmatpush1.msra.mxu0 0.0
    %2494 = vmatprep.subr.mxu0 0.0
    %2495 = vmatpush1.msra.mxu0 0.0
    %2496 = vmatprep.subr.mxu0 0.0
    %2497 = vmatpush1.msra.mxu0 0.0
    %2498 = vmatprep.subr.mxu0 0.0
    %2499 = vmatpush1.msra.mxu0 0.0
    %2500 = vmatprep.subr.mxu0 0.0
    %2501 = vmatpush1.msra.mxu0 0.0
    %2502 = vmatprep.subr.mxu0 0.0
    %2503 = vmatpush1.msra.mxu0 0.0
    %2504 = vmatprep.subr.mxu0 0.0
    %2505 = vmatpush1.msra.mxu0 0.0
    %2506 = vmatprep.subr.mxu0 0.0
    %2507 = vmatpush1.msra.mxu0 0.0
    %2508 = vmatprep.subr.mxu0 0.0
    %2509 = vmatpush1.msra.mxu0 0.0
    %2510 = vmatprep.subr.mxu0 0.0
    %2511 = vmatpush1.msra.mxu0 0.0
    %2512 = vmatprep.subr.mxu0 0.0
    %2513 = vmatpush1.msra.mxu0 0.0
    %2514 = vmatprep.subr.mxu0 0.0
    %2515 = vmatpush1.msra.mxu0 0.0
    %2516 = vmatprep.subr.mxu0 0.0
    %2517 = vmatpush1.msra.mxu0 0.0
    %2518 = vmatprep.subr.mxu0 0.0
    %2519 = vmatpush1.msra.mxu0 0.0
    %2520 = vmatprep.subr.mxu0 0.0
    %2521 = vmatpush1.msra.mxu0 %v2485
    %2522 = vmatprep.subr.mxu0 0.0
    %2523 = vmatpush2.msra.mxu0 0.0
    %2524 = vmatprep.subr.mxu0 0.0
    %2525 = vmatpush2.msra.mxu0 0.0
    %2526 = vmatprep.subr.mxu0 0.0
    %2527 = vmatpush2.msra.mxu0 0.0
    %2528 = vmatprep.subr.mxu0 0.0
    %2529 = vmatpush2.msra.mxu0 0.0
    %2530 = vmatprep.subr.mxu0 0.0
    %2531 = vmatpush2.msra.mxu0 0.0
    %2532 = vmatprep.subr.mxu0 0.0
    %2533 = vmatpush2.msra.mxu0 0.0
    %2534 = vmatprep.subr.mxu0 0.0
    %2535 = vmatpush2.msra.mxu0 0.0
    %2536 = vmatprep.subr.mxu0 0.0
    %2537 = vmatpush2.msra.mxu0 0.0
    %2538 = vmatprep.subr.mxu0 0.0
    %2539 = vmatpush2.msra.mxu0 0.0
    %2540 = vmatprep.subr.mxu0 0.0
    %2541 = vmatpush2.msra.mxu0 0.0
    %2542 = vmatprep.subr.mxu0 0.0
    %2543 = vmatpush2.msra.mxu0 0.0
    %2544 = vmatprep.subr.mxu0 0.0
    %2545 = vmatpush2.msra.mxu0 0.0
    %2546 = vmatprep.subr.mxu0 0.0
    %2547 = vmatpush2.msra.mxu0 0.0
    %2548 = vmatprep.subr.mxu0 0.0
    %2549 = vmatpush2.msra.mxu0 0.0
    %2550 = vmatprep.subr.mxu0 0.0
    %2551 = vmatpush2.msra.mxu0 0.0
    %2552 = vmatprep.subr.mxu0 0.0
    %2553 = vmatpush2.msra.mxu0 0.0
    %2554 = vmatprep.mubr.f32.mxu0 0.0
    %2555 = vmatmul.mubr.f32.gmra.mxu0 %v2488
    %v2556 = vpop.f32.mrf.mxu0
    %v2557 = vadd.f32 0.0, %v2556
    %v2558 = vpop.f32.mrf.mxu0
    %2559 = vdwg.mxu0
    %2560 = vrot.lane.b32.xlu0 %v2298, 64
    %v2561 = vpop.permute.xlu0 %2560
    %v2564 = vsel %vm255, %v2483, 0
    %2566 = vmatprep.subr.mxu0 0.0
    %2567 = vmatpush1.msra.mxu0 0.0
    %2568 = vmatprep.subr.mxu0 0.0
    %2569 = vmatpush1.msra.mxu0 0.0
    %2570 = vmatprep.subr.mxu0 0.0
    %2571 = vmatpush1.msra.mxu0 0.0
    %2572 = vmatprep.subr.mxu0 0.0
    %2573 = vmatpush1.msra.mxu0 0.0
    %2574 = vmatprep.subr.mxu0 0.0
    %2575 = vmatpush1.msra.mxu0 0.0
    %2576 = vmatprep.subr.mxu0 0.0
    %2577 = vmatpush1.msra.mxu0 0.0
    %2578 = vmatprep.subr.mxu0 0.0
    %2579 = vmatpush1.msra.mxu0 0.0
    %2580 = vmatprep.subr.mxu0 0.0
    %2581 = vmatpush1.msra.mxu0 0.0
    %2582 = vmatprep.subr.mxu0 0.0
    %2583 = vmatpush1.msra.mxu0 0.0
    %2584 = vmatprep.subr.mxu0 0.0
    %2585 = vmatpush1.msra.mxu0 0.0
    %2586 = vmatprep.subr.mxu0 0.0
    %2587 = vmatpush1.msra.mxu0 0.0
    %2588 = vmatprep.subr.mxu0 0.0
    %2589 = vmatpush1.msra.mxu0 0.0
    %2590 = vmatprep.subr.mxu0 0.0
    %2591 = vmatpush1.msra.mxu0 0.0
    %2592 = vmatprep.subr.mxu0 0.0
    %2593 = vmatpush1.msra.mxu0 0.0
    %2594 = vmatprep.subr.mxu0 0.0
    %2595 = vmatpush1.msra.mxu0 0.0
    %2596 = vmatprep.subr.mxu0 0.0
    %2597 = vmatpush1.msra.mxu0 %v2561
    %2598 = vmatprep.subr.mxu0 0.0
    %2599 = vmatpush2.msra.mxu0 0.0
    %2600 = vmatprep.subr.mxu0 0.0
    %2601 = vmatpush2.msra.mxu0 0.0
    %2602 = vmatprep.subr.mxu0 0.0
    %2603 = vmatpush2.msra.mxu0 0.0
    %2604 = vmatprep.subr.mxu0 0.0
    %2605 = vmatpush2.msra.mxu0 0.0
    %2606 = vmatprep.subr.mxu0 0.0
    %2607 = vmatpush2.msra.mxu0 0.0
    %2608 = vmatprep.subr.mxu0 0.0
    %2609 = vmatpush2.msra.mxu0 0.0
    %2610 = vmatprep.subr.mxu0 0.0
    %2611 = vmatpush2.msra.mxu0 0.0
    %2612 = vmatprep.subr.mxu0 0.0
    %2613 = vmatpush2.msra.mxu0 0.0
    %2614 = vmatprep.subr.mxu0 0.0
    %2615 = vmatpush2.msra.mxu0 0.0
    %2616 = vmatprep.subr.mxu0 0.0
    %2617 = vmatpush2.msra.mxu0 0.0
    %2618 = vmatprep.subr.mxu0 0.0
    %2619 = vmatpush2.msra.mxu0 0.0
    %2620 = vmatprep.subr.mxu0 0.0
    %2621 = vmatpush2.msra.mxu0 0.0
    %2622 = vmatprep.subr.mxu0 0.0
    %2623 = vmatpush2.msra.mxu0 0.0
    %2624 = vmatprep.subr.mxu0 0.0
    %2625 = vmatpush2.msra.mxu0 0.0
    %2626 = vmatprep.subr.mxu0 0.0
    %2627 = vmatpush2.msra.mxu0 0.0
    %2628 = vmatprep.subr.mxu0 0.0
    %2629 = vmatpush2.msra.mxu0 0.0
    %2630 = vmatprep.mubr.f32.mxu0 0.0
    %2631 = vmatmul.mubr.f32.gmra.mxu0 %v2564
    %v2632 = vpop.f32.mrf.mxu0
    %v2633 = vadd.f32 0.0, %v2632
    %v2634 = vpop.f32.mrf.mxu0
    %2635 = vdwg.mxu0
    %2636 = vrot.lane.b32.xlu0 %v2293, 120
    %v2637 = vpop.permute.xlu0 %2636
    %2638 = vrot.lane.b32.xlu0 %v2293, 88
    %v2639 = vpop.permute.xlu0 %2638
    %v2640 = vsel %vm255, %v2637, 0
    %v2642 = vsel %vm255, %v2639, 0
    %2644 = vmatprep.subr.mxu0 0.0
    %2645 = vmatpush1.xpose.msra.mxu0 0.0
    %2646 = vmatprep.subr.mxu0 0.0
    %2647 = vmatpush1.xpose.msra.mxu0 0.0
    %2648 = vmatprep.subr.mxu0 0.0
    %2649 = vmatpush1.xpose.msra.mxu0 0.0
    %2650 = vmatprep.subr.mxu0 0.0
    %2651 = vmatpush1.xpose.msra.mxu0 0.0
    %2652 = vmatprep.subr.mxu0 0.0
    %2653 = vmatpush1.xpose.msra.mxu0 0.0
    %2654 = vmatprep.subr.mxu0 0.0
    %2655 = vmatpush1.xpose.msra.mxu0 0.0
    %2656 = vmatprep.subr.mxu0 0.0
    %2657 = vmatpush1.xpose.msra.mxu0 0.0
    %2658 = vmatprep.subr.mxu0 0.0
    %2659 = vmatpush1.xpose.msra.mxu0 0.0
    %2660 = vmatprep.subr.mxu0 0.0
    %2661 = vmatpush1.xpose.msra.mxu0 0.0
    %2662 = vmatprep.subr.mxu0 0.0
    %2663 = vmatpush1.xpose.msra.mxu0 0.0
    %2664 = vmatprep.subr.mxu0 0.0
    %2665 = vmatpush1.xpose.msra.mxu0 0.0
    %2666 = vmatprep.subr.mxu0 0.0
    %2667 = vmatpush1.xpose.msra.mxu0 0.0
    %2668 = vmatprep.subr.mxu0 0.0
    %2669 = vmatpush1.xpose.msra.mxu0 0.0
    %2670 = vmatprep.subr.mxu0 0.0
    %2671 = vmatpush1.xpose.msra.mxu0 0.0
    %2672 = vmatprep.subr.mxu0 0.0
    %2673 = vmatpush1.xpose.msra.mxu0 0.0
    %2674 = vmatprep.subr.mxu0 0.0
    %2675 = vmatpush1.xpose.msra.mxu0 %v2642
    %2676 = vmatprep.subr.mxu0 0.0
    %2677 = vmatpush2.xpose.msra.mxu0 0.0
    %2678 = vmatprep.subr.mxu0 0.0
    %2679 = vmatpush2.xpose.msra.mxu0 0.0
    %2680 = vmatprep.subr.mxu0 0.0
    %2681 = vmatpush2.xpose.msra.mxu0 0.0
    %2682 = vmatprep.subr.mxu0 0.0
    %2683 = vmatpush2.xpose.msra.mxu0 0.0
    %2684 = vmatprep.subr.mxu0 0.0
    %2685 = vmatpush2.xpose.msra.mxu0 0.0
    %2686 = vmatprep.subr.mxu0 0.0
    %2687 = vmatpush2.xpose.msra.mxu0 0.0
    %2688 = vmatprep.subr.mxu0 0.0
    %2689 = vmatpush2.xpose.msra.mxu0 0.0
    %2690 = vmatprep.subr.mxu0 0.0
    %2691 = vmatpush2.xpose.msra.mxu0 0.0
    %2692 = vmatprep.subr.mxu0 0.0
    %2693 = vmatpush2.xpose.msra.mxu0 0.0
    %2694 = vmatprep.subr.mxu0 0.0
    %2695 = vmatpush2.xpose.msra.mxu0 0.0
    %2696 = vmatprep.subr.mxu0 0.0
    %2697 = vmatpush2.xpose.msra.mxu0 0.0
    %2698 = vmatprep.subr.mxu0 0.0
    %2699 = vmatpush2.xpose.msra.mxu0 0.0
    %2700 = vmatprep.subr.mxu0 0.0
    %2701 = vmatpush2.xpose.msra.mxu0 0.0
    %2702 = vmatprep.subr.mxu0 0.0
    %2703 = vmatpush2.xpose.msra.mxu0 0.0
    %2704 = vmatprep.subr.mxu0 0.0
    %2705 = vmatpush2.xpose.msra.mxu0 0.0
    %2706 = vmatprep.subr.mxu0 0.0
    %2707 = vmatpush2.xpose.msra.mxu0 0.0
    %2708 = vmatprep.mubr.f32.mxu0 0.0
    %2709 = vmatmul.mubr.f32.gmra.mxu0 %v2640
    %v2710 = vpop.f32.mrf.mxu0
    %v2711 = vadd.f32 0.0, %v2710
    %v2712 = vpop.f32.mrf.mxu0
    %2713 = vdwg.mxu0
    %2714 = vrot.lane.b32.xlu0 %v2298, 120
    %v2715 = vpop.permute.xlu0 %2714
    %2716 = vrot.lane.b32.xlu0 %v2298, 88
    %v2717 = vpop.permute.xlu0 %2716
    %v2718 = vsel %vm255, %v2715, 0
    %v2720 = vsel %vm255, %v2717, 0
    %2722 = vmatprep.subr.mxu0 0.0
    %2723 = vmatpush1.xpose.msra.mxu0 0.0
    %2724 = vmatprep.subr.mxu0 0.0
    %2725 = vmatpush1.xpose.msra.mxu0 0.0
    %2726 = vmatprep.subr.mxu0 0.0
    %2727 = vmatpush1.xpose.msra.mxu0 0.0
    %2728 = vmatprep.subr.mxu0 0.0
    %2729 = vmatpush1.xpose.msra.mxu0 0.0
    %2730 = vmatprep.subr.mxu0 0.0
    %2731 = vmatpush1.xpose.msra.mxu0 0.0
    %2732 = vmatprep.subr.mxu0 0.0
    %2733 = vmatpush1.xpose.msra.mxu0 0.0
    %2734 = vmatprep.subr.mxu0 0.0
    %2735 = vmatpush1.xpose.msra.mxu0 0.0
    %2736 = vmatprep.subr.mxu0 0.0
    %2737 = vmatpush1.xpose.msra.mxu0 0.0
    %2738 = vmatprep.subr.mxu0 0.0
    %2739 = vmatpush1.xpose.msra.mxu0 0.0
    %2740 = vmatprep.subr.mxu0 0.0
    %2741 = vmatpush1.xpose.msra.mxu0 0.0
    %2742 = vmatprep.subr.mxu0 0.0
    %2743 = vmatpush1.xpose.msra.mxu0 0.0
    %2744 = vmatprep.subr.mxu0 0.0
    %2745 = vmatpush1.xpose.msra.mxu0 0.0
    %2746 = vmatprep.subr.mxu0 0.0
    %2747 = vmatpush1.xpose.msra.mxu0 0.0
    %2748 = vmatprep.subr.mxu0 0.0
    %2749 = vmatpush1.xpose.msra.mxu0 0.0
    %2750 = vmatprep.subr.mxu0 0.0
    %2751 = vmatpush1.xpose.msra.mxu0 0.0
    %2752 = vmatprep.subr.mxu0 0.0
    %2753 = vmatpush1.xpose.msra.mxu0 %v2720
    %2754 = vmatprep.subr.mxu0 0.0
    %2755 = vmatpush2.xpose.msra.mxu0 0.0
    %2756 = vmatprep.subr.mxu0 0.0
    %2757 = vmatpush2.xpose.msra.mxu0 0.0
    %2758 = vmatprep.subr.mxu0 0.0
    %2759 = vmatpush2.xpose.msra.mxu0 0.0
    %2760 = vmatprep.subr.mxu0 0.0
    %2761 = vmatpush2.xpose.msra.mxu0 0.0
    %2762 = vmatprep.subr.mxu0 0.0
    %2763 = vmatpush2.xpose.msra.mxu0 0.0
    %2764 = vmatprep.subr.mxu0 0.0
    %2765 = vmatpush2.xpose.msra.mxu0 0.0
    %2766 = vmatprep.subr.mxu0 0.0
    %2767 = vmatpush2.xpose.msra.mxu0 0.0
    %2768 = vmatprep.subr.mxu0 0.0
    %2769 = vmatpush2.xpose.msra.mxu0 0.0
    %2770 = vmatprep.subr.mxu0 0.0
    %2771 = vmatpush2.xpose.msra.mxu0 0.0
    %2772 = vmatprep.subr.mxu0 0.0
    %2773 = vmatpush2.xpose.msra.mxu0 0.0
    %2774 = vmatprep.subr.mxu0 0.0
    %2775 = vmatpush2.xpose.msra.mxu0 0.0
    %2776 = vmatprep.subr.mxu0 0.0
    %2777 = vmatpush2.xpose.msra.mxu0 0.0
    %2778 = vmatprep.subr.mxu0 0.0
    %2779 = vmatpush2.xpose.msra.mxu0 0.0
    %2780 = vmatprep.subr.mxu0 0.0
    %2781 = vmatpush2.xpose.msra.mxu0 0.0
    %2782 = vmatprep.subr.mxu0 0.0
    %2783 = vmatpush2.xpose.msra.mxu0 0.0
    %2784 = vmatprep.subr.mxu0 0.0
    %2785 = vmatpush2.xpose.msra.mxu0 0.0
    %2786 = vmatprep.mubr.f32.mxu0 0.0
    %2787 = vmatmul.mubr.f32.gmra.mxu0 %v2718
    %v2788 = vpop.f32.mrf.mxu0
    %v2789 = vadd.f32 0.0, %v2788
    %v2790 = vpop.f32.mrf.mxu0
    %2791 = vdwg.mxu0
    %v2792 = vmul.f32 %v2711, 0.35355338
    %v2793 = vmul.f32 %v2789, 0.35355338
    %v2794 = vsel %vm255, %v2792, -inf
    %2795 = vmax.xlane.f32.xlu0 %v2794
    %v2796 = vpop.xlane.xlu0 %2795
    %v2797 = vsel %vm255, %v2793, -inf
    %2798 = vmax.xlane.f32.xlu0 %v2797
    %v2799 = vpop.xlane.xlu0 %2798
    %v2800 = vsub.f32 %v2792, %v2796
    %v2801 = vsub.f32 %v2793, %v2799
    %v2802 = vmul.f32 %v2800, 1.442695
    %v2803 = vpow.pop %v2802
    %v2804 = vmul.f32 %v2801, 1.442695
    %v2805 = vpow.pop %v2804
    %v2806 = vsel %vm255, %v2803, 0.0
    %2807 = vadd.xlane.f32.xlu0 %v2806
    %v2808 = vpop.xlane.xlu0 %2807
    %v2809 = vsel %vm255, %v2805, 0.0
    %2810 = vadd.xlane.f32.xlu0 %v2809
    %v2811 = vpop.xlane.xlu0 %2810
    %v2812 = vrcp.pop %v2808
    %v2813 = vmul.f32 %v2803, %v2812
    %v2814 = vrcp.pop %v2811
    %v2815 = vmul.f32 %v2805, %v2814
    %2816 = vrot.lane.b32.xlu0 %v2293, 56
    %v2817 = vpop.permute.xlu0 %2816
    %v2820 = vsel %vm255, %v2813, 0
    %2822 = vmatprep.subr.mxu0 0.0
    %2823 = vmatpush1.msra.mxu0 0.0
    %2824 = vmatprep.subr.mxu0 0.0
    %2825 = vmatpush1.msra.mxu0 0.0
    %2826 = vmatprep.subr.mxu0 0.0
    %2827 = vmatpush1.msra.mxu0 0.0
    %2828 = vmatprep.subr.mxu0 0.0
    %2829 = vmatpush1.msra.mxu0 0.0
    %2830 = vmatprep.subr.mxu0 0.0
    %2831 = vmatpush1.msra.mxu0 0.0
    %2832 = vmatprep.subr.mxu0 0.0
    %2833 = vmatpush1.msra.mxu0 0.0
    %2834 = vmatprep.subr.mxu0 0.0
    %2835 = vmatpush1.msra.mxu0 0.0
    %2836 = vmatprep.subr.mxu0 0.0
    %2837 = vmatpush1.msra.mxu0 0.0
    %2838 = vmatprep.subr.mxu0 0.0
    %2839 = vmatpush1.msra.mxu0 0.0
    %2840 = vmatprep.subr.mxu0 0.0
    %2841 = vmatpush1.msra.mxu0 0.0
    %2842 = vmatprep.subr.mxu0 0.0
    %2843 = vmatpush1.msra.mxu0 0.0
    %2844 = vmatprep.subr.mxu0 0.0
    %2845 = vmatpush1.msra.mxu0 0.0
    %2846 = vmatprep.subr.mxu0 0.0
    %2847 = vmatpush1.msra.mxu0 0.0
    %2848 = vmatprep.subr.mxu0 0.0
    %2849 = vmatpush1.msra.mxu0 0.0
    %2850 = vmatprep.subr.mxu0 0.0
    %2851 = vmatpush1.msra.mxu0 0.0
    %2852 = vmatprep.subr.mxu0 0.0
    %2853 = vmatpush1.msra.mxu0 %v2817
    %2854 = vmatprep.subr.mxu0 0.0
    %2855 = vmatpush2.msra.mxu0 0.0
    %2856 = vmatprep.subr.mxu0 0.0
    %2857 = vmatpush2.msra.mxu0 0.0
    %2858 = vmatprep.subr.mxu0 0.0
    %2859 = vmatpush2.msra.mxu0 0.0
    %2860 = vmatprep.subr.mxu0 0.0
    %2861 = vmatpush2.msra.mxu0 0.0
    %2862 = vmatprep.subr.mxu0 0.0
    %2863 = vmatpush2.msra.mxu0 0.0
    %2864 = vmatprep.subr.mxu0 0.0
    %2865 = vmatpush2.msra.mxu0 0.0
    %2866 = vmatprep.subr.mxu0 0.0
    %2867 = vmatpush2.msra.mxu0 0.0
    %2868 = vmatprep.subr.mxu0 0.0
    %2869 = vmatpush2.msra.mxu0 0.0
    %2870 = vmatprep.subr.mxu0 0.0
    %2871 = vmatpush2.msra.mxu0 0.0
    %2872 = vmatprep.subr.mxu0 0.0
    %2873 = vmatpush2.msra.mxu0 0.0
    %2874 = vmatprep.subr.mxu0 0.0
    %2875 = vmatpush2.msra.mxu0 0.0
    %2876 = vmatprep.subr.mxu0 0.0
    %2877 = vmatpush2.msra.mxu0 0.0
    %2878 = vmatprep.subr.mxu0 0.0
    %2879 = vmatpush2.msra.mxu0 0.0
    %2880 = vmatprep.subr.mxu0 0.0
    %2881 = vmatpush2.msra.mxu0 0.0
    %2882 = vmatprep.subr.mxu0 0.0
    %2883 = vmatpush2.msra.mxu0 0.0
    %2884 = vmatprep.subr.mxu0 0.0
    %2885 = vmatpush2.msra.mxu0 0.0
    %2886 = vmatprep.mubr.f32.mxu0 0.0
    %2887 = vmatmul.mubr.f32.gmra.mxu0 %v2820
    %v2888 = vpop.f32.mrf.mxu0
    %v2889 = vadd.f32 0.0, %v2888
    %v2890 = vpop.f32.mrf.mxu0
    %2891 = vdwg.mxu0
    %2892 = vrot.lane.b32.xlu0 %v2298, 56
    %v2893 = vpop.permute.xlu0 %2892
    %v2896 = vsel %vm255, %v2815, 0
    %2898 = vmatprep.subr.mxu0 0.0
    %2899 = vmatpush1.msra.mxu0 0.0
    %2900 = vmatprep.subr.mxu0 0.0
    %2901 = vmatpush1.msra.mxu0 0.0
    %2902 = vmatprep.subr.mxu0 0.0
    %2903 = vmatpush1.msra.mxu0 0.0
    %2904 = vmatprep.subr.mxu0 0.0
    %2905 = vmatpush1.msra.mxu0 0.0
    %2906 = vmatprep.subr.mxu0 0.0
    %2907 = vmatpush1.msra.mxu0 0.0
    %2908 = vmatprep.subr.mxu0 0.0
    %2909 = vmatpush1.msra.mxu0 0.0
    %2910 = vmatprep.subr.mxu0 0.0
    %2911 = vmatpush1.msra.mxu0 0.0
    %2912 = vmatprep.subr.mxu0 0.0
    %2913 = vmatpush1.msra.mxu0 0.0
    %2914 = vmatprep.subr.mxu0 0.0
    %2915 = vmatpush1.msra.mxu0 0.0
    %2916 = vmatprep.subr.mxu0 0.0
    %2917 = vmatpush1.msra.mxu0 0.0
    %2918 = vmatprep.subr.mxu0 0.0
    %2919 = vmatpush1.msra.mxu0 0.0
    %2920 = vmatprep.subr.mxu0 0.0
    %2921 = vmatpush1.msra.mxu0 0.0
    %2922 = vmatprep.subr.mxu0 0.0
    %2923 = vmatpush1.msra.mxu0 0.0
    %2924 = vmatprep.subr.mxu0 0.0
    %2925 = vmatpush1.msra.mxu0 0.0
    %2926 = vmatprep.subr.mxu0 0.0
    %2927 = vmatpush1.msra.mxu0 0.0
    %2928 = vmatprep.subr.mxu0 0.0
    %2929 = vmatpush1.msra.mxu0 %v2893
    %2930 = vmatprep.subr.mxu0 0.0
    %2931 = vmatpush2.msra.mxu0 0.0
    %2932 = vmatprep.subr.mxu0 0.0
    %2933 = vmatpush2.msra.mxu0 0.0
    %2934 = vmatprep.subr.mxu0 0.0
    %2935 = vmatpush2.msra.mxu0 0.0
    %2936 = vmatprep.subr.mxu0 0.0
    %2937 = vmatpush2.msra.mxu0 0.0
    %2938 = vmatprep.subr.mxu0 0.0
    %2939 = vmatpush2.msra.mxu0 0.0
    %2940 = vmatprep.subr.mxu0 0.0
    %2941 = vmatpush2.msra.mxu0 0.0
    %2942 = vmatprep.subr.mxu0 0.0
    %2943 = vmatpush2.msra.mxu0 0.0
    %2944 = vmatprep.subr.mxu0 0.0
    %2945 = vmatpush2.msra.mxu0 0.0
    %2946 = vmatprep.subr.mxu0 0.0
    %2947 = vmatpush2.msra.mxu0 0.0
    %2948 = vmatprep.subr.mxu0 0.0
    %2949 = vmatpush2.msra.mxu0 0.0
    %2950 = vmatprep.subr.mxu0 0.0
    %2951 = vmatpush2.msra.mxu0 0.0
    %2952 = vmatprep.subr.mxu0 0.0
    %2953 = vmatpush2.msra.mxu0 0.0
    %2954 = vmatprep.subr.mxu0 0.0
    %2955 = vmatpush2.msra.mxu0 0.0
    %2956 = vmatprep.subr.mxu0 0.0
    %2957 = vmatpush2.msra.mxu0 0.0
    %2958 = vmatprep.subr.mxu0 0.0
    %2959 = vmatpush2.msra.mxu0 0.0
    %2960 = vmatprep.subr.mxu0 0.0
    %2961 = vmatpush2.msra.mxu0 0.0
    %2962 = vmatprep.mubr.f32.mxu0 0.0
    %2963 = vmatmul.mubr.f32.gmra.mxu0 %v2896
    %v2964 = vpop.f32.mrf.mxu0
    %v2965 = vadd.f32 0.0, %v2964
    %v2966 = vpop.f32.mrf.mxu0
    %2967 = vdwg.mxu0
    %v2969 = vsel %vm255, %v2889, 0
    %v2972 = vsel %vm255, %v2965, 0
    %2974 = vmatprep.subr.mxu0 0.0
    %2975 = vmatpush1.msra.mxu0 0.0
    %2976 = vmatprep.subr.mxu0 0.0
    %2977 = vmatpush1.msra.mxu0 0.0
    %2978 = vmatprep.subr.mxu0 0.0
    %2979 = vmatpush1.msra.mxu0 0.0
    %2980 = vmatprep.subr.mxu0 0.0
    %2981 = vmatpush1.msra.mxu0 0.0
    %2982 = vmatprep.subr.mxu0 0.0
    %2983 = vmatpush1.msra.mxu0 0.0
    %2984 = vmatprep.subr.mxu0 0.0
    %2985 = vmatpush1.msra.mxu0 0.0
    %2986 = vmatprep.subr.mxu0 0.0
    %2987 = vmatpush1.msra.mxu0 0.0
    %2988 = vmatprep.subr.mxu0 0.0
    %2989 = vmatpush1.msra.mxu0 0.0
    %2990 = vmatprep.subr.mxu0 0.0
    %2991 = vmatpush1.msra.mxu0 0.0
    %2992 = vmatprep.subr.mxu0 0.0
    %2993 = vmatpush1.msra.mxu0 0.0
    %2994 = vmatprep.subr.mxu0 0.0
    %2995 = vmatpush1.msra.mxu0 0.0
    %2996 = vmatprep.subr.mxu0 0.0
    %2997 = vmatpush1.msra.mxu0 0.0
    %2998 = vmatprep.subr.mxu0 0.0
    %2999 = vmatpush1.msra.mxu0 0.0
    %3000 = vmatprep.subr.mxu0 0.0
    %3001 = vmatpush1.msra.mxu0 0.0
    %3002 = vmatprep.subr.mxu0 0.0
    %3003 = vmatpush1.msra.mxu0 0.0
    %3004 = vmatprep.subr.mxu0 0.0
    %3005 = vmatpush1.msra.mxu0 %v2303
    %3006 = vmatprep.subr.mxu0 0.0
    %3007 = vmatpush2.msra.mxu0 0.0
    %3008 = vmatprep.subr.mxu0 0.0
    %3009 = vmatpush2.msra.mxu0 0.0
    %3010 = vmatprep.subr.mxu0 0.0
    %3011 = vmatpush2.msra.mxu0 0.0
    %3012 = vmatprep.subr.mxu0 0.0
    %3013 = vmatpush2.msra.mxu0 0.0
    %3014 = vmatprep.subr.mxu0 0.0
    %3015 = vmatpush2.msra.mxu0 0.0
    %3016 = vmatprep.subr.mxu0 0.0
    %3017 = vmatpush2.msra.mxu0 0.0
    %3018 = vmatprep.subr.mxu0 0.0
    %3019 = vmatpush2.msra.mxu0 0.0
    %3020 = vmatprep.subr.mxu0 0.0
    %3021 = vmatpush2.msra.mxu0 0.0
    %3022 = vmatprep.subr.mxu0 0.0
    %3023 = vmatpush2.msra.mxu0 0.0
    %3024 = vmatprep.subr.mxu0 0.0
    %3025 = vmatpush2.msra.mxu0 0.0
    %3026 = vmatprep.subr.mxu0 0.0
    %3027 = vmatpush2.msra.mxu0 0.0
    %3028 = vmatprep.subr.mxu0 0.0
    %3029 = vmatpush2.msra.mxu0 0.0
    %3030 = vmatprep.subr.mxu0 0.0
    %3031 = vmatpush2.msra.mxu0 0.0
    %3032 = vmatprep.subr.mxu0 0.0
    %3033 = vmatpush2.msra.mxu0 0.0
    %3034 = vmatprep.subr.mxu0 0.0
    %3035 = vmatpush2.msra.mxu0 0.0
    %3036 = vmatprep.subr.mxu0 0.0
    %3037 = vmatpush2.msra.mxu0 0.0
    %3038 = vmatprep.mubr.f32.mxu0 0.0
    %3039 = vmatmul.mubr.f32.gmra.mxu0 %v2969
    %v3040 = vpop.f32.mrf.mxu0
    %v3041 = vadd.f32 0.0, %v3040
    %v3042 = vpop.f32.mrf.mxu0
    %3043 = vmatprep.mubr.f32.mxu0 0.0
    %3044 = vmatmul.mubr.f32.gmra.mxu0 %v2972
    %v3045 = vpop.f32.mrf.mxu0
    %v3046 = vadd.f32 0.0, %v3045
    %v3047 = vpop.f32.mrf.mxu0
    %3048 = vdwg.mxu0
    %v3050 = vsel %vm255, %v2557, 0
    %v3053 = vsel %vm255, %v2633, 0
    %3055 = vmatprep.subr.mxu0 0.0
    %3056 = vmatpush1.msra.mxu0 0.0
    %3057 = vmatprep.subr.mxu0 0.0
    %3058 = vmatpush1.msra.mxu0 0.0
    %3059 = vmatprep.subr.mxu0 0.0
    %3060 = vmatpush1.msra.mxu0 0.0
    %3061 = vmatprep.subr.mxu0 0.0
    %3062 = vmatpush1.msra.mxu0 0.0
    %3063 = vmatprep.subr.mxu0 0.0
    %3064 = vmatpush1.msra.mxu0 0.0
    %3065 = vmatprep.subr.mxu0 0.0
    %3066 = vmatpush1.msra.mxu0 0.0
    %3067 = vmatprep.subr.mxu0 0.0
    %3068 = vmatpush1.msra.mxu0 0.0
    %3069 = vmatprep.subr.mxu0 0.0
    %3070 = vmatpush1.msra.mxu0 0.0
    %3071 = vmatprep.subr.mxu0 0.0
    %3072 = vmatpush1.msra.mxu0 0.0
    %3073 = vmatprep.subr.mxu0 0.0
    %3074 = vmatpush1.msra.mxu0 0.0
    %3075 = vmatprep.subr.mxu0 0.0
    %3076 = vmatpush1.msra.mxu0 0.0
    %3077 = vmatprep.subr.mxu0 0.0
    %3078 = vmatpush1.msra.mxu0 0.0
    %3079 = vmatprep.subr.mxu0 0.0
    %3080 = vmatpush1.msra.mxu0 0.0
    %3081 = vmatprep.subr.mxu0 0.0
    %3082 = vmatpush1.msra.mxu0 0.0
    %3083 = vmatprep.subr.mxu0 0.0
    %3084 = vmatpush1.msra.mxu0 0.0
    %3085 = vmatprep.subr.mxu0 0.0
    %3086 = vmatpush1.msra.mxu0 %v2302
    %3087 = vmatprep.subr.mxu0 0.0
    %3088 = vmatpush2.msra.mxu0 0.0
    %3089 = vmatprep.subr.mxu0 0.0
    %3090 = vmatpush2.msra.mxu0 0.0
    %3091 = vmatprep.subr.mxu0 0.0
    %3092 = vmatpush2.msra.mxu0 0.0
    %3093 = vmatprep.subr.mxu0 0.0
    %3094 = vmatpush2.msra.mxu0 0.0
    %3095 = vmatprep.subr.mxu0 0.0
    %3096 = vmatpush2.msra.mxu0 0.0
    %3097 = vmatprep.subr.mxu0 0.0
    %3098 = vmatpush2.msra.mxu0 0.0
    %3099 = vmatprep.subr.mxu0 0.0
    %3100 = vmatpush2.msra.mxu0 0.0
    %3101 = vmatprep.subr.mxu0 0.0
    %3102 = vmatpush2.msra.mxu0 0.0
    %3103 = vmatprep.subr.mxu0 0.0
    %3104 = vmatpush2.msra.mxu0 0.0
    %3105 = vmatprep.subr.mxu0 0.0
    %3106 = vmatpush2.msra.mxu0 0.0
    %3107 = vmatprep.subr.mxu0 0.0
    %3108 = vmatpush2.msra.mxu0 0.0
    %3109 = vmatprep.subr.mxu0 0.0
    %3110 = vmatpush2.msra.mxu0 0.0
    %3111 = vmatprep.subr.mxu0 0.0
    %3112 = vmatpush2.msra.mxu0 0.0
    %3113 = vmatprep.subr.mxu0 0.0
    %3114 = vmatpush2.msra.mxu0 0.0
    %3115 = vmatprep.subr.mxu0 0.0
    %3116 = vmatpush2.msra.mxu0 0.0
    %3117 = vmatprep.subr.mxu0 0.0
    %3118 = vmatpush2.msra.mxu0 0.0
    %3119 = vmatprep.mubr.f32.mxu0 0.0
    %3120 = vmatmul.mubr.f32.gmra.mxu0 %v3050
    %v3121 = vpop.f32.mrf.mxu0
    %v3122 = vadd.f32 %v3041, %v3121
    %v3123 = vpop.f32.mrf.mxu0
    %3124 = vmatprep.mubr.f32.mxu0 0.0
    %3125 = vmatmul.mubr.f32.gmra.mxu0 %v3053
    %v3126 = vpop.f32.mrf.mxu0
    %v3127 = vadd.f32 %v3046, %v3126
    %v3128 = vpop.f32.mrf.mxu0
    %3129 = vdwg.mxu0
    %3130 = vrot.lane.b32.xlu0 %v2293, 112
    %v3131 = vpop.permute.xlu0 %3130
    %3132 = vrot.lane.b32.xlu0 %v2293, 80
    %v3133 = vpop.permute.xlu0 %3132
    %v3134 = vsel %vm255, %v3131, 0
    %v3136 = vsel %vm255, %v3133, 0
    %3138 = vmatprep.subr.mxu0 0.0
    %3139 = vmatpush1.xpose.msra.mxu0 0.0
    %3140 = vmatprep.subr.mxu0 0.0
    %3141 = vmatpush1.xpose.msra.mxu0 0.0
    %3142 = vmatprep.subr.mxu0 0.0
    %3143 = vmatpush1.xpose.msra.mxu0 0.0
    %3144 = vmatprep.subr.mxu0 0.0
    %3145 = vmatpush1.xpose.msra.mxu0 0.0
    %3146 = vmatprep.subr.mxu0 0.0
    %3147 = vmatpush1.xpose.msra.mxu0 0.0
    %3148 = vmatprep.subr.mxu0 0.0
    %3149 = vmatpush1.xpose.msra.mxu0 0.0
    %3150 = vmatprep.subr.mxu0 0.0
    %3151 = vmatpush1.xpose.msra.mxu0 0.0
    %3152 = vmatprep.subr.mxu0 0.0
    %3153 = vmatpush1.xpose.msra.mxu0 0.0
    %3154 = vmatprep.subr.mxu0 0.0
    %3155 = vmatpush1.xpose.msra.mxu0 0.0
    %3156 = vmatprep.subr.mxu0 0.0
    %3157 = vmatpush1.xpose.msra.mxu0 0.0
    %3158 = vmatprep.subr.mxu0 0.0
    %3159 = vmatpush1.xpose.msra.mxu0 0.0
    %3160 = vmatprep.subr.mxu0 0.0
    %3161 = vmatpush1.xpose.msra.mxu0 0.0
    %3162 = vmatprep.subr.mxu0 0.0
    %3163 = vmatpush1.xpose.msra.mxu0 0.0
    %3164 = vmatprep.subr.mxu0 0.0
    %3165 = vmatpush1.xpose.msra.mxu0 0.0
    %3166 = vmatprep.subr.mxu0 0.0
    %3167 = vmatpush1.xpose.msra.mxu0 0.0
    %3168 = vmatprep.subr.mxu0 0.0
    %3169 = vmatpush1.xpose.msra.mxu0 %v3136
    %3170 = vmatprep.subr.mxu0 0.0
    %3171 = vmatpush2.xpose.msra.mxu0 0.0
    %3172 = vmatprep.subr.mxu0 0.0
    %3173 = vmatpush2.xpose.msra.mxu0 0.0
    %3174 = vmatprep.subr.mxu0 0.0
    %3175 = vmatpush2.xpose.msra.mxu0 0.0
    %3176 = vmatprep.subr.mxu0 0.0
    %3177 = vmatpush2.xpose.msra.mxu0 0.0
    %3178 = vmatprep.subr.mxu0 0.0
    %3179 = vmatpush2.xpose.msra.mxu0 0.0
    %3180 = vmatprep.subr.mxu0 0.0
    %3181 = vmatpush2.xpose.msra.mxu0 0.0
    %3182 = vmatprep.subr.mxu0 0.0
    %3183 = vmatpush2.xpose.msra.mxu0 0.0
    %3184 = vmatprep.subr.mxu0 0.0
    %3185 = vmatpush2.xpose.msra.mxu0 0.0
    %3186 = vmatprep.subr.mxu0 0.0
    %3187 = vmatpush2.xpose.msra.mxu0 0.0
    %3188 = vmatprep.subr.mxu0 0.0
    %3189 = vmatpush2.xpose.msra.mxu0 0.0
    %3190 = vmatprep.subr.mxu0 0.0
    %3191 = vmatpush2.xpose.msra.mxu0 0.0
    %3192 = vmatprep.subr.mxu0 0.0
    %3193 = vmatpush2.xpose.msra.mxu0 0.0
    %3194 = vmatprep.subr.mxu0 0.0
    %3195 = vmatpush2.xpose.msra.mxu0 0.0
    %3196 = vmatprep.subr.mxu0 0.0
    %3197 = vmatpush2.xpose.msra.mxu0 0.0
    %3198 = vmatprep.subr.mxu0 0.0
    %3199 = vmatpush2.xpose.msra.mxu0 0.0
    %3200 = vmatprep.subr.mxu0 0.0
    %3201 = vmatpush2.xpose.msra.mxu0 0.0
    %3202 = vmatprep.mubr.f32.mxu0 0.0
    %3203 = vmatmul.mubr.f32.gmra.mxu0 %v3134
    %v3204 = vpop.f32.mrf.mxu0
    %v3205 = vadd.f32 0.0, %v3204
    %v3206 = vpop.f32.mrf.mxu0
    %3207 = vdwg.mxu0
    %3208 = vrot.lane.b32.xlu0 %v2298, 112
    %v3209 = vpop.permute.xlu0 %3208
    %3210 = vrot.lane.b32.xlu0 %v2298, 80
    %v3211 = vpop.permute.xlu0 %3210
    %v3212 = vsel %vm255, %v3209, 0
    %v3214 = vsel %vm255, %v3211, 0
    %3216 = vmatprep.subr.mxu0 0.0
    %3217 = vmatpush1.xpose.msra.mxu0 0.0
    %3218 = vmatprep.subr.mxu0 0.0
    %3219 = vmatpush1.xpose.msra.mxu0 0.0
    %3220 = vmatprep.subr.mxu0 0.0
    %3221 = vmatpush1.xpose.msra.mxu0 0.0
    %3222 = vmatprep.subr.mxu0 0.0
    %3223 = vmatpush1.xpose.msra.mxu0 0.0
    %3224 = vmatprep.subr.mxu0 0.0
    %3225 = vmatpush1.xpose.msra.mxu0 0.0
    %3226 = vmatprep.subr.mxu0 0.0
    %3227 = vmatpush1.xpose.msra.mxu0 0.0
    %3228 = vmatprep.subr.mxu0 0.0
    %3229 = vmatpush1.xpose.msra.mxu0 0.0
    %3230 = vmatprep.subr.mxu0 0.0
    %3231 = vmatpush1.xpose.msra.mxu0 0.0
    %3232 = vmatprep.subr.mxu0 0.0
    %3233 = vmatpush1.xpose.msra.mxu0 0.0
    %3234 = vmatprep.subr.mxu0 0.0
    %3235 = vmatpush1.xpose.msra.mxu0 0.0
    %3236 = vmatprep.subr.mxu0 0.0
    %3237 = vmatpush1.xpose.msra.mxu0 0.0
    %3238 = vmatprep.subr.mxu0 0.0
    %3239 = vmatpush1.xpose.msra.mxu0 0.0
    %3240 = vmatprep.subr.mxu0 0.0
    %3241 = vmatpush1.xpose.msra.mxu0 0.0
    %3242 = vmatprep.subr.mxu0 0.0
    %3243 = vmatpush1.xpose.msra.mxu0 0.0
    %3244 = vmatprep.subr.mxu0 0.0
    %3245 = vmatpush1.xpose.msra.mxu0 0.0
    %3246 = vmatprep.subr.mxu0 0.0
    %3247 = vmatpush1.xpose.msra.mxu0 %v3214
    %3248 = vmatprep.subr.mxu0 0.0
    %3249 = vmatpush2.xpose.msra.mxu0 0.0
    %3250 = vmatprep.subr.mxu0 0.0
    %3251 = vmatpush2.xpose.msra.mxu0 0.0
    %3252 = vmatprep.subr.mxu0 0.0
    %3253 = vmatpush2.xpose.msra.mxu0 0.0
    %3254 = vmatprep.subr.mxu0 0.0
    %3255 = vmatpush2.xpose.msra.mxu0 0.0
    %3256 = vmatprep.subr.mxu0 0.0
    %3257 = vmatpush2.xpose.msra.mxu0 0.0
    %3258 = vmatprep.subr.mxu0 0.0
    %3259 = vmatpush2.xpose.msra.mxu0 0.0
    %3260 = vmatprep.subr.mxu0 0.0
    %3261 = vmatpush2.xpose.msra.mxu0 0.0
    %3262 = vmatprep.subr.mxu0 0.0
    %3263 = vmatpush2.xpose.msra.mxu0 0.0
    %3264 = vmatprep.subr.mxu0 0.0
    %3265 = vmatpush2.xpose.msra.mxu0 0.0
    %3266 = vmatprep.subr.mxu0 0.0
    %3267 = vmatpush2.xpose.msra.mxu0 0.0
    %3268 = vmatprep.subr.mxu0 0.0
    %3269 = vmatpush2.xpose.msra.mxu0 0.0
    %3270 = vmatprep.subr.mxu0 0.0
    %3271 = vmatpush2.xpose.msra.mxu0 0.0
    %3272 = vmatprep.subr.mxu0 0.0
    %3273 = vmatpush2.xpose.msra.mxu0 0.0
    %3274 = vmatprep.subr.mxu0 0.0
    %3275 = vmatpush2.xpose.msra.mxu0 0.0
    %3276 = vmatprep.subr.mxu0 0.0
    %3277 = vmatpush2.xpose.msra.mxu0 0.0
    %3278 = vmatprep.subr.mxu0 0.0
    %3279 = vmatpush2.xpose.msra.mxu0 0.0
    %3280 = vmatprep.mubr.f32.mxu0 0.0
    %3281 = vmatmul.mubr.f32.gmra.mxu0 %v3212
    %v3282 = vpop.f32.mrf.mxu0
    %v3283 = vadd.f32 0.0, %v3282
    %v3284 = vpop.f32.mrf.mxu0
    %3285 = vdwg.mxu0
    %v3286 = vmul.f32 %v3205, 0.35355338
    %v3287 = vmul.f32 %v3283, 0.35355338
    %v3288 = vsel %vm255, %v3286, -inf
    %3289 = vmax.xlane.f32.xlu0 %v3288
    %v3290 = vpop.xlane.xlu0 %3289
    %v3291 = vsel %vm255, %v3287, -inf
    %3292 = vmax.xlane.f32.xlu0 %v3291
    %v3293 = vpop.xlane.xlu0 %3292
    %v3294 = vsub.f32 %v3286, %v3290
    %v3295 = vsub.f32 %v3287, %v3293
    %v3296 = vmul.f32 %v3294, 1.442695
    %v3297 = vpow.pop %v3296
    %v3298 = vmul.f32 %v3295, 1.442695
    %v3299 = vpow.pop %v3298
    %v3300 = vsel %vm255, %v3297, 0.0
    %3301 = vadd.xlane.f32.xlu0 %v3300
    %v3302 = vpop.xlane.xlu0 %3301
    %v3303 = vsel %vm255, %v3299, 0.0
    %3304 = vadd.xlane.f32.xlu0 %v3303
    %v3305 = vpop.xlane.xlu0 %3304
    %v3306 = vrcp.pop %v3302
    %v3307 = vmul.f32 %v3297, %v3306
    %v3308 = vrcp.pop %v3305
    %v3309 = vmul.f32 %v3299, %v3308
    %3310 = vrot.lane.b32.xlu0 %v2293, 48
    %v3311 = vpop.permute.xlu0 %3310
    %v3314 = vsel %vm255, %v3307, 0
    %3316 = vmatprep.subr.mxu0 0.0
    %3317 = vmatpush1.msra.mxu0 0.0
    %3318 = vmatprep.subr.mxu0 0.0
    %3319 = vmatpush1.msra.mxu0 0.0
    %3320 = vmatprep.subr.mxu0 0.0
    %3321 = vmatpush1.msra.mxu0 0.0
    %3322 = vmatprep.subr.mxu0 0.0
    %3323 = vmatpush1.msra.mxu0 0.0
    %3324 = vmatprep.subr.mxu0 0.0
    %3325 = vmatpush1.msra.mxu0 0.0
    %3326 = vmatprep.subr.mxu0 0.0
    %3327 = vmatpush1.msra.mxu0 0.0
    %3328 = vmatprep.subr.mxu0 0.0
    %3329 = vmatpush1.msra.mxu0 0.0
    %3330 = vmatprep.subr.mxu0 0.0
    %3331 = vmatpush1.msra.mxu0 0.0
    %3332 = vmatprep.subr.mxu0 0.0
    %3333 = vmatpush1.msra.mxu0 0.0
    %3334 = vmatprep.subr.mxu0 0.0
    %3335 = vmatpush1.msra.mxu0 0.0
    %3336 = vmatprep.subr.mxu0 0.0
    %3337 = vmatpush1.msra.mxu0 0.0
    %3338 = vmatprep.subr.mxu0 0.0
    %3339 = vmatpush1.msra.mxu0 0.0
    %3340 = vmatprep.subr.mxu0 0.0
    %3341 = vmatpush1.msra.mxu0 0.0
    %3342 = vmatprep.subr.mxu0 0.0
    %3343 = vmatpush1.msra.mxu0 0.0
    %3344 = vmatprep.subr.mxu0 0.0
    %3345 = vmatpush1.msra.mxu0 0.0
    %3346 = vmatprep.subr.mxu0 0.0
    %3347 = vmatpush1.msra.mxu0 %v3311
    %3348 = vmatprep.subr.mxu0 0.0
    %3349 = vmatpush2.msra.mxu0 0.0
    %3350 = vmatprep.subr.mxu0 0.0
    %3351 = vmatpush2.msra.mxu0 0.0
    %3352 = vmatprep.subr.mxu0 0.0
    %3353 = vmatpush2.msra.mxu0 0.0
    %3354 = vmatprep.subr.mxu0 0.0
    %3355 = vmatpush2.msra.mxu0 0.0
    %3356 = vmatprep.subr.mxu0 0.0
    %3357 = vmatpush2.msra.mxu0 0.0
    %3358 = vmatprep.subr.mxu0 0.0
    %3359 = vmatpush2.msra.mxu0 0.0
    %3360 = vmatprep.subr.mxu0 0.0
    %3361 = vmatpush2.msra.mxu0 0.0
    %3362 = vmatprep.subr.mxu0 0.0
    %3363 = vmatpush2.msra.mxu0 0.0
    %3364 = vmatprep.subr.mxu0 0.0
    %3365 = vmatpush2.msra.mxu0 0.0
    %3366 = vmatprep.subr.mxu0 0.0
    %3367 = vmatpush2.msra.mxu0 0.0
    %3368 = vmatprep.subr.mxu0 0.0
    %3369 = vmatpush2.msra.mxu0 0.0
    %3370 = vmatprep.subr.mxu0 0.0
    %3371 = vmatpush2.msra.mxu0 0.0
    %3372 = vmatprep.subr.mxu0 0.0
    %3373 = vmatpush2.msra.mxu0 0.0
    %3374 = vmatprep.subr.mxu0 0.0
    %3375 = vmatpush2.msra.mxu0 0.0
    %3376 = vmatprep.subr.mxu0 0.0
    %3377 = vmatpush2.msra.mxu0 0.0
    %3378 = vmatprep.subr.mxu0 0.0
    %3379 = vmatpush2.msra.mxu0 0.0
    %3380 = vmatprep.mubr.f32.mxu0 0.0
    %3381 = vmatmul.mubr.f32.gmra.mxu0 %v3314
    %v3382 = vpop.f32.mrf.mxu0
    %v3383 = vadd.f32 0.0, %v3382
    %v3384 = vpop.f32.mrf.mxu0
    %3385 = vdwg.mxu0
    %3386 = vrot.lane.b32.xlu0 %v2298, 48
    %v3387 = vpop.permute.xlu0 %3386
    %v3390 = vsel %vm255, %v3309, 0
    %3392 = vmatprep.subr.mxu0 0.0
    %3393 = vmatpush1.msra.mxu0 0.0
    %3394 = vmatprep.subr.mxu0 0.0
    %3395 = vmatpush1.msra.mxu0 0.0
    %3396 = vmatprep.subr.mxu0 0.0
    %3397 = vmatpush1.msra.mxu0 0.0
    %3398 = vmatprep.subr.mxu0 0.0
    %3399 = vmatpush1.msra.mxu0 0.0
    %3400 = vmatprep.subr.mxu0 0.0
    %3401 = vmatpush1.msra.mxu0 0.0
    %3402 = vmatprep.subr.mxu0 0.0
    %3403 = vmatpush1.msra.mxu0 0.0
    %3404 = vmatprep.subr.mxu0 0.0
    %3405 = vmatpush1.msra.mxu0 0.0
    %3406 = vmatprep.subr.mxu0 0.0
    %3407 = vmatpush1.msra.mxu0 0.0
    %3408 = vmatprep.subr.mxu0 0.0
    %3409 = vmatpush1.msra.mxu0 0.0
    %3410 = vmatprep.subr.mxu0 0.0
    %3411 = vmatpush1.msra.mxu0 0.0
    %3412 = vmatprep.subr.mxu0 0.0
    %3413 = vmatpush1.msra.mxu0 0.0
    %3414 = vmatprep.subr.mxu0 0.0
    %3415 = vmatpush1.msra.mxu0 0.0
    %3416 = vmatprep.subr.mxu0 0.0
    %3417 = vmatpush1.msra.mxu0 0.0
    %3418 = vmatprep.subr.mxu0 0.0
    %3419 = vmatpush1.msra.mxu0 0.0
    %3420 = vmatprep.subr.mxu0 0.0
    %3421 = vmatpush1.msra.mxu0 0.0
    %3422 = vmatprep.subr.mxu0 0.0
    %3423 = vmatpush1.msra.mxu0 %v3387
    %3424 = vmatprep.subr.mxu0 0.0
    %3425 = vmatpush2.msra.mxu0 0.0
    %3426 = vmatprep.subr.mxu0 0.0
    %3427 = vmatpush2.msra.mxu0 0.0
    %3428 = vmatprep.subr.mxu0 0.0
    %3429 = vmatpush2.msra.mxu0 0.0
    %3430 = vmatprep.subr.mxu0 0.0
    %3431 = vmatpush2.msra.mxu0 0.0
    %3432 = vmatprep.subr.mxu0 0.0
    %3433 = vmatpush2.msra.mxu0 0.0
    %3434 = vmatprep.subr.mxu0 0.0
    %3435 = vmatpush2.msra.mxu0 0.0
    %3436 = vmatprep.subr.mxu0 0.0
    %3437 = vmatpush2.msra.mxu0 0.0
    %3438 = vmatprep.subr.mxu0 0.0
    %3439 = vmatpush2.msra.mxu0 0.0
    %3440 = vmatprep.subr.mxu0 0.0
    %3441 = vmatpush2.msra.mxu0 0.0
    %3442 = vmatprep.subr.mxu0 0.0
    %3443 = vmatpush2.msra.mxu0 0.0
    %3444 = vmatprep.subr.mxu0 0.0
    %3445 = vmatpush2.msra.mxu0 0.0
    %3446 = vmatprep.subr.mxu0 0.0
    %3447 = vmatpush2.msra.mxu0 0.0
    %3448 = vmatprep.subr.mxu0 0.0
    %3449 = vmatpush2.msra.mxu0 0.0
    %3450 = vmatprep.subr.mxu0 0.0
    %3451 = vmatpush2.msra.mxu0 0.0
    %3452 = vmatprep.subr.mxu0 0.0
    %3453 = vmatpush2.msra.mxu0 0.0
    %3454 = vmatprep.subr.mxu0 0.0
    %3455 = vmatpush2.msra.mxu0 0.0
    %3456 = vmatprep.mubr.f32.mxu0 0.0
    %3457 = vmatmul.mubr.f32.gmra.mxu0 %v3390
    %v3458 = vpop.f32.mrf.mxu0
    %v3459 = vadd.f32 0.0, %v3458
    %v3460 = vpop.f32.mrf.mxu0
    %3461 = vdwg.mxu0
    %v3463 = vsel %vm255, %v3383, 0
    %v3466 = vsel %vm255, %v3459, 0
    %3468 = vmatprep.subr.mxu0 0.0
    %3469 = vmatpush1.msra.mxu0 0.0
    %3470 = vmatprep.subr.mxu0 0.0
    %3471 = vmatpush1.msra.mxu0 0.0
    %3472 = vmatprep.subr.mxu0 0.0
    %3473 = vmatpush1.msra.mxu0 0.0
    %3474 = vmatprep.subr.mxu0 0.0
    %3475 = vmatpush1.msra.mxu0 0.0
    %3476 = vmatprep.subr.mxu0 0.0
    %3477 = vmatpush1.msra.mxu0 0.0
    %3478 = vmatprep.subr.mxu0 0.0
    %3479 = vmatpush1.msra.mxu0 0.0
    %3480 = vmatprep.subr.mxu0 0.0
    %3481 = vmatpush1.msra.mxu0 0.0
    %3482 = vmatprep.subr.mxu0 0.0
    %3483 = vmatpush1.msra.mxu0 0.0
    %3484 = vmatprep.subr.mxu0 0.0
    %3485 = vmatpush1.msra.mxu0 0.0
    %3486 = vmatprep.subr.mxu0 0.0
    %3487 = vmatpush1.msra.mxu0 0.0
    %3488 = vmatprep.subr.mxu0 0.0
    %3489 = vmatpush1.msra.mxu0 0.0
    %3490 = vmatprep.subr.mxu0 0.0
    %3491 = vmatpush1.msra.mxu0 0.0
    %3492 = vmatprep.subr.mxu0 0.0
    %3493 = vmatpush1.msra.mxu0 0.0
    %3494 = vmatprep.subr.mxu0 0.0
    %3495 = vmatpush1.msra.mxu0 0.0
    %3496 = vmatprep.subr.mxu0 0.0
    %3497 = vmatpush1.msra.mxu0 0.0
    %3498 = vmatprep.subr.mxu0 0.0
    %3499 = vmatpush1.msra.mxu0 %v2304
    %3500 = vmatprep.subr.mxu0 0.0
    %3501 = vmatpush2.msra.mxu0 0.0
    %3502 = vmatprep.subr.mxu0 0.0
    %3503 = vmatpush2.msra.mxu0 0.0
    %3504 = vmatprep.subr.mxu0 0.0
    %3505 = vmatpush2.msra.mxu0 0.0
    %3506 = vmatprep.subr.mxu0 0.0
    %3507 = vmatpush2.msra.mxu0 0.0
    %3508 = vmatprep.subr.mxu0 0.0
    %3509 = vmatpush2.msra.mxu0 0.0
    %3510 = vmatprep.subr.mxu0 0.0
    %3511 = vmatpush2.msra.mxu0 0.0
    %3512 = vmatprep.subr.mxu0 0.0
    %3513 = vmatpush2.msra.mxu0 0.0
    %3514 = vmatprep.subr.mxu0 0.0
    %3515 = vmatpush2.msra.mxu0 0.0
    %3516 = vmatprep.subr.mxu0 0.0
    %3517 = vmatpush2.msra.mxu0 0.0
    %3518 = vmatprep.subr.mxu0 0.0
    %3519 = vmatpush2.msra.mxu0 0.0
    %3520 = vmatprep.subr.mxu0 0.0
    %3521 = vmatpush2.msra.mxu0 0.0
    %3522 = vmatprep.subr.mxu0 0.0
    %3523 = vmatpush2.msra.mxu0 0.0
    %3524 = vmatprep.subr.mxu0 0.0
    %3525 = vmatpush2.msra.mxu0 0.0
    %3526 = vmatprep.subr.mxu0 0.0
    %3527 = vmatpush2.msra.mxu0 0.0
    %3528 = vmatprep.subr.mxu0 0.0
    %3529 = vmatpush2.msra.mxu0 0.0
    %3530 = vmatprep.subr.mxu0 0.0
    %3531 = vmatpush2.msra.mxu0 0.0
    %3532 = vmatprep.mubr.f32.mxu0 0.0
    %3533 = vmatmul.mubr.f32.gmra.mxu0 %v3463
    %v3534 = vpop.f32.mrf.mxu0
    %v3535 = vadd.f32 0.0, %v3534
    %v3536 = vpop.f32.mrf.mxu0
    %3537 = vmatprep.mubr.f32.mxu0 0.0
    %3538 = vmatmul.mubr.f32.gmra.mxu0 %v3466
    %v3539 = vpop.f32.mrf.mxu0
    %v3540 = vadd.f32 0.0, %v3539
    %v3541 = vpop.f32.mrf.mxu0
    %3542 = vdwg.mxu0
    %v3543 = vadd.f32 %v3122, %v3535
    %v3544 = vadd.f32 %v3127, %v3540
    %3545 = vrot.lane.b32.xlu0 %v2293, 104
    %v3546 = vpop.permute.xlu0 %3545
    %3547 = vrot.lane.b32.xlu0 %v2293, 72
    %v3548 = vpop.permute.xlu0 %3547
    %v3549 = vsel %vm255, %v3546, 0
    %v3551 = vsel %vm255, %v3548, 0
    %3553 = vmatprep.subr.mxu0 0.0
    %3554 = vmatpush1.xpose.msra.mxu0 0.0
    %3555 = vmatprep.subr.mxu0 0.0
    %3556 = vmatpush1.xpose.msra.mxu0 0.0
    %3557 = vmatprep.subr.mxu0 0.0
    %3558 = vmatpush1.xpose.msra.mxu0 0.0
    %3559 = vmatprep.subr.mxu0 0.0
    %3560 = vmatpush1.xpose.msra.mxu0 0.0
    %3561 = vmatprep.subr.mxu0 0.0
    %3562 = vmatpush1.xpose.msra.mxu0 0.0
    %3563 = vmatprep.subr.mxu0 0.0
    %3564 = vmatpush1.xpose.msra.mxu0 0.0
    %3565 = vmatprep.subr.mxu0 0.0
    %3566 = vmatpush1.xpose.msra.mxu0 0.0
    %3567 = vmatprep.subr.mxu0 0.0
    %3568 = vmatpush1.xpose.msra.mxu0 0.0
    %3569 = vmatprep.subr.mxu0 0.0
    %3570 = vmatpush1.xpose.msra.mxu0 0.0
    %3571 = vmatprep.subr.mxu0 0.0
    %3572 = vmatpush1.xpose.msra.mxu0 0.0
    %3573 = vmatprep.subr.mxu0 0.0
    %3574 = vmatpush1.xpose.msra.mxu0 0.0
    %3575 = vmatprep.subr.mxu0 0.0
    %3576 = vmatpush1.xpose.msra.mxu0 0.0
    %3577 = vmatprep.subr.mxu0 0.0
    %3578 = vmatpush1.xpose.msra.mxu0 0.0
    %3579 = vmatprep.subr.mxu0 0.0
    %3580 = vmatpush1.xpose.msra.mxu0 0.0
    %3581 = vmatprep.subr.mxu0 0.0
    %3582 = vmatpush1.xpose.msra.mxu0 0.0
    %3583 = vmatprep.subr.mxu0 0.0
    %3584 = vmatpush1.xpose.msra.mxu0 %v3551
    %3585 = vmatprep.subr.mxu0 0.0
    %3586 = vmatpush2.xpose.msra.mxu0 0.0
    %3587 = vmatprep.subr.mxu0 0.0
    %3588 = vmatpush2.xpose.msra.mxu0 0.0
    %3589 = vmatprep.subr.mxu0 0.0
    %3590 = vmatpush2.xpose.msra.mxu0 0.0
    %3591 = vmatprep.subr.mxu0 0.0
    %3592 = vmatpush2.xpose.msra.mxu0 0.0
    %3593 = vmatprep.subr.mxu0 0.0
    %3594 = vmatpush2.xpose.msra.mxu0 0.0
    %3595 = vmatprep.subr.mxu0 0.0
    %3596 = vmatpush2.xpose.msra.mxu0 0.0
    %3597 = vmatprep.subr.mxu0 0.0
    %3598 = vmatpush2.xpose.msra.mxu0 0.0
    %3599 = vmatprep.subr.mxu0 0.0
    %3600 = vmatpush2.xpose.msra.mxu0 0.0
    %3601 = vmatprep.subr.mxu0 0.0
    %3602 = vmatpush2.xpose.msra.mxu0 0.0
    %3603 = vmatprep.subr.mxu0 0.0
    %3604 = vmatpush2.xpose.msra.mxu0 0.0
    %3605 = vmatprep.subr.mxu0 0.0
    %3606 = vmatpush2.xpose.msra.mxu0 0.0
    %3607 = vmatprep.subr.mxu0 0.0
    %3608 = vmatpush2.xpose.msra.mxu0 0.0
    %3609 = vmatprep.subr.mxu0 0.0
    %3610 = vmatpush2.xpose.msra.mxu0 0.0
    %3611 = vmatprep.subr.mxu0 0.0
    %3612 = vmatpush2.xpose.msra.mxu0 0.0
    %3613 = vmatprep.subr.mxu0 0.0
    %3614 = vmatpush2.xpose.msra.mxu0 0.0
    %3615 = vmatprep.subr.mxu0 0.0
    %3616 = vmatpush2.xpose.msra.mxu0 0.0
    %3617 = vmatprep.mubr.f32.mxu0 0.0
    %3618 = vmatmul.mubr.f32.gmra.mxu0 %v3549
    %v3619 = vpop.f32.mrf.mxu0
    %v3620 = vadd.f32 0.0, %v3619
    %v3621 = vpop.f32.mrf.mxu0
    %3622 = vdwg.mxu0
    %3623 = vrot.lane.b32.xlu0 %v2298, 104
    %v3624 = vpop.permute.xlu0 %3623
    %3625 = vrot.lane.b32.xlu0 %v2298, 72
    %v3626 = vpop.permute.xlu0 %3625
    %v3627 = vsel %vm255, %v3624, 0
    %v3629 = vsel %vm255, %v3626, 0
    %3631 = vmatprep.subr.mxu0 0.0
    %3632 = vmatpush1.xpose.msra.mxu0 0.0
    %3633 = vmatprep.subr.mxu0 0.0
    %3634 = vmatpush1.xpose.msra.mxu0 0.0
    %3635 = vmatprep.subr.mxu0 0.0
    %3636 = vmatpush1.xpose.msra.mxu0 0.0
    %3637 = vmatprep.subr.mxu0 0.0
    %3638 = vmatpush1.xpose.msra.mxu0 0.0
    %3639 = vmatprep.subr.mxu0 0.0
    %3640 = vmatpush1.xpose.msra.mxu0 0.0
    %3641 = vmatprep.subr.mxu0 0.0
    %3642 = vmatpush1.xpose.msra.mxu0 0.0
    %3643 = vmatprep.subr.mxu0 0.0
    %3644 = vmatpush1.xpose.msra.mxu0 0.0
    %3645 = vmatprep.subr.mxu0 0.0
    %3646 = vmatpush1.xpose.msra.mxu0 0.0
    %3647 = vmatprep.subr.mxu0 0.0
    %3648 = vmatpush1.xpose.msra.mxu0 0.0
    %3649 = vmatprep.subr.mxu0 0.0
    %3650 = vmatpush1.xpose.msra.mxu0 0.0
    %3651 = vmatprep.subr.mxu0 0.0
    %3652 = vmatpush1.xpose.msra.mxu0 0.0
    %3653 = vmatprep.subr.mxu0 0.0
    %3654 = vmatpush1.xpose.msra.mxu0 0.0
    %3655 = vmatprep.subr.mxu0 0.0
    %3656 = vmatpush1.xpose.msra.mxu0 0.0
    %3657 = vmatprep.subr.mxu0 0.0
    %3658 = vmatpush1.xpose.msra.mxu0 0.0
    %3659 = vmatprep.subr.mxu0 0.0
    %3660 = vmatpush1.xpose.msra.mxu0 0.0
    %3661 = vmatprep.subr.mxu0 0.0
    %3662 = vmatpush1.xpose.msra.mxu0 %v3629
    %3663 = vmatprep.subr.mxu0 0.0
    %3664 = vmatpush2.xpose.msra.mxu0 0.0
    %3665 = vmatprep.subr.mxu0 0.0
    %3666 = vmatpush2.xpose.msra.mxu0 0.0
    %3667 = vmatprep.subr.mxu0 0.0
    %3668 = vmatpush2.xpose.msra.mxu0 0.0
    %3669 = vmatprep.subr.mxu0 0.0
    %3670 = vmatpush2.xpose.msra.mxu0 0.0
    %3671 = vmatprep.subr.mxu0 0.0
    %3672 = vmatpush2.xpose.msra.mxu0 0.0
    %3673 = vmatprep.subr.mxu0 0.0
    %3674 = vmatpush2.xpose.msra.mxu0 0.0
    %3675 = vmatprep.subr.mxu0 0.0
    %3676 = vmatpush2.xpose.msra.mxu0 0.0
    %3677 = vmatprep.subr.mxu0 0.0
    %3678 = vmatpush2.xpose.msra.mxu0 0.0
    %3679 = vmatprep.subr.mxu0 0.0
    %3680 = vmatpush2.xpose.msra.mxu0 0.0
    %3681 = vmatprep.subr.mxu0 0.0
    %3682 = vmatpush2.xpose.msra.mxu0 0.0
    %3683 = vmatprep.subr.mxu0 0.0
    %3684 = vmatpush2.xpose.msra.mxu0 0.0
    %3685 = vmatprep.subr.mxu0 0.0
    %3686 = vmatpush2.xpose.msra.mxu0 0.0
    %3687 = vmatprep.subr.mxu0 0.0
    %3688 = vmatpush2.xpose.msra.mxu0 0.0
    %3689 = vmatprep.subr.mxu0 0.0
    %3690 = vmatpush2.xpose.msra.mxu0 0.0
    %3691 = vmatprep.subr.mxu0 0.0
    %3692 = vmatpush2.xpose.msra.mxu0 0.0
    %3693 = vmatprep.subr.mxu0 0.0
    %3694 = vmatpush2.xpose.msra.mxu0 0.0
    %3695 = vmatprep.mubr.f32.mxu0 0.0
    %3696 = vmatmul.mubr.f32.gmra.mxu0 %v3627
    %v3697 = vpop.f32.mrf.mxu0
    %v3698 = vadd.f32 0.0, %v3697
    %v3699 = vpop.f32.mrf.mxu0
    %3700 = vdwg.mxu0
    %v3701 = vmul.f32 %v3620, 0.35355338
    %v3702 = vmul.f32 %v3698, 0.35355338
    %v3703 = vsel %vm255, %v3701, -inf
    %3704 = vmax.xlane.f32.xlu0 %v3703
    %v3705 = vpop.xlane.xlu0 %3704
    %v3706 = vsel %vm255, %v3702, -inf
    %3707 = vmax.xlane.f32.xlu0 %v3706
    %v3708 = vpop.xlane.xlu0 %3707
    %v3709 = vsub.f32 %v3701, %v3705
    %v3710 = vsub.f32 %v3702, %v3708
    %v3711 = vmul.f32 %v3709, 1.442695
    %v3712 = vpow.pop %v3711
    %v3713 = vmul.f32 %v3710, 1.442695
    %v3714 = vpow.pop %v3713
    %v3715 = vsel %vm255, %v3712, 0.0
    %3716 = vadd.xlane.f32.xlu0 %v3715
    %v3717 = vpop.xlane.xlu0 %3716
    %v3718 = vsel %vm255, %v3714, 0.0
    %3719 = vadd.xlane.f32.xlu0 %v3718
    %v3720 = vpop.xlane.xlu0 %3719
    %v3721 = vrcp.pop %v3717
    %v3722 = vmul.f32 %v3712, %v3721
    %v3723 = vrcp.pop %v3720
    %v3724 = vmul.f32 %v3714, %v3723
    %3725 = vrot.lane.b32.xlu0 %v2293, 40
    %v3726 = vpop.permute.xlu0 %3725
    %v3729 = vsel %vm255, %v3722, 0
    %3731 = vmatprep.subr.mxu0 0.0
    %3732 = vmatpush1.msra.mxu0 0.0
    %3733 = vmatprep.subr.mxu0 0.0
    %3734 = vmatpush1.msra.mxu0 0.0
    %3735 = vmatprep.subr.mxu0 0.0
    %3736 = vmatpush1.msra.mxu0 0.0
    %3737 = vmatprep.subr.mxu0 0.0
    %3738 = vmatpush1.msra.mxu0 0.0
    %3739 = vmatprep.subr.mxu0 0.0
    %3740 = vmatpush1.msra.mxu0 0.0
    %3741 = vmatprep.subr.mxu0 0.0
    %3742 = vmatpush1.msra.mxu0 0.0
    %3743 = vmatprep.subr.mxu0 0.0
    %3744 = vmatpush1.msra.mxu0 0.0
    %3745 = vmatprep.subr.mxu0 0.0
    %3746 = vmatpush1.msra.mxu0 0.0
    %3747 = vmatprep.subr.mxu0 0.0
    %3748 = vmatpush1.msra.mxu0 0.0
    %3749 = vmatprep.subr.mxu0 0.0
    %3750 = vmatpush1.msra.mxu0 0.0
    %3751 = vmatprep.subr.mxu0 0.0
    %3752 = vmatpush1.msra.mxu0 0.0
    %3753 = vmatprep.subr.mxu0 0.0
    %3754 = vmatpush1.msra.mxu0 0.0
    %3755 = vmatprep.subr.mxu0 0.0
    %3756 = vmatpush1.msra.mxu0 0.0
    %3757 = vmatprep.subr.mxu0 0.0
    %3758 = vmatpush1.msra.mxu0 0.0
    %3759 = vmatprep.subr.mxu0 0.0
    %3760 = vmatpush1.msra.mxu0 0.0
    %3761 = vmatprep.subr.mxu0 0.0
    %3762 = vmatpush1.msra.mxu0 %v3726
    %3763 = vmatprep.subr.mxu0 0.0
    %3764 = vmatpush2.msra.mxu0 0.0
    %3765 = vmatprep.subr.mxu0 0.0
    %3766 = vmatpush2.msra.mxu0 0.0
    %3767 = vmatprep.subr.mxu0 0.0
    %3768 = vmatpush2.msra.mxu0 0.0
    %3769 = vmatprep.subr.mxu0 0.0
    %3770 = vmatpush2.msra.mxu0 0.0
    %3771 = vmatprep.subr.mxu0 0.0
    %3772 = vmatpush2.msra.mxu0 0.0
    %3773 = vmatprep.subr.mxu0 0.0
    %3774 = vmatpush2.msra.mxu0 0.0
    %3775 = vmatprep.subr.mxu0 0.0
    %3776 = vmatpush2.msra.mxu0 0.0
    %3777 = vmatprep.subr.mxu0 0.0
    %3778 = vmatpush2.msra.mxu0 0.0
    %3779 = vmatprep.subr.mxu0 0.0
    %3780 = vmatpush2.msra.mxu0 0.0
    %3781 = vmatprep.subr.mxu0 0.0
    %3782 = vmatpush2.msra.mxu0 0.0
    %3783 = vmatprep.subr.mxu0 0.0
    %3784 = vmatpush2.msra.mxu0 0.0
    %3785 = vmatprep.subr.mxu0 0.0
    %3786 = vmatpush2.msra.mxu0 0.0
    %3787 = vmatprep.subr.mxu0 0.0
    %3788 = vmatpush2.msra.mxu0 0.0
    %3789 = vmatprep.subr.mxu0 0.0
    %3790 = vmatpush2.msra.mxu0 0.0
    %3791 = vmatprep.subr.mxu0 0.0
    %3792 = vmatpush2.msra.mxu0 0.0
    %3793 = vmatprep.subr.mxu0 0.0
    %3794 = vmatpush2.msra.mxu0 0.0
    %3795 = vmatprep.mubr.f32.mxu0 0.0
    %3796 = vmatmul.mubr.f32.gmra.mxu0 %v3729
    %v3797 = vpop.f32.mrf.mxu0
    %v3798 = vadd.f32 0.0, %v3797
    %v3799 = vpop.f32.mrf.mxu0
    %3800 = vdwg.mxu0
    %3801 = vrot.lane.b32.xlu0 %v2298, 40
    %v3802 = vpop.permute.xlu0 %3801
    %v3805 = vsel %vm255, %v3724, 0
    %3807 = vmatprep.subr.mxu0 0.0
    %3808 = vmatpush1.msra.mxu0 0.0
    %3809 = vmatprep.subr.mxu0 0.0
    %3810 = vmatpush1.msra.mxu0 0.0
    %3811 = vmatprep.subr.mxu0 0.0
    %3812 = vmatpush1.msra.mxu0 0.0
    %3813 = vmatprep.subr.mxu0 0.0
    %3814 = vmatpush1.msra.mxu0 0.0
    %3815 = vmatprep.subr.mxu0 0.0
    %3816 = vmatpush1.msra.mxu0 0.0
    %3817 = vmatprep.subr.mxu0 0.0
    %3818 = vmatpush1.msra.mxu0 0.0
    %3819 = vmatprep.subr.mxu0 0.0
    %3820 = vmatpush1.msra.mxu0 0.0
    %3821 = vmatprep.subr.mxu0 0.0
    %3822 = vmatpush1.msra.mxu0 0.0
    %3823 = vmatprep.subr.mxu0 0.0
    %3824 = vmatpush1.msra.mxu0 0.0
    %3825 = vmatprep.subr.mxu0 0.0
    %3826 = vmatpush1.msra.mxu0 0.0
    %3827 = vmatprep.subr.mxu0 0.0
    %3828 = vmatpush1.msra.mxu0 0.0
    %3829 = vmatprep.subr.mxu0 0.0
    %3830 = vmatpush1.msra.mxu0 0.0
    %3831 = vmatprep.subr.mxu0 0.0
    %3832 = vmatpush1.msra.mxu0 0.0
    %3833 = vmatprep.subr.mxu0 0.0
    %3834 = vmatpush1.msra.mxu0 0.0
    %3835 = vmatprep.subr.mxu0 0.0
    %3836 = vmatpush1.msra.mxu0 0.0
    %3837 = vmatprep.subr.mxu0 0.0
    %3838 = vmatpush1.msra.mxu0 %v3802
    %3839 = vmatprep.subr.mxu0 0.0
    %3840 = vmatpush2.msra.mxu0 0.0
    %3841 = vmatprep.subr.mxu0 0.0
    %3842 = vmatpush2.msra.mxu0 0.0
    %3843 = vmatprep.subr.mxu0 0.0
    %3844 = vmatpush2.msra.mxu0 0.0
    %3845 = vmatprep.subr.mxu0 0.0
    %3846 = vmatpush2.msra.mxu0 0.0
    %3847 = vmatprep.subr.mxu0 0.0
    %3848 = vmatpush2.msra.mxu0 0.0
    %3849 = vmatprep.subr.mxu0 0.0
    %3850 = vmatpush2.msra.mxu0 0.0
    %3851 = vmatprep.subr.mxu0 0.0
    %3852 = vmatpush2.msra.mxu0 0.0
    %3853 = vmatprep.subr.mxu0 0.0
    %3854 = vmatpush2.msra.mxu0 0.0
    %3855 = vmatprep.subr.mxu0 0.0
    %3856 = vmatpush2.msra.mxu0 0.0
    %3857 = vmatprep.subr.mxu0 0.0
    %3858 = vmatpush2.msra.mxu0 0.0
    %3859 = vmatprep.subr.mxu0 0.0
    %3860 = vmatpush2.msra.mxu0 0.0
    %3861 = vmatprep.subr.mxu0 0.0
    %3862 = vmatpush2.msra.mxu0 0.0
    %3863 = vmatprep.subr.mxu0 0.0
    %3864 = vmatpush2.msra.mxu0 0.0
    %3865 = vmatprep.subr.mxu0 0.0
    %3866 = vmatpush2.msra.mxu0 0.0
    %3867 = vmatprep.subr.mxu0 0.0
    %3868 = vmatpush2.msra.mxu0 0.0
    %3869 = vmatprep.subr.mxu0 0.0
    %3870 = vmatpush2.msra.mxu0 0.0
    %3871 = vmatprep.mubr.f32.mxu0 0.0
    %3872 = vmatmul.mubr.f32.gmra.mxu0 %v3805
    %v3873 = vpop.f32.mrf.mxu0
    %v3874 = vadd.f32 0.0, %v3873
    %v3875 = vpop.f32.mrf.mxu0
    %3876 = vdwg.mxu0
    %v3878 = vsel %vm255, %v3798, 0
    %v3881 = vsel %vm255, %v3874, 0
    %3883 = vmatprep.subr.mxu0 0.0
    %3884 = vmatpush1.msra.mxu0 0.0
    %3885 = vmatprep.subr.mxu0 0.0
    %3886 = vmatpush1.msra.mxu0 0.0
    %3887 = vmatprep.subr.mxu0 0.0
    %3888 = vmatpush1.msra.mxu0 0.0
    %3889 = vmatprep.subr.mxu0 0.0
    %3890 = vmatpush1.msra.mxu0 0.0
    %3891 = vmatprep.subr.mxu0 0.0
    %3892 = vmatpush1.msra.mxu0 0.0
    %3893 = vmatprep.subr.mxu0 0.0
    %3894 = vmatpush1.msra.mxu0 0.0
    %3895 = vmatprep.subr.mxu0 0.0
    %3896 = vmatpush1.msra.mxu0 0.0
    %3897 = vmatprep.subr.mxu0 0.0
    %3898 = vmatpush1.msra.mxu0 0.0
    %3899 = vmatprep.subr.mxu0 0.0
    %3900 = vmatpush1.msra.mxu0 0.0
    %3901 = vmatprep.subr.mxu0 0.0
    %3902 = vmatpush1.msra.mxu0 0.0
    %3903 = vmatprep.subr.mxu0 0.0
    %3904 = vmatpush1.msra.mxu0 0.0
    %3905 = vmatprep.subr.mxu0 0.0
    %3906 = vmatpush1.msra.mxu0 0.0
    %3907 = vmatprep.subr.mxu0 0.0
    %3908 = vmatpush1.msra.mxu0 0.0
    %3909 = vmatprep.subr.mxu0 0.0
    %3910 = vmatpush1.msra.mxu0 0.0
    %3911 = vmatprep.subr.mxu0 0.0
    %3912 = vmatpush1.msra.mxu0 0.0
    %3913 = vmatprep.subr.mxu0 0.0
    %3914 = vmatpush1.msra.mxu0 %v2305
    %3915 = vmatprep.subr.mxu0 0.0
    %3916 = vmatpush2.msra.mxu0 0.0
    %3917 = vmatprep.subr.mxu0 0.0
    %3918 = vmatpush2.msra.mxu0 0.0
    %3919 = vmatprep.subr.mxu0 0.0
    %3920 = vmatpush2.msra.mxu0 0.0
    %3921 = vmatprep.subr.mxu0 0.0
    %3922 = vmatpush2.msra.mxu0 0.0
    %3923 = vmatprep.subr.mxu0 0.0
    %3924 = vmatpush2.msra.mxu0 0.0
    %3925 = vmatprep.subr.mxu0 0.0
    %3926 = vmatpush2.msra.mxu0 0.0
    %3927 = vmatprep.subr.mxu0 0.0
    %3928 = vmatpush2.msra.mxu0 0.0
    %3929 = vmatprep.subr.mxu0 0.0
    %3930 = vmatpush2.msra.mxu0 0.0
    %3931 = vmatprep.subr.mxu0 0.0
    %3932 = vmatpush2.msra.mxu0 0.0
    %3933 = vmatprep.subr.mxu0 0.0
    %3934 = vmatpush2.msra.mxu0 0.0
    %3935 = vmatprep.subr.mxu0 0.0
    %3936 = vmatpush2.msra.mxu0 0.0
    %3937 = vmatprep.subr.mxu0 0.0
    %3938 = vmatpush2.msra.mxu0 0.0
    %3939 = vmatprep.subr.mxu0 0.0
    %3940 = vmatpush2.msra.mxu0 0.0
    %3941 = vmatprep.subr.mxu0 0.0
    %3942 = vmatpush2.msra.mxu0 0.0
    %3943 = vmatprep.subr.mxu0 0.0
    %3944 = vmatpush2.msra.mxu0 0.0
    %3945 = vmatprep.subr.mxu0 0.0
    %3946 = vmatpush2.msra.mxu0 0.0
    %3947 = vmatprep.mubr.f32.mxu0 0.0
    %3948 = vmatmul.mubr.f32.gmra.mxu0 %v3878
    %v3949 = vpop.f32.mrf.mxu0
    %v3950 = vadd.f32 0.0, %v3949
    %v3951 = vpop.f32.mrf.mxu0
    %3952 = vmatprep.mubr.f32.mxu0 0.0
    %3953 = vmatmul.mubr.f32.gmra.mxu0 %v3881
    %v3954 = vpop.f32.mrf.mxu0
    %v3955 = vadd.f32 0.0, %v3954
    %v3956 = vpop.f32.mrf.mxu0
    %3957 = vdwg.mxu0
    %v3958 = vadd.f32 %v3543, %v3950
    %v3959 = vadd.f32 %v3544, %v3955
    %s3960 = scalar_lea.vmem %s6, 1
    %v3961 = vld [vmem:[%s3960] sm:$0x1]
    %v3963 = vlaneseq
    %v3964 = vshrl.u32 %v3963, 7
    %v3965 = vsub.s32 0, %v3964
    %v3966 = vrot.slane %v3961, %v3965
    %v3968 = vadd.f32 %v3958, %v3966
    %v3969 = vadd.f32 %v3959, %v3966
    %v3970 = vadd.f32 %v3968, %v2205
    %v3971 = vadd.f32 %v3969, %v2206
    %s3972 = scalar_lea.vmem %s7, 1
    %v3973 = vld [vmem:[%s3972] sm:$0x1]
    %s3974 = scalar_lea.vmem %s8, 1
    %v3975 = vld [vmem:[%s3974] sm:$0x1]
    %v3976 = vsel %vm112, %v3970, 0.0
    %3977 = vadd.xlane.f32.xlu0 %v3976
    %v3978 = vpop.xlane.xlu0 %3977
    %v3979 = vsel %vm112, %v3971, 0.0
    %3980 = vadd.xlane.f32.xlu0 %v3979
    %v3981 = vpop.xlane.xlu0 %3980
    %v3982 = vmul.f32 %v3978, %v119
    %v3983 = vmul.f32 %v3981, %v119
    %v3984 = vsub.f32 %v3970, %v3982
    %v3985 = vsub.f32 %v3971, %v3983
    %v3986 = vmul.f32 %v3984, %v3984
    %v3987 = vmul.f32 %v3985, %v3985
    %v3988 = vsel %vm112, %v3986, 0.0
    %3989 = vadd.xlane.f32.xlu0 %v3988
    %v3990 = vpop.xlane.xlu0 %3989
    %v3991 = vsel %vm112, %v3987, 0.0
    %3992 = vadd.xlane.f32.xlu0 %v3991
    %v3993 = vpop.xlane.xlu0 %3992
    %v3994 = vmul.f32 %v3990, %v119
    %v3995 = vmul.f32 %v3993, %v119
    %v3996 = vadd.f32 %v3994, 1e-12
    %v3997 = vadd.f32 %v3995, 1e-12
    %v3998 = vrsqrt.pop %v3996
    %v3999 = vrsqrt.pop %v3997
    %v4000 = vmul.f32 %v3984, %v3998
    %v4001 = vmul.f32 %v3985, %v3999
    %v4003 = vlaneseq
    %v4004 = vshrl.u32 %v4003, 7
    %v4005 = vsub.s32 0, %v4004
    %v4006 = vrot.slane %v3973, %v4005
    %v4008 = vmul.f32 %v4000, %v4006
    %v4009 = vmul.f32 %v4001, %v4006
    %v4011 = vlaneseq
    %v4012 = vshrl.u32 %v4011, 7
    %v4013 = vsub.s32 0, %v4012
    %v4014 = vrot.slane %v3975, %v4013
    %v4016 = vadd.f32 %v4008, %v4014
    %v4017 = vadd.f32 %v4009, %v4014
    %s4018 = scalar_lea.vmem %s9, 32
    %v4019 = vld [vmem:[%s4018] sm:$0xff]
    %v4020 = vld [vmem:[%s4018 + $0x8] sm:$0xff]
    %v4021 = vld [vmem:[%s4018 + $0x10] sm:$0xff]
    %v4022 = vld [vmem:[%s4018 + $0x18] sm:$0xff]
    %s4023 = scalar_lea.vmem %s10, 1
    %v4024 = vld [vmem:[%s4023] sm:$0x1]
    %v4026 = vlaneseq
    %v4027 = vshrl.u32 %v4026, 7
    %v4028 = vsub.s32 0, %v4027
    %v4029 = vrot.slane %v4024, %v4028
    %v4032 = vsel %vm112, %v4016, 0
    %v4035 = vsel %vm112, %v4017, 0
    %4037 = vmatprep.subr.mxu0 0.0
    %4038 = vmatpush1.msra.mxu0 0.0
    %4039 = vmatprep.subr.mxu0 0.0
    %4040 = vmatpush1.msra.mxu0 0.0
    %4041 = vmatprep.subr.mxu0 0.0
    %4042 = vmatpush1.msra.mxu0 0.0
    %4043 = vmatprep.subr.mxu0 0.0
    %4044 = vmatpush1.msra.mxu0 0.0
    %4045 = vmatprep.subr.mxu0 0.0
    %4046 = vmatpush1.msra.mxu0 0.0
    %4047 = vmatprep.subr.mxu0 0.0
    %4048 = vmatpush1.msra.mxu0 0.0
    %4049 = vmatprep.subr.mxu0 0.0
    %4050 = vmatpush1.msra.mxu0 0.0
    %4051 = vmatprep.subr.mxu0 0.0
    %4052 = vmatpush1.msra.mxu0 0.0
    %4053 = vmatprep.subr.mxu0 0.0
    %4054 = vmatpush1.msra.mxu0 0.0
    %4055 = vmatprep.subr.mxu0 0.0
    %4056 = vmatpush1.msra.mxu0 0.0
    %4057 = vmatprep.subr.mxu0 0.0
    %4058 = vmatpush1.msra.mxu0 0.0
    %4059 = vmatprep.subr.mxu0 0.0
    %4060 = vmatpush1.msra.mxu0 0.0
    %4061 = vmatprep.subr.mxu0 0.0
    %4062 = vmatpush1.msra.mxu0 %v4022
    %4063 = vmatprep.subr.mxu0 0.0
    %4064 = vmatpush1.msra.mxu0 %v4021
    %4065 = vmatprep.subr.mxu0 0.0
    %4066 = vmatpush1.msra.mxu0 %v4020
    %4067 = vmatprep.subr.mxu0 0.0
    %4068 = vmatpush1.msra.mxu0 %v4019
    %4069 = vmatprep.subr.mxu0 0.0
    %4070 = vmatpush2.msra.mxu0 0.0
    %4071 = vmatprep.subr.mxu0 0.0
    %4072 = vmatpush2.msra.mxu0 0.0
    %4073 = vmatprep.subr.mxu0 0.0
    %4074 = vmatpush2.msra.mxu0 0.0
    %4075 = vmatprep.subr.mxu0 0.0
    %4076 = vmatpush2.msra.mxu0 0.0
    %4077 = vmatprep.subr.mxu0 0.0
    %4078 = vmatpush2.msra.mxu0 0.0
    %4079 = vmatprep.subr.mxu0 0.0
    %4080 = vmatpush2.msra.mxu0 0.0
    %4081 = vmatprep.subr.mxu0 0.0
    %4082 = vmatpush2.msra.mxu0 0.0
    %4083 = vmatprep.subr.mxu0 0.0
    %4084 = vmatpush2.msra.mxu0 0.0
    %4085 = vmatprep.subr.mxu0 0.0
    %4086 = vmatpush2.msra.mxu0 0.0
    %4087 = vmatprep.subr.mxu0 0.0
    %4088 = vmatpush2.msra.mxu0 0.0
    %4089 = vmatprep.subr.mxu0 0.0
    %4090 = vmatpush2.msra.mxu0 0.0
    %4091 = vmatprep.subr.mxu0 0.0
    %4092 = vmatpush2.msra.mxu0 0.0
    %4093 = vmatprep.subr.mxu0 0.0
    %4094 = vmatpush2.msra.mxu0 0.0
    %4095 = vmatprep.subr.mxu0 0.0
    %4096 = vmatpush2.msra.mxu0 0.0
    %4097 = vmatprep.subr.mxu0 0.0
    %4098 = vmatpush2.msra.mxu0 0.0
    %4099 = vmatprep.subr.mxu0 0.0
    %4100 = vmatpush2.msra.mxu0 0.0
    %4101 = vmatprep.mubr.f32.mxu0 0.0
    %4102 = vmatmul.mubr.f32.gmra.mxu0 %v4032
    %v4103 = vpop.f32.mrf.mxu0
    %v4104 = vadd.f32 %v4029, %v4103
    %v4105 = vpop.f32.mrf.mxu0
    %4106 = vmatprep.mubr.f32.mxu0 0.0
    %4107 = vmatmul.mubr.f32.gmra.mxu0 %v4035
    %v4108 = vpop.f32.mrf.mxu0
    %v4109 = vadd.f32 %v4029, %v4108
    %v4110 = vpop.f32.mrf.mxu0
    %4111 = vdwg.mxu0
    %v4112 = vmul.f32 %v4104, 0.5
    %v4113 = vmul.f32 %v4109, 0.5
    %v4114 = vmul.f32 %v4104, 0.70710677
    %v4115 = vmul.f32 %v4109, 0.70710677
    %v4116 = verf.f32.pop %v4114
    %v4117 = verf.f32.pop %v4115
    %v4118 = vadd.f32 %v4116, 1.0
    %v4119 = vadd.f32 %v4117, 1.0
    %v4120 = vmul.f32 %v4112, %v4118
    %v4121 = vmul.f32 %v4113, %v4119
    %s4122 = scalar_lea.vmem %s11, 64
    %v4123 = vld [vmem:[%s4122] sm:$0xff]
    %v4124 = vld [vmem:[%s4122 + $0x8] sm:$0xff]
    %v4125 = vld [vmem:[%s4122 + $0x10] sm:$0xff]
    %v4126 = vld [vmem:[%s4122 + $0x18] sm:$0xff]
    %v4127 = vld [vmem:[%s4122 + $0x20] sm:$0xff]
    %v4128 = vld [vmem:[%s4122 + $0x28] sm:$0xff]
    %v4129 = vld [vmem:[%s4122 + $0x30] sm:$0xff]
    %v4130 = vld [vmem:[%s4122 + $0x38] sm:$0xff]
    %s4131 = scalar_lea.vmem %s12, 1
    %v4132 = vld [vmem:[%s4131] sm:$0x1]
    %v4134 = vlaneseq
    %v4135 = vshrl.u32 %v4134, 7
    %v4136 = vsub.s32 0, %v4135
    %v4137 = vrot.slane %v4132, %v4136
    %v4140 = vsel %vm2079, %v4120, 0
    %v4143 = vsel %vm2079, %v4121, 0
    %4145 = vmatprep.subr.mxu0 0.0
    %4146 = vmatpush1.msra.mxu0 0.0
    %4147 = vmatprep.subr.mxu0 0.0
    %4148 = vmatpush1.msra.mxu0 0.0
    %4149 = vmatprep.subr.mxu0 0.0
    %4150 = vmatpush1.msra.mxu0 0.0
    %4151 = vmatprep.subr.mxu0 0.0
    %4152 = vmatpush1.msra.mxu0 0.0
    %4153 = vmatprep.subr.mxu0 0.0
    %4154 = vmatpush1.msra.mxu0 0.0
    %4155 = vmatprep.subr.mxu0 0.0
    %4156 = vmatpush1.msra.mxu0 0.0
    %4157 = vmatprep.subr.mxu0 0.0
    %4158 = vmatpush1.msra.mxu0 0.0
    %4159 = vmatprep.subr.mxu0 0.0
    %4160 = vmatpush1.msra.mxu0 0.0
    %4161 = vmatprep.subr.mxu0 0.0
    %4162 = vmatpush1.msra.mxu0 %v4130
    %4163 = vmatprep.subr.mxu0 0.0
    %4164 = vmatpush1.msra.mxu0 %v4129
    %4165 = vmatprep.subr.mxu0 0.0
    %4166 = vmatpush1.msra.mxu0 %v4128
    %4167 = vmatprep.subr.mxu0 0.0
    %4168 = vmatpush1.msra.mxu0 %v4127
    %4169 = vmatprep.subr.mxu0 0.0
    %4170 = vmatpush1.msra.mxu0 %v4126
    %4171 = vmatprep.subr.mxu0 0.0
    %4172 = vmatpush1.msra.mxu0 %v4125
    %4173 = vmatprep.subr.mxu0 0.0
    %4174 = vmatpush1.msra.mxu0 %v4124
    %4175 = vmatprep.subr.mxu0 0.0
    %4176 = vmatpush1.msra.mxu0 %v4123
    %4177 = vmatprep.subr.mxu0 0.0
    %4178 = vmatpush2.msra.mxu0 0.0
    %4179 = vmatprep.subr.mxu0 0.0
    %4180 = vmatpush2.msra.mxu0 0.0
    %4181 = vmatprep.subr.mxu0 0.0
    %4182 = vmatpush2.msra.mxu0 0.0
    %4183 = vmatprep.subr.mxu0 0.0
    %4184 = vmatpush2.msra.mxu0 0.0
    %4185 = vmatprep.subr.mxu0 0.0
    %4186 = vmatpush2.msra.mxu0 0.0
    %4187 = vmatprep.subr.mxu0 0.0
    %4188 = vmatpush2.msra.mxu0 0.0
    %4189 = vmatprep.subr.mxu0 0.0
    %4190 = vmatpush2.msra.mxu0 0.0
    %4191 = vmatprep.subr.mxu0 0.0
    %4192 = vmatpush2.msra.mxu0 0.0
    %4193 = vmatprep.subr.mxu0 0.0
    %4194 = vmatpush2.msra.mxu0 0.0
    %4195 = vmatprep.subr.mxu0 0.0
    %4196 = vmatpush2.msra.mxu0 0.0
    %4197 = vmatprep.subr.mxu0 0.0
    %4198 = vmatpush2.msra.mxu0 0.0
    %4199 = vmatprep.subr.mxu0 0.0
    %4200 = vmatpush2.msra.mxu0 0.0
    %4201 = vmatprep.subr.mxu0 0.0
    %4202 = vmatpush2.msra.mxu0 0.0
    %4203 = vmatprep.subr.mxu0 0.0
    %4204 = vmatpush2.msra.mxu0 0.0
    %4205 = vmatprep.subr.mxu0 0.0
    %4206 = vmatpush2.msra.mxu0 0.0
    %4207 = vmatprep.subr.mxu0 0.0
    %4208 = vmatpush2.msra.mxu0 0.0
    %4209 = vmatprep.mubr.f32.mxu0 0.0
    %4210 = vmatmul.mubr.f32.gmra.mxu0 %v4140
    %v4211 = vpop.f32.mrf.mxu0
    %v4212 = vadd.f32 %v4137, %v4211
    %v4213 = vpop.f32.mrf.mxu0
    %4214 = vmatprep.mubr.f32.mxu0 0.0
    %4215 = vmatmul.mubr.f32.gmra.mxu0 %v4143
    %v4216 = vpop.f32.mrf.mxu0
    %v4217 = vadd.f32 %v4137, %v4216
    %v4218 = vpop.f32.mrf.mxu0
    %4219 = vdwg.mxu0
    %v4220 = vadd.f32 %v4212, %v4016
    %v4221 = vadd.f32 %v4217, %v4017
    %s4222 = scalar_lea.vmem %s13, 1
    %v4223 = vld [vmem:[%s4222] sm:$0x1]
    %s4224 = scalar_lea.vmem %s14, 1
    %v4225 = vld [vmem:[%s4224] sm:$0x1]
    %v4226 = vsel %vm112, %v4220, 0.0
    %4227 = vadd.xlane.f32.xlu0 %v4226
    %v4228 = vpop.xlane.xlu0 %4227
    %v4229 = vsel %vm112, %v4221, 0.0
    %4230 = vadd.xlane.f32.xlu0 %v4229
    %v4231 = vpop.xlane.xlu0 %4230
    %v4232 = vmul.f32 %v4228, %v119
    %v4233 = vmul.f32 %v4231, %v119
    %v4234 = vsub.f32 %v4220, %v4232
    %v4235 = vsub.f32 %v4221, %v4233
    %v4236 = vmul.f32 %v4234, %v4234
    %v4237 = vmul.f32 %v4235, %v4235
    %v4238 = vsel %vm112, %v4236, 0.0
    %4239 = vadd.xlane.f32.xlu0 %v4238
    %v4240 = vpop.xlane.xlu0 %4239
    %v4241 = vsel %vm112, %v4237, 0.0
    %4242 = vadd.xlane.f32.xlu0 %v4241
    %v4243 = vpop.xlane.xlu0 %4242
    %v4244 = vmul.f32 %v4240, %v119
    %v4245 = vmul.f32 %v4243, %v119
    %v4246 = vadd.f32 %v4244, 1e-12
    %v4247 = vadd.f32 %v4245, 1e-12
    %v4248 = vrsqrt.pop %v4246
    %v4249 = vrsqrt.pop %v4247
    %v4250 = vmul.f32 %v4234, %v4248
    %v4251 = vmul.f32 %v4235, %v4249
    %v4253 = vlaneseq
    %v4254 = vshrl.u32 %v4253, 7
    %v4255 = vsub.s32 0, %v4254
    %v4256 = vrot.slane %v4223, %v4255
    %v4258 = vmul.f32 %v4250, %v4256
    %v4259 = vmul.f32 %v4251, %v4256
    %v4261 = vlaneseq
    %v4262 = vshrl.u32 %v4261, 7
    %v4263 = vsub.s32 0, %v4262
    %v4264 = vrot.slane %v4225, %v4263
    %v4266 = vadd.f32 %v4258, %v4264
    %v4267 = vadd.f32 %v4259, %v4264
    %v4269 = vrot.slane %v4267, 7
    %vm4271 = vcmask 1040384
    %v4272 = vsel %vm4271, %v4266, %v4269
    %v4273 = vld [vmem:[#allocation8] sm:$0xff]
    %v4274 = vld [vmem:[#allocation8 + $0x8] sm:$0xff]
    %v4275 = vld [vmem:[#allocation8 + $0x10] sm:$0xff]
    %v4276 = vld [vmem:[#allocation8 + $0x18] sm:$0xff]
    %v4277 = vld [vmem:[%s16] sm:$0x1]
    %v4279 = vlaneseq
    %v4280 = vshrl.u32 %v4279, 7
    %v4281 = vsub.s32 0, %v4280
    %v4282 = vrot.slane %v4277, %v4281
    %v4285 = vsel %vm112, %v4272, 0
    %4287 = vmatprep.subr.mxu0 0.0
    %4288 = vmatpush1.msra.mxu0 0.0
    %4289 = vmatprep.subr.mxu0 0.0
    %4290 = vmatpush1.msra.mxu0 0.0
    %4291 = vmatprep.subr.mxu0 0.0
    %4292 = vmatpush1.msra.mxu0 0.0
    %4293 = vmatprep.subr.mxu0 0.0
    %4294 = vmatpush1.msra.mxu0 0.0
    %4295 = vmatprep.subr.mxu0 0.0
    %4296 = vmatpush1.msra.mxu0 0.0
    %4297 = vmatprep.subr.mxu0 0.0
    %4298 = vmatpush1.msra.mxu0 0.0
    %4299 = vmatprep.subr.mxu0 0.0
    %4300 = vmatpush1.msra.mxu0 0.0
    %4301 = vmatprep.subr.mxu0 0.0
    %4302 = vmatpush1.msra.mxu0 0.0
    %4303 = vmatprep.subr.mxu0 0.0
    %4304 = vmatpush1.msra.mxu0 0.0
    %4305 = vmatprep.subr.mxu0 0.0
    %4306 = vmatpush1.msra.mxu0 0.0
    %4307 = vmatprep.subr.mxu0 0.0
    %4308 = vmatpush1.msra.mxu0 0.0
    %4309 = vmatprep.subr.mxu0 0.0
    %4310 = vmatpush1.msra.mxu0 0.0
    %4311 = vmatprep.subr.mxu0 0.0
    %4312 = vmatpush1.msra.mxu0 %v4276
    %4313 = vmatprep.subr.mxu0 0.0
    %4314 = vmatpush1.msra.mxu0 %v4275
    %4315 = vmatprep.subr.mxu0 0.0
    %4316 = vmatpush1.msra.mxu0 %v4274
    %4317 = vmatprep.subr.mxu0 0.0
    %4318 = vmatpush1.msra.mxu0 %v4273
    %4319 = vmatprep.subr.mxu0 0.0
    %4320 = vmatpush2.msra.mxu0 0.0
    %4321 = vmatprep.subr.mxu0 0.0
    %4322 = vmatpush2.msra.mxu0 0.0
    %4323 = vmatprep.subr.mxu0 0.0
    %4324 = vmatpush2.msra.mxu0 0.0
    %4325 = vmatprep.subr.mxu0 0.0
    %4326 = vmatpush2.msra.mxu0 0.0
    %4327 = vmatprep.subr.mxu0 0.0
    %4328 = vmatpush2.msra.mxu0 0.0
    %4329 = vmatprep.subr.mxu0 0.0
    %4330 = vmatpush2.msra.mxu0 0.0
    %4331 = vmatprep.subr.mxu0 0.0
    %4332 = vmatpush2.msra.mxu0 0.0
    %4333 = vmatprep.subr.mxu0 0.0
    %4334 = vmatpush2.msra.mxu0 0.0
    %4335 = vmatprep.subr.mxu0 0.0
    %4336 = vmatpush2.msra.mxu0 0.0
    %4337 = vmatprep.subr.mxu0 0.0
    %4338 = vmatpush2.msra.mxu0 0.0
    %4339 = vmatprep.subr.mxu0 0.0
    %4340 = vmatpush2.msra.mxu0 0.0
    %4341 = vmatprep.subr.mxu0 0.0
    %4342 = vmatpush2.msra.mxu0 0.0
    %4343 = vmatprep.subr.mxu0 0.0
    %4344 = vmatpush2.msra.mxu0 0.0
    %4345 = vmatprep.subr.mxu0 0.0
    %4346 = vmatpush2.msra.mxu0 0.0
    %4347 = vmatprep.subr.mxu0 0.0
    %4348 = vmatpush2.msra.mxu0 0.0
    %4349 = vmatprep.subr.mxu0 0.0
    %4350 = vmatpush2.msra.mxu0 0.0
    %4351 = vmatprep.mubr.f32.mxu0 0.0
    %4352 = vmatmul.mubr.f32.gmra.mxu0 %v4285
    %v4353 = vpop.f32.mrf.mxu0
    %v4354 = vadd.f32 %v4282, %v4353
    %v4355 = vpop.f32.mrf.mxu0
    %4356 = vdwg.mxu0
    %v4357 = vtanh.pop %v4354
    %vm4358 = vcmask 254976
    %4359 = vst.msk [vmem:[#allocation10] sm:$0x3] %vm4358, %v4357
    // Predicated region
    $region86: #{tpu_custom_call.1} parent=1 // pred_check
      _
    $region87: #{tpu_custom_call.1} parent=1 // pred_check_branch
      %4361 = sbr.rel (0) target = $region89
    $region88: #{tpu_custom_call.1} parent=1 // pred_region
      %s4363 = ssub.s32 32, 32
      %4364 = vsyncadd [#allocation4], %s4363
      %s4366 = sshll.u32 [#allocation10], 4
      %s4367 = int_to_ptr.vmem [resolvable:$true] %s4366
      %4369 = dma.vmem_to_hbm [thread:$0]  %s4367, 32, %s17, [#allocation4]
    $region89: #{tpu_custom_call.1} parent=1 // pred_fallthru
      _
    // Predicated region
    $region90: #{tpu_custom_call.1} parent=1 // pred_check
      _
    $region91: #{tpu_custom_call.1} parent=1 // pred_check_branch
      %4371 = sbr.rel (0) target = $region93
    $region92: #{tpu_custom_call.1} parent=1 // pred_region
      %4372 = dma.done [#allocation4], 32
    $region93: #{tpu_custom_call.1} parent=1 // pred_fallthru
      _
    %4373 = vsyncpa [#allocation3], 1
    %4374 = vsyncpa [#allocation6], 1
    %4375 = vsyncpa [#allocation9], 1
    %4376 = vsyncpa [#allocation4], 1

</llo_original>
